<compile_context>
chip_gen: v6e
topology: v6e:2x2x1
jax: 0.10.0
libtpu: 0.0.40
codegen_flags: <defaults>
</compile_context>

<pallas_src>
import functools
import math

import jax
import jax.numpy as jnp
from jax.experimental import pallas as pl
from jax.experimental.pallas import tpu as pltpu


def _layer_norm_f32(x, gamma, beta, eps=1e-5):
    # x: (M, D) f32; gamma/beta: (1, D) f32.  Matches nn.LayerNorm.
    mean = jnp.mean(x, axis=-1, keepdims=True)
    var = jnp.mean(jnp.square(x - mean), axis=-1, keepdims=True)
    return (x - mean) * jax.lax.rsqrt(var + eps) * gamma + beta


def fused_transformer_kernel(
    x_ref,                       # (Bt, N, D)  f32    input activations
    g1_ref, b1_ref,              # (1, 1, D)   f32    LN before attention
    wq_ref, wk_ref, wv_ref,      # (1, H, D, dh) bf16 (1/sqrt(dh) folded in wq)
    wout_ref, bout_ref,          # (1, H, dh, D) bf16, (1, 1, D) f32
    g2_ref, b2_ref,              # (1, 1, D)   f32    LN before FFN
    w1_ref, bb1_ref,             # (1, D, mlp) bf16, (1, 1, mlp) f32
    w2_ref, bb2_ref,             # (1, mlp, D) bf16, (1, 1, D)  f32
    o_ref,                       # (Bt, N, D)  f32    VMEM-resident carry
    *, heads, dim_head,
):
    d_idx = pl.program_id(1)     # layer index (innermost, "arbitrary")

    # Seed the resident carry with the input at layer 0 of each batch block.
    @pl.when(d_idx == 0)
    def _():
        o_ref[...] = x_ref[...]

    Bt, N, D = o_ref.shape
    M = Bt * N

    x2 = o_ref[...].reshape(M, D)                      # residual stream (f32)

    # ---- PreNorm(Attention) + residual -----------------------------------
    xn = _layer_norm_f32(x2, g1_ref[0], b1_ref[0]).astype(jnp.bfloat16)

    att = jnp.zeros((M, D), jnp.float32)
    for h in range(heads):       # small static unroll over per-head weight
        #                          tiles; no lane slicing of activations.
        q = jnp.dot(xn, wq_ref[0, h], preferred_element_type=jnp.float32)
        k = jnp.dot(xn, wk_ref[0, h], preferred_element_type=jnp.float32)
        v = jnp.dot(xn, wv_ref[0, h], preferred_element_type=jnp.float32)
        qb = q.reshape(Bt, N, dim_head).astype(jnp.bfloat16)
        kb = k.reshape(Bt, N, dim_head).astype(jnp.bfloat16)
        vb = v.reshape(Bt, N, dim_head).astype(jnp.bfloat16)
        # (Bt,N,dh) x (Bt,N,dh) -> (Bt,N,N), contracting stored last dims.
        s = jax.lax.dot_general(qb, kb, (((2,), (2,)), ((0,), (0,))),
                                preferred_element_type=jnp.float32)
        s = s - jnp.max(s, axis=-1, keepdims=True)
        e = jnp.exp(s)
        p = e * pl.reciprocal(jnp.sum(e, axis=-1, keepdims=True), approx=True)
        # (Bt,N,N) x (Bt,N,dh) -> (Bt,N,dh)
        ctx = jax.lax.dot_general(p.astype(jnp.bfloat16), vb,
                                  (((2,), (1,)), ((0,), (0,))),
                                  preferred_element_type=jnp.float32)
        ctx2 = ctx.reshape(M, dim_head).astype(jnp.bfloat16)
        # Per-head slice of the output projection; summing over heads is
        # exactly the concat-then-Linear of the PyTorch module.
        att = att + jnp.dot(ctx2, wout_ref[0, h],
                            preferred_element_type=jnp.float32)

    x2 = x2 + att + bout_ref[0]

    # ---- PreNorm(FeedForward) + residual ----------------------------------
    xn2 = _layer_norm_f32(x2, g2_ref[0], b2_ref[0]).astype(jnp.bfloat16)
    h1 = jnp.dot(xn2, w1_ref[0], preferred_element_type=jnp.float32) + bb1_ref[0]
    h1 = jnp.maximum(h1, 0.0).astype(jnp.bfloat16)                   # ReLU
    h2 = jnp.dot(h1, w2_ref[0], preferred_element_type=jnp.float32) + bb2_ref[0]
    x2 = x2 + h2

    o_ref[...] = x2.reshape(Bt, N, D)


def _vmem_limit_bytes():
    # Generation-aware scoped-VMEM limit: ~3/4 of physical, <= 100 MiB.
    try:
        cap = int(getattr(pltpu.get_tpu_info(), "vmem_capacity_bytes",
                          128 * 1024 * 1024))
    except Exception:
        cap = 128 * 1024 * 1024
    return min(100 * 1024 * 1024, (cap * 3) // 4)


def transformer_forward(x, p, *, heads, dim_head, batch_tile=None):
    """Run all `depth` layers in one fused pallas_call."""
    B, N, D = x.shape
    depth = p["wqkv"].shape[0]
    mlp_dim = p["w1"].shape[-1]
    bt = B if batch_tile is None else batch_tile
    assert B % bt == 0

    # --- wrapper-side weight re-layout (plain XLA, once per call) ----------
    scale = dim_head ** -0.5
    wqkv = p["wqkv"].reshape(depth, D, 3, heads, dim_head)
    wq = jnp.transpose(wqkv[:, :, 0], (0, 2, 1, 3))        # (depth, H, D, dh)
    wk = jnp.transpose(wqkv[:, :, 1], (0, 2, 1, 3))
    wv = jnp.transpose(wqkv[:, :, 2], (0, 2, 1, 3))
    wq = (wq.astype(jnp.float32) * scale).astype(jnp.bfloat16)   # fold scale
    wk = wk.astype(jnp.bfloat16)
    wv = wv.astype(jnp.bfloat16)
    wout = p["wout"].reshape(depth, heads, dim_head, D).astype(jnp.bfloat16)
    w1 = p["w1"].astype(jnp.bfloat16)
    w2 = p["w2"].astype(jnp.bfloat16)

    def wspec(*trailing):
        n = len(trailing)

        def idx(b, d):
            return (d,) + (0,) * n
        return pl.BlockSpec((1,) + trailing, idx)

    kernel = functools.partial(fused_transformer_kernel,
                               heads=heads, dim_head=dim_head)

    return pl.pallas_call(
        kernel,
        out_shape=jax.ShapeDtypeStruct((B, N, D), jnp.float32),
        grid=(B // bt, depth),
        in_specs=[
            pl.BlockSpec((bt, N, D), lambda b, d: (b, 0, 0)),   # x (read at d==0)
            wspec(1, D), wspec(1, D),                           # LN1 gamma/beta
            wspec(heads, D, dim_head),                          # Wq (pre-scaled)
            wspec(heads, D, dim_head),                          # Wk
            wspec(heads, D, dim_head),                          # Wv
            wspec(heads, dim_head, D), wspec(1, D),             # Wout, bout
            wspec(1, D), wspec(1, D),                           # LN2 gamma/beta
            wspec(D, mlp_dim), wspec(1, mlp_dim),               # W1, b1
            wspec(mlp_dim, D), wspec(1, D),                     # W2, b2
        ],
        # Same block index across the depth axis -> output stays VMEM-resident
        # and acts as the layer-to-layer activation carry; HBM write once per
        # batch block.
        out_specs=pl.BlockSpec((bt, N, D), lambda b, d: (b, 0, 0)),
        compiler_params=pltpu.CompilerParams(
            dimension_semantics=("parallel", "arbitrary"),
            vmem_limit_bytes=_vmem_limit_bytes()),
    )(
        x.astype(jnp.float32),
        p["g1"], p["b1"],
        wq, wk, wv,
        wout, p["bout"],
        p["g2"], p["b2"],
        w1, p["bb1"],
        w2, p["bb2"],
    )


def transformer_reference(x, p, *, heads, dim_head):
    """Pure-JAX f32 reference (same math as the PyTorch module)."""
    depth = p["wqkv"].shape[0]
    inner = heads * dim_head
    hp = jax.lax.Precision.HIGHEST

    def ln(x, g, b, eps=1e-5):
        m = jnp.mean(x, axis=-1, keepdims=True)
        v = jnp.mean(jnp.square(x - m), axis=-1, keepdims=True)
        return (x - m) * jax.lax.rsqrt(v + eps) * g + b

    x = x.astype(jnp.float32)
    for d in range(depth):
        B, N, _ = x.shape
        wqkv = p["wqkv"][d].astype(jnp.float32)
        wout = p["wout"][d].astype(jnp.float32)
        w1 = p["w1"][d].astype(jnp.float32)
        w2 = p["w2"][d].astype(jnp.float32)

        xn = ln(x, p["g1"][d], p["b1"][d])
        qkv = jnp.einsum("bnd,de->bne", xn, wqkv, precision=hp)
        q, k, v = jnp.split(qkv, 3, axis=-1)
        q = q.reshape(B, N, heads, dim_head).transpose(0, 2, 1, 3)
        k = k.reshape(B, N, heads, dim_head).transpose(0, 2, 1, 3)
        v = v.reshape(B, N, heads, dim_head).transpose(0, 2, 1, 3)
        dots = jnp.einsum("bhnd,bhmd->bhnm", q, k, precision=hp) * dim_head ** -0.5
        attn = jax.nn.softmax(dots, axis=-1)
        ctx = jnp.einsum("bhnm,bhmd->bhnd", attn, v, precision=hp)
        ctx = ctx.transpose(0, 2, 1, 3).reshape(B, N, inner)
        x = x + jnp.einsum("bni,id->bnd", ctx, wout, precision=hp) + p["bout"][d]
        xn2 = ln(x, p["g2"][d], p["b2"][d])
        h1 = jnp.maximum(
            jnp.einsum("bnd,dm->bnm", xn2, w1, precision=hp) + p["bb1"][d], 0.0)
        x = x + jnp.einsum("bnm,md->bnd", h1, w2, precision=hp) + p["bb2"][d]
    return x


def init_params(key, *, depth, dim, heads, dim_head, mlp_dim):
    """Synthetic params: big weights in bf16, LN params / biases in f32."""
    inner = heads * dim_head

    def lin(k, fan_in, fan_out):
        bound = 1.0 / math.sqrt(fan_in)
        w = jax.random.uniform(k, (depth, fan_in, fan_out), jnp.float32,
                               -bound, bound)
        return w.astype(jnp.bfloat16)

    keys = jax.random.split(key, 4)
    return dict(
        g1=jnp.ones((depth, 1, dim), jnp.float32),
        b1=jnp.zeros((depth, 1, dim), jnp.float32),
        wqkv=lin(keys[0], dim, 3 * inner),                 # to_qkv (bias=False)
        wout=lin(keys[1], inner, dim),                     # to_out Linear weight
        bout=jnp.zeros((depth, 1, dim), jnp.float32),      # to_out Linear bias
        g2=jnp.ones((depth, 1, dim), jnp.float32),
        b2=jnp.zeros((depth, 1, dim), jnp.float32),
        w1=lin(keys[2], dim, mlp_dim),
        bb1=jnp.zeros((depth, 1, mlp_dim), jnp.float32),
        w2=lin(keys[3], mlp_dim, dim),
        bb2=jnp.zeros((depth, 1, dim), jnp.float32),
    )


if __name__ == "__main__":
    # Small, lane-dense demo shapes: D = inner = 128, mlp = 256.
    B, N = 2, 8
    dim, depth, heads, dim_head, mlp_dim = 128, 2, 4, 32, 256

    key = jax.random.PRNGKey(0)
    kx, kp = jax.random.split(key)
    x = jax.random.normal(kx, (B, N, dim), jnp.float32)
    params = init_params(kp, depth=depth, dim=dim, heads=heads,
                         dim_head=dim_head, mlp_dim=mlp_dim)

    out = transformer_forward(x, params, heads=heads, dim_head=dim_head)
    out = jax.block_until_ready(out)
    assert out.shape == (B, N, dim) and out.dtype == jnp.float32

    ref = transformer_reference(x, params, heads=heads, dim_head=dim_head)
    err = float(jnp.max(jnp.abs(out - ref)))
    # bf16 matmul inputs + approximate softmax reciprocal vs. f32 HIGHEST ref.
    assert err < 3e-2, f"max abs err {err}"

    print("KERNEL_OK")
</pallas_src>

<mosaic_0001>
module attributes {stable_mosaic.version = 11 : i64} {
  func.func @fused_transformer_kernel(%arg0: i32, %arg1: i32, %arg2: memref<2x8x128xf32, #tpu.memory_space<vmem>>, %arg3: memref<1x1x128xf32, #tpu.memory_space<vmem>>, %arg4: memref<1x1x128xf32, #tpu.memory_space<vmem>>, %arg5: memref<1x4x128x32xbf16, #tpu.memory_space<vmem>>, %arg6: memref<1x4x128x32xbf16, #tpu.memory_space<vmem>>, %arg7: memref<1x4x128x32xbf16, #tpu.memory_space<vmem>>, %arg8: memref<1x4x32x128xbf16, #tpu.memory_space<vmem>>, %arg9: memref<1x1x128xf32, #tpu.memory_space<vmem>>, %arg10: memref<1x1x128xf32, #tpu.memory_space<vmem>>, %arg11: memref<1x1x128xf32, #tpu.memory_space<vmem>>, %arg12: memref<1x128x256xbf16, #tpu.memory_space<vmem>>, %arg13: memref<1x1x256xf32, #tpu.memory_space<vmem>>, %arg14: memref<1x256x128xbf16, #tpu.memory_space<vmem>>, %arg15: memref<1x1x128xf32, #tpu.memory_space<vmem>>, %arg16: memref<2x8x128xf32, #tpu.memory_space<vmem>>) attributes {dimension_semantics = [#tpu.dimension_semantics<parallel>, #tpu.dimension_semantics<arbitrary>], iteration_bounds = array<i64: 1, 2>, scalar_prefetch = 0 : i64, scratch_operands = 0 : i64, tpu.core_type = #tpu.core_type<tc>, window_params = [{transform_indices = @transform_0, window_bounds = array<i64: 2, 8, 128>}, {transform_indices = @transform_1, window_bounds = array<i64: 1, 1, 128>}, {transform_indices = @transform_2, window_bounds = array<i64: 1, 1, 128>}, {transform_indices = @transform_3, window_bounds = array<i64: 1, 4, 128, 32>}, {transform_indices = @transform_4, window_bounds = array<i64: 1, 4, 128, 32>}, {transform_indices = @transform_5, window_bounds = array<i64: 1, 4, 128, 32>}, {transform_indices = @transform_6, window_bounds = array<i64: 1, 4, 32, 128>}, {transform_indices = @transform_7, window_bounds = array<i64: 1, 1, 128>}, {transform_indices = @transform_8, window_bounds = array<i64: 1, 1, 128>}, {transform_indices = @transform_9, window_bounds = array<i64: 1, 1, 128>}, {transform_indices = @transform_10, window_bounds = array<i64: 1, 128, 256>}, {transform_indices = @transform_11, window_bounds = array<i64: 1, 1, 256>}, {transform_indices = @transform_12, window_bounds = array<i64: 1, 256, 128>}, {transform_indices = @transform_13, window_bounds = array<i64: 1, 1, 128>}, {transform_indices = @transform_14, window_bounds = array<i64: 2, 8, 128>}]} {
    %c0_i32 = arith.constant 0 : i32
    %0 = arith.cmpi eq, %arg1, %c0_i32 : i32
    %1 = arith.extui %0 : i1 to i32
    %c0_i32_0 = arith.constant 0 : i32
    %2 = arith.cmpi ne, %1, %c0_i32_0 : i32
    scf.if %2 {
      %c0_139 = arith.constant 0 : index
      %c0_140 = arith.constant 0 : index
      %c0_141 = arith.constant 0 : index
      %221 = vector.load %arg2[%c0_139, %c0_140, %c0_141] : memref<2x8x128xf32, #tpu.memory_space<vmem>>, vector<2x8x128xf32>
      %c0_142 = arith.constant 0 : index
      %c0_143 = arith.constant 0 : index
      %c0_144 = arith.constant 0 : index
      %222 = vector.load %arg16[%c0_142, %c0_143, %c0_144] : memref<2x8x128xf32, #tpu.memory_space<vmem>>, vector<2x8x128xf32>
      tpu.vector_store %arg16[%c0_142, %c0_143, %c0_144], %221 {strides = array<i32>} : memref<2x8x128xf32, #tpu.memory_space<vmem>>, vector<2x8x128xf32>,
    } else {
    }
    %c0 = arith.constant 0 : index
    %c0_1 = arith.constant 0 : index
    %c0_2 = arith.constant 0 : index
    %3 = vector.load %arg16[%c0, %c0_1, %c0_2] : memref<2x8x128xf32, #tpu.memory_space<vmem>>, vector<2x8x128xf32>
    %4 = vector.shape_cast %3 : vector<2x8x128xf32> to vector<16x128xf32>
    %c0_3 = arith.constant 0 : index
    %c0_4 = arith.constant 0 : index
    %c0_5 = arith.constant 0 : index
    %5 = vector.load %arg3[%c0_3, %c0_4, %c0_5] : memref<1x1x128xf32, #tpu.memory_space<vmem>>, vector<1x1x128xf32>
    %6 = vector.shape_cast %5 : vector<1x1x128xf32> to vector<1x128xf32>
    %c0_6 = arith.constant 0 : index
    %c0_7 = arith.constant 0 : index
    %c0_8 = arith.constant 0 : index
    %7 = vector.load %arg4[%c0_6, %c0_7, %c0_8] : memref<1x1x128xf32, #tpu.memory_space<vmem>>, vector<1x1x128xf32>
    %8 = vector.shape_cast %7 : vector<1x1x128xf32> to vector<1x128xf32>
    %cst = arith.constant dense<0.000000e+00> : vector<16xf32>
    %9 = vector.multi_reduction <add>, %4, %cst [1] : vector<16x128xf32> to vector<16xf32>
    %10 = vector.shape_cast %9 : vector<16xf32> to vector<16x1xf32>
    %cst_9 = arith.constant 1.280000e+02 : f32
    %11 = vector.broadcast %cst_9 : f32 to vector<16x1xf32>
    %12 = arith.divf %10, %11 : vector<16x1xf32>
    %13 = vector.broadcast %12 : vector<16x1xf32> to vector<16x128xf32>
    %14 = arith.subf %4, %13 : vector<16x128xf32>
    %15 = arith.mulf %14, %14 : vector<16x128xf32>
    %cst_10 = arith.constant dense<0.000000e+00> : vector<16xf32>
    %16 = vector.multi_reduction <add>, %15, %cst_10 [1] : vector<16x128xf32> to vector<16xf32>
    %17 = vector.shape_cast %16 : vector<16xf32> to vector<16x1xf32>
    %cst_11 = arith.constant 1.280000e+02 : f32
    %18 = vector.broadcast %cst_11 : f32 to vector<16x1xf32>
    %19 = arith.divf %17, %18 : vector<16x1xf32>
    %20 = vector.broadcast %12 : vector<16x1xf32> to vector<16x128xf32>
    %21 = arith.subf %4, %20 : vector<16x128xf32>
    %cst_12 = arith.constant 9.99999974E-6 : f32
    %22 = vector.broadcast %cst_12 : f32 to vector<16x1xf32>
    %23 = arith.addf %19, %22 : vector<16x1xf32>
    %24 = math.rsqrt %23 : vector<16x1xf32>
    %25 = vector.broadcast %24 : vector<16x1xf32> to vector<16x128xf32>
    %26 = arith.mulf %21, %25 : vector<16x128xf32>
    %27 = vector.broadcast %6 : vector<1x128xf32> to vector<16x128xf32>
    %28 = arith.mulf %26, %27 : vector<16x128xf32>
    %29 = vector.broadcast %8 : vector<1x128xf32> to vector<16x128xf32>
    %30 = arith.addf %28, %29 : vector<16x128xf32>
    %31 = arith.truncf %30 : vector<16x128xf32> to vector<16x128xbf16>
    %cst_13 = arith.constant 0.000000e+00 : f32
    %32 = vector.broadcast %cst_13 : f32 to vector<16x128xf32>
    %c0_14 = arith.constant 0 : index
    %c0_15 = arith.constant 0 : index
    %c0_16 = arith.constant 0 : index
    %c0_17 = arith.constant 0 : index
    %33 = vector.load %arg5[%c0_14, %c0_15, %c0_16, %c0_17] : memref<1x4x128x32xbf16, #tpu.memory_space<vmem>>, vector<1x1x128x32xbf16>
    %34 = vector.shape_cast %33 : vector<1x1x128x32xbf16> to vector<128x32xbf16>
    %cst_18 = arith.constant dense<0.000000e+00> : vector<16x32xf32>
    %35 = tpu.matmul %31, %34, %cst_18 {dimension_numbers = #tpu.dot_dimension_numbers<[1], [0], [0], [1], [0, 0, 1, 1], [], []>} : vector<16x128xbf16>, vector<128x32xbf16>, vector<16x32xf32> -> vector<16x32xf32>
    %c0_19 = arith.constant 0 : index
    %c0_20 = arith.constant 0 : index
    %c0_21 = arith.constant 0 : index
    %c0_22 = arith.constant 0 : index
    %36 = vector.load %arg6[%c0_19, %c0_20, %c0_21, %c0_22] : memref<1x4x128x32xbf16, #tpu.memory_space<vmem>>, vector<1x1x128x32xbf16>
    %37 = vector.shape_cast %36 : vector<1x1x128x32xbf16> to vector<128x32xbf16>
    %cst_23 = arith.constant dense<0.000000e+00> : vector<16x32xf32>
    %38 = tpu.matmul %31, %37, %cst_23 {dimension_numbers = #tpu.dot_dimension_numbers<[1], [0], [0], [1], [0, 0, 1, 1], [], []>} : vector<16x128xbf16>, vector<128x32xbf16>, vector<16x32xf32> -> vector<16x32xf32>
    %c0_24 = arith.constant 0 : index
    %c0_25 = arith.constant 0 : index
    %c0_26 = arith.constant 0 : index
    %c0_27 = arith.constant 0 : index
    %39 = vector.load %arg7[%c0_24, %c0_25, %c0_26, %c0_27] : memref<1x4x128x32xbf16, #tpu.memory_space<vmem>>, vector<1x1x128x32xbf16>
    %40 = vector.shape_cast %39 : vector<1x1x128x32xbf16> to vector<128x32xbf16>
    %cst_28 = arith.constant dense<0.000000e+00> : vector<16x32xf32>
    %41 = tpu.matmul %31, %40, %cst_28 {dimension_numbers = #tpu.dot_dimension_numbers<[1], [0], [0], [1], [0, 0, 1, 1], [], []>} : vector<16x128xbf16>, vector<128x32xbf16>, vector<16x32xf32> -> vector<16x32xf32>
    %42 = vector.shape_cast %35 : vector<16x32xf32> to vector<2x8x32xf32>
    %43 = arith.truncf %42 : vector<2x8x32xf32> to vector<2x8x32xbf16>
    %44 = vector.shape_cast %38 : vector<16x32xf32> to vector<2x8x32xf32>
    %45 = arith.truncf %44 : vector<2x8x32xf32> to vector<2x8x32xbf16>
    %46 = vector.shape_cast %41 : vector<16x32xf32> to vector<2x8x32xf32>
    %47 = arith.truncf %46 : vector<2x8x32xf32> to vector<2x8x32xbf16>
    %cst_29 = arith.constant dense<0.000000e+00> : vector<2x8x8xf32>
    %48 = tpu.matmul %43, %45, %cst_29 {dimension_numbers = #tpu.dot_dimension_numbers<[2], [2], [1], [1], [0, 0, 0, 1, 1, 1], [0], [0]>} : vector<2x8x32xbf16>, vector<2x8x32xbf16>, vector<2x8x8xf32> -> vector<2x8x8xf32>
    %cst_30 = arith.constant dense<0xFF800000> : vector<2x8xf32>
    %49 = vector.multi_reduction <maximumf>, %48, %cst_30 [2] : vector<2x8x8xf32> to vector<2x8xf32>
    %50 = vector.shape_cast %49 : vector<2x8xf32> to vector<2x8x1xf32>
    %51 = vector.broadcast %50 : vector<2x8x1xf32> to vector<2x8x8xf32>
    %52 = arith.subf %48, %51 : vector<2x8x8xf32>
    %53 = math.exp %52 : vector<2x8x8xf32>
    %cst_31 = arith.constant dense<0.000000e+00> : vector<2x8xf32>
    %54 = vector.multi_reduction <add>, %53, %cst_31 [2] : vector<2x8x8xf32> to vector<2x8xf32>
    %55 = vector.shape_cast %54 : vector<2x8xf32> to vector<2x8x1xf32>
    %56 = tpu.reciprocal %55 {approx = true} : vector<2x8x1xf32> -> vector<2x8x1xf32>
    %57 = vector.broadcast %56 : vector<2x8x1xf32> to vector<2x8x8xf32>
    %58 = arith.mulf %53, %57 : vector<2x8x8xf32>
    %59 = arith.truncf %58 : vector<2x8x8xf32> to vector<2x8x8xbf16>
    %cst_32 = arith.constant dense<0.000000e+00> : vector<2x8x32xf32>
    %60 = tpu.matmul %59, %47, %cst_32 {dimension_numbers = #tpu.dot_dimension_numbers<[2], [1], [1], [2], [0, 0, 0, 1, 1, 2], [0], [0]>} : vector<2x8x8xbf16>, vector<2x8x32xbf16>, vector<2x8x32xf32> -> vector<2x8x32xf32>
    %61 = vector.shape_cast %60 : vector<2x8x32xf32> to vector<16x32xf32>
    %62 = arith.truncf %61 : vector<16x32xf32> to vector<16x32xbf16>
    %c0_33 = arith.constant 0 : index
    %c0_34 = arith.constant 0 : index
    %c0_35 = arith.constant 0 : index
    %c0_36 = arith.constant 0 : index
    %63 = vector.load %arg8[%c0_33, %c0_34, %c0_35, %c0_36] : memref<1x4x32x128xbf16, #tpu.memory_space<vmem>>, vector<1x1x32x128xbf16>
    %64 = vector.shape_cast %63 : vector<1x1x32x128xbf16> to vector<32x128xbf16>
    %cst_37 = arith.constant dense<0.000000e+00> : vector<16x128xf32>
    %65 = tpu.matmul %62, %64, %cst_37 {dimension_numbers = #tpu.dot_dimension_numbers<[1], [0], [0], [1], [0, 0, 1, 1], [], []>} : vector<16x32xbf16>, vector<32x128xbf16>, vector<16x128xf32> -> vector<16x128xf32>
    %66 = arith.addf %32, %65 : vector<16x128xf32>
    %c0_38 = arith.constant 0 : index
    %c1 = arith.constant 1 : index
    %c0_39 = arith.constant 0 : index
    %c0_40 = arith.constant 0 : index
    %67 = vector.load %arg5[%c0_38, %c1, %c0_39, %c0_40] : memref<1x4x128x32xbf16, #tpu.memory_space<vmem>>, vector<1x1x128x32xbf16>
    %68 = vector.shape_cast %67 : vector<1x1x128x32xbf16> to vector<128x32xbf16>
    %cst_41 = arith.constant dense<0.000000e+00> : vector<16x32xf32>
    %69 = tpu.matmul %31, %68, %cst_41 {dimension_numbers = #tpu.dot_dimension_numbers<[1], [0], [0], [1], [0, 0, 1, 1], [], []>} : vector<16x128xbf16>, vector<128x32xbf16>, vector<16x32xf32> -> vector<16x32xf32>
    %c0_42 = arith.constant 0 : index
    %c1_43 = arith.constant 1 : index
    %c0_44 = arith.constant 0 : index
    %c0_45 = arith.constant 0 : index
    %70 = vector.load %arg6[%c0_42, %c1_43, %c0_44, %c0_45] : memref<1x4x128x32xbf16, #tpu.memory_space<vmem>>, vector<1x1x128x32xbf16>
    %71 = vector.shape_cast %70 : vector<1x1x128x32xbf16> to vector<128x32xbf16>
    %cst_46 = arith.constant dense<0.000000e+00> : vector<16x32xf32>
    %72 = tpu.matmul %31, %71, %cst_46 {dimension_numbers = #tpu.dot_dimension_numbers<[1], [0], [0], [1], [0, 0, 1, 1], [], []>} : vector<16x128xbf16>, vector<128x32xbf16>, vector<16x32xf32> -> vector<16x32xf32>
    %c0_47 = arith.constant 0 : index
    %c1_48 = arith.constant 1 : index
    %c0_49 = arith.constant 0 : index
    %c0_50 = arith.constant 0 : index
    %73 = vector.load %arg7[%c0_47, %c1_48, %c0_49, %c0_50] : memref<1x4x128x32xbf16, #tpu.memory_space<vmem>>, vector<1x1x128x32xbf16>
    %74 = vector.shape_cast %73 : vector<1x1x128x32xbf16> to vector<128x32xbf16>
    %cst_51 = arith.constant dense<0.000000e+00> : vector<16x32xf32>
    %75 = tpu.matmul %31, %74, %cst_51 {dimension_numbers = #tpu.dot_dimension_numbers<[1], [0], [0], [1], [0, 0, 1, 1], [], []>} : vector<16x128xbf16>, vector<128x32xbf16>, vector<16x32xf32> -> vector<16x32xf32>
    %76 = vector.shape_cast %69 : vector<16x32xf32> to vector<2x8x32xf32>
    %77 = arith.truncf %76 : vector<2x8x32xf32> to vector<2x8x32xbf16>
    %78 = vector.shape_cast %72 : vector<16x32xf32> to vector<2x8x32xf32>
    %79 = arith.truncf %78 : vector<2x8x32xf32> to vector<2x8x32xbf16>
    %80 = vector.shape_cast %75 : vector<16x32xf32> to vector<2x8x32xf32>
    %81 = arith.truncf %80 : vector<2x8x32xf32> to vector<2x8x32xbf16>
    %cst_52 = arith.constant dense<0.000000e+00> : vector<2x8x8xf32>
    %82 = tpu.matmul %77, %79, %cst_52 {dimension_numbers = #tpu.dot_dimension_numbers<[2], [2], [1], [1], [0, 0, 0, 1, 1, 1], [0], [0]>} : vector<2x8x32xbf16>, vector<2x8x32xbf16>, vector<2x8x8xf32> -> vector<2x8x8xf32>
    %cst_53 = arith.constant dense<0xFF800000> : vector<2x8xf32>
    %83 = vector.multi_reduction <maximumf>, %82, %cst_53 [2] : vector<2x8x8xf32> to vector<2x8xf32>
    %84 = vector.shape_cast %83 : vector<2x8xf32> to vector<2x8x1xf32>
    %85 = vector.broadcast %84 : vector<2x8x1xf32> to vector<2x8x8xf32>
    %86 = arith.subf %82, %85 : vector<2x8x8xf32>
    %87 = math.exp %86 : vector<2x8x8xf32>
    %cst_54 = arith.constant dense<0.000000e+00> : vector<2x8xf32>
    %88 = vector.multi_reduction <add>, %87, %cst_54 [2] : vector<2x8x8xf32> to vector<2x8xf32>
    %89 = vector.shape_cast %88 : vector<2x8xf32> to vector<2x8x1xf32>
    %90 = tpu.reciprocal %89 {approx = true} : vector<2x8x1xf32> -> vector<2x8x1xf32>
    %91 = vector.broadcast %90 : vector<2x8x1xf32> to vector<2x8x8xf32>
    %92 = arith.mulf %87, %91 : vector<2x8x8xf32>
    %93 = arith.truncf %92 : vector<2x8x8xf32> to vector<2x8x8xbf16>
    %cst_55 = arith.constant dense<0.000000e+00> : vector<2x8x32xf32>
    %94 = tpu.matmul %93, %81, %cst_55 {dimension_numbers = #tpu.dot_dimension_numbers<[2], [1], [1], [2], [0, 0, 0, 1, 1, 2], [0], [0]>} : vector<2x8x8xbf16>, vector<2x8x32xbf16>, vector<2x8x32xf32> -> vector<2x8x32xf32>
    %95 = vector.shape_cast %94 : vector<2x8x32xf32> to vector<16x32xf32>
    %96 = arith.truncf %95 : vector<16x32xf32> to vector<16x32xbf16>
    %c0_56 = arith.constant 0 : index
    %c1_57 = arith.constant 1 : index
    %c0_58 = arith.constant 0 : index
    %c0_59 = arith.constant 0 : index
    %97 = vector.load %arg8[%c0_56, %c1_57, %c0_58, %c0_59] : memref<1x4x32x128xbf16, #tpu.memory_space<vmem>>, vector<1x1x32x128xbf16>
    %98 = vector.shape_cast %97 : vector<1x1x32x128xbf16> to vector<32x128xbf16>
    %cst_60 = arith.constant dense<0.000000e+00> : vector<16x128xf32>
    %99 = tpu.matmul %96, %98, %cst_60 {dimension_numbers = #tpu.dot_dimension_numbers<[1], [0], [0], [1], [0, 0, 1, 1], [], []>} : vector<16x32xbf16>, vector<32x128xbf16>, vector<16x128xf32> -> vector<16x128xf32>
    %100 = arith.addf %66, %99 : vector<16x128xf32>
    %c0_61 = arith.constant 0 : index
    %c2 = arith.constant 2 : index
    %c0_62 = arith.constant 0 : index
    %c0_63 = arith.constant 0 : index
    %101 = vector.load %arg5[%c0_61, %c2, %c0_62, %c0_63] : memref<1x4x128x32xbf16, #tpu.memory_space<vmem>>, vector<1x1x128x32xbf16>
    %102 = vector.shape_cast %101 : vector<1x1x128x32xbf16> to vector<128x32xbf16>
    %cst_64 = arith.constant dense<0.000000e+00> : vector<16x32xf32>
    %103 = tpu.matmul %31, %102, %cst_64 {dimension_numbers = #tpu.dot_dimension_numbers<[1], [0], [0], [1], [0, 0, 1, 1], [], []>} : vector<16x128xbf16>, vector<128x32xbf16>, vector<16x32xf32> -> vector<16x32xf32>
    %c0_65 = arith.constant 0 : index
    %c2_66 = arith.constant 2 : index
    %c0_67 = arith.constant 0 : index
    %c0_68 = arith.constant 0 : index
    %104 = vector.load %arg6[%c0_65, %c2_66, %c0_67, %c0_68] : memref<1x4x128x32xbf16, #tpu.memory_space<vmem>>, vector<1x1x128x32xbf16>
    %105 = vector.shape_cast %104 : vector<1x1x128x32xbf16> to vector<128x32xbf16>
    %cst_69 = arith.constant dense<0.000000e+00> : vector<16x32xf32>
    %106 = tpu.matmul %31, %105, %cst_69 {dimension_numbers = #tpu.dot_dimension_numbers<[1], [0], [0], [1], [0, 0, 1, 1], [], []>} : vector<16x128xbf16>, vector<128x32xbf16>, vector<16x32xf32> -> vector<16x32xf32>
    %c0_70 = arith.constant 0 : index
    %c2_71 = arith.constant 2 : index
    %c0_72 = arith.constant 0 : index
    %c0_73 = arith.constant 0 : index
    %107 = vector.load %arg7[%c0_70, %c2_71, %c0_72, %c0_73] : memref<1x4x128x32xbf16, #tpu.memory_space<vmem>>, vector<1x1x128x32xbf16>
    %108 = vector.shape_cast %107 : vector<1x1x128x32xbf16> to vector<128x32xbf16>
    %cst_74 = arith.constant dense<0.000000e+00> : vector<16x32xf32>
    %109 = tpu.matmul %31, %108, %cst_74 {dimension_numbers = #tpu.dot_dimension_numbers<[1], [0], [0], [1], [0, 0, 1, 1], [], []>} : vector<16x128xbf16>, vector<128x32xbf16>, vector<16x32xf32> -> vector<16x32xf32>
    %110 = vector.shape_cast %103 : vector<16x32xf32> to vector<2x8x32xf32>
    %111 = arith.truncf %110 : vector<2x8x32xf32> to vector<2x8x32xbf16>
    %112 = vector.shape_cast %106 : vector<16x32xf32> to vector<2x8x32xf32>
    %113 = arith.truncf %112 : vector<2x8x32xf32> to vector<2x8x32xbf16>
    %114 = vector.shape_cast %109 : vector<16x32xf32> to vector<2x8x32xf32>
    %115 = arith.truncf %114 : vector<2x8x32xf32> to vector<2x8x32xbf16>
    %cst_75 = arith.constant dense<0.000000e+00> : vector<2x8x8xf32>
    %116 = tpu.matmul %111, %113, %cst_75 {dimension_numbers = #tpu.dot_dimension_numbers<[2], [2], [1], [1], [0, 0, 0, 1, 1, 1], [0], [0]>} : vector<2x8x32xbf16>, vector<2x8x32xbf16>, vector<2x8x8xf32> -> vector<2x8x8xf32>
    %cst_76 = arith.constant dense<0xFF800000> : vector<2x8xf32>
    %117 = vector.multi_reduction <maximumf>, %116, %cst_76 [2] : vector<2x8x8xf32> to vector<2x8xf32>
    %118 = vector.shape_cast %117 : vector<2x8xf32> to vector<2x8x1xf32>
    %119 = vector.broadcast %118 : vector<2x8x1xf32> to vector<2x8x8xf32>
    %120 = arith.subf %116, %119 : vector<2x8x8xf32>
    %121 = math.exp %120 : vector<2x8x8xf32>
    %cst_77 = arith.constant dense<0.000000e+00> : vector<2x8xf32>
    %122 = vector.multi_reduction <add>, %121, %cst_77 [2] : vector<2x8x8xf32> to vector<2x8xf32>
    %123 = vector.shape_cast %122 : vector<2x8xf32> to vector<2x8x1xf32>
    %124 = tpu.reciprocal %123 {approx = true} : vector<2x8x1xf32> -> vector<2x8x1xf32>
    %125 = vector.broadcast %124 : vector<2x8x1xf32> to vector<2x8x8xf32>
    %126 = arith.mulf %121, %125 : vector<2x8x8xf32>
    %127 = arith.truncf %126 : vector<2x8x8xf32> to vector<2x8x8xbf16>
    %cst_78 = arith.constant dense<0.000000e+00> : vector<2x8x32xf32>
    %128 = tpu.matmul %127, %115, %cst_78 {dimension_numbers = #tpu.dot_dimension_numbers<[2], [1], [1], [2], [0, 0, 0, 1, 1, 2], [0], [0]>} : vector<2x8x8xbf16>, vector<2x8x32xbf16>, vector<2x8x32xf32> -> vector<2x8x32xf32>
    %129 = vector.shape_cast %128 : vector<2x8x32xf32> to vector<16x32xf32>
    %130 = arith.truncf %129 : vector<16x32xf32> to vector<16x32xbf16>
    %c0_79 = arith.constant 0 : index
    %c2_80 = arith.constant 2 : index
    %c0_81 = arith.constant 0 : index
    %c0_82 = arith.constant 0 : index
    %131 = vector.load %arg8[%c0_79, %c2_80, %c0_81, %c0_82] : memref<1x4x32x128xbf16, #tpu.memory_space<vmem>>, vector<1x1x32x128xbf16>
    %132 = vector.shape_cast %131 : vector<1x1x32x128xbf16> to vector<32x128xbf16>
    %cst_83 = arith.constant dense<0.000000e+00> : vector<16x128xf32>
    %133 = tpu.matmul %130, %132, %cst_83 {dimension_numbers = #tpu.dot_dimension_numbers<[1], [0], [0], [1], [0, 0, 1, 1], [], []>} : vector<16x32xbf16>, vector<32x128xbf16>, vector<16x128xf32> -> vector<16x128xf32>
    %134 = arith.addf %100, %133 : vector<16x128xf32>
    %c0_84 = arith.constant 0 : index
    %c3 = arith.constant 3 : index
    %c0_85 = arith.constant 0 : index
    %c0_86 = arith.constant 0 : index
    %135 = vector.load %arg5[%c0_84, %c3, %c0_85, %c0_86] : memref<1x4x128x32xbf16, #tpu.memory_space<vmem>>, vector<1x1x128x32xbf16>
    %136 = vector.shape_cast %135 : vector<1x1x128x32xbf16> to vector<128x32xbf16>
    %cst_87 = arith.constant dense<0.000000e+00> : vector<16x32xf32>
    %137 = tpu.matmul %31, %136, %cst_87 {dimension_numbers = #tpu.dot_dimension_numbers<[1], [0], [0], [1], [0, 0, 1, 1], [], []>} : vector<16x128xbf16>, vector<128x32xbf16>, vector<16x32xf32> -> vector<16x32xf32>
    %c0_88 = arith.constant 0 : index
    %c3_89 = arith.constant 3 : index
    %c0_90 = arith.constant 0 : index
    %c0_91 = arith.constant 0 : index
    %138 = vector.load %arg6[%c0_88, %c3_89, %c0_90, %c0_91] : memref<1x4x128x32xbf16, #tpu.memory_space<vmem>>, vector<1x1x128x32xbf16>
    %139 = vector.shape_cast %138 : vector<1x1x128x32xbf16> to vector<128x32xbf16>
    %cst_92 = arith.constant dense<0.000000e+00> : vector<16x32xf32>
    %140 = tpu.matmul %31, %139, %cst_92 {dimension_numbers = #tpu.dot_dimension_numbers<[1], [0], [0], [1], [0, 0, 1, 1], [], []>} : vector<16x128xbf16>, vector<128x32xbf16>, vector<16x32xf32> -> vector<16x32xf32>
    %c0_93 = arith.constant 0 : index
    %c3_94 = arith.constant 3 : index
    %c0_95 = arith.constant 0 : index
    %c0_96 = arith.constant 0 : index
    %141 = vector.load %arg7[%c0_93, %c3_94, %c0_95, %c0_96] : memref<1x4x128x32xbf16, #tpu.memory_space<vmem>>, vector<1x1x128x32xbf16>
    %142 = vector.shape_cast %141 : vector<1x1x128x32xbf16> to vector<128x32xbf16>
    %cst_97 = arith.constant dense<0.000000e+00> : vector<16x32xf32>
    %143 = tpu.matmul %31, %142, %cst_97 {dimension_numbers = #tpu.dot_dimension_numbers<[1], [0], [0], [1], [0, 0, 1, 1], [], []>} : vector<16x128xbf16>, vector<128x32xbf16>, vector<16x32xf32> -> vector<16x32xf32>
    %144 = vector.shape_cast %137 : vector<16x32xf32> to vector<2x8x32xf32>
    %145 = arith.truncf %144 : vector<2x8x32xf32> to vector<2x8x32xbf16>
    %146 = vector.shape_cast %140 : vector<16x32xf32> to vector<2x8x32xf32>
    %147 = arith.truncf %146 : vector<2x8x32xf32> to vector<2x8x32xbf16>
    %148 = vector.shape_cast %143 : vector<16x32xf32> to vector<2x8x32xf32>
    %149 = arith.truncf %148 : vector<2x8x32xf32> to vector<2x8x32xbf16>
    %cst_98 = arith.constant dense<0.000000e+00> : vector<2x8x8xf32>
    %150 = tpu.matmul %145, %147, %cst_98 {dimension_numbers = #tpu.dot_dimension_numbers<[2], [2], [1], [1], [0, 0, 0, 1, 1, 1], [0], [0]>} : vector<2x8x32xbf16>, vector<2x8x32xbf16>, vector<2x8x8xf32> -> vector<2x8x8xf32>
    %cst_99 = arith.constant dense<0xFF800000> : vector<2x8xf32>
    %151 = vector.multi_reduction <maximumf>, %150, %cst_99 [2] : vector<2x8x8xf32> to vector<2x8xf32>
    %152 = vector.shape_cast %151 : vector<2x8xf32> to vector<2x8x1xf32>
    %153 = vector.broadcast %152 : vector<2x8x1xf32> to vector<2x8x8xf32>
    %154 = arith.subf %150, %153 : vector<2x8x8xf32>
    %155 = math.exp %154 : vector<2x8x8xf32>
    %cst_100 = arith.constant dense<0.000000e+00> : vector<2x8xf32>
    %156 = vector.multi_reduction <add>, %155, %cst_100 [2] : vector<2x8x8xf32> to vector<2x8xf32>
    %157 = vector.shape_cast %156 : vector<2x8xf32> to vector<2x8x1xf32>
    %158 = tpu.reciprocal %157 {approx = true} : vector<2x8x1xf32> -> vector<2x8x1xf32>
    %159 = vector.broadcast %158 : vector<2x8x1xf32> to vector<2x8x8xf32>
    %160 = arith.mulf %155, %159 : vector<2x8x8xf32>
    %161 = arith.truncf %160 : vector<2x8x8xf32> to vector<2x8x8xbf16>
    %cst_101 = arith.constant dense<0.000000e+00> : vector<2x8x32xf32>
    %162 = tpu.matmul %161, %149, %cst_101 {dimension_numbers = #tpu.dot_dimension_numbers<[2], [1], [1], [2], [0, 0, 0, 1, 1, 2], [0], [0]>} : vector<2x8x8xbf16>, vector<2x8x32xbf16>, vector<2x8x32xf32> -> vector<2x8x32xf32>
    %163 = vector.shape_cast %162 : vector<2x8x32xf32> to vector<16x32xf32>
    %164 = arith.truncf %163 : vector<16x32xf32> to vector<16x32xbf16>
    %c0_102 = arith.constant 0 : index
    %c3_103 = arith.constant 3 : index
    %c0_104 = arith.constant 0 : index
    %c0_105 = arith.constant 0 : index
    %165 = vector.load %arg8[%c0_102, %c3_103, %c0_104, %c0_105] : memref<1x4x32x128xbf16, #tpu.memory_space<vmem>>, vector<1x1x32x128xbf16>
    %166 = vector.shape_cast %165 : vector<1x1x32x128xbf16> to vector<32x128xbf16>
    %cst_106 = arith.constant dense<0.000000e+00> : vector<16x128xf32>
    %167 = tpu.matmul %164, %166, %cst_106 {dimension_numbers = #tpu.dot_dimension_numbers<[1], [0], [0], [1], [0, 0, 1, 1], [], []>} : vector<16x32xbf16>, vector<32x128xbf16>, vector<16x128xf32> -> vector<16x128xf32>
    %168 = arith.addf %134, %167 : vector<16x128xf32>
    %169 = arith.addf %4, %168 : vector<16x128xf32>
    %c0_107 = arith.constant 0 : index
    %c0_108 = arith.constant 0 : index
    %c0_109 = arith.constant 0 : index
    %170 = vector.load %arg9[%c0_107, %c0_108, %c0_109] : memref<1x1x128xf32, #tpu.memory_space<vmem>>, vector<1x1x128xf32>
    %171 = vector.shape_cast %170 : vector<1x1x128xf32> to vector<1x128xf32>
    %172 = vector.broadcast %171 : vector<1x128xf32> to vector<16x128xf32>
    %173 = arith.addf %169, %172 : vector<16x128xf32>
    %c0_110 = arith.constant 0 : index
    %c0_111 = arith.constant 0 : index
    %c0_112 = arith.constant 0 : index
    %174 = vector.load %arg10[%c0_110, %c0_111, %c0_112] : memref<1x1x128xf32, #tpu.memory_space<vmem>>, vector<1x1x128xf32>
    %175 = vector.shape_cast %174 : vector<1x1x128xf32> to vector<1x128xf32>
    %c0_113 = arith.constant 0 : index
    %c0_114 = arith.constant 0 : index
    %c0_115 = arith.constant 0 : index
    %176 = vector.load %arg11[%c0_113, %c0_114, %c0_115] : memref<1x1x128xf32, #tpu.memory_space<vmem>>, vector<1x1x128xf32>
    %177 = vector.shape_cast %176 : vector<1x1x128xf32> to vector<1x128xf32>
    %cst_116 = arith.constant dense<0.000000e+00> : vector<16xf32>
    %178 = vector.multi_reduction <add>, %173, %cst_116 [1] : vector<16x128xf32> to vector<16xf32>
    %179 = vector.shape_cast %178 : vector<16xf32> to vector<16x1xf32>
    %cst_117 = arith.constant 1.280000e+02 : f32
    %180 = vector.broadcast %cst_117 : f32 to vector<16x1xf32>
    %181 = arith.divf %179, %180 : vector<16x1xf32>
    %182 = vector.broadcast %181 : vector<16x1xf32> to vector<16x128xf32>
    %183 = arith.subf %173, %182 : vector<16x128xf32>
    %184 = arith.mulf %183, %183 : vector<16x128xf32>
    %cst_118 = arith.constant dense<0.000000e+00> : vector<16xf32>
    %185 = vector.multi_reduction <add>, %184, %cst_118 [1] : vector<16x128xf32> to vector<16xf32>
    %186 = vector.shape_cast %185 : vector<16xf32> to vector<16x1xf32>
    %cst_119 = arith.constant 1.280000e+02 : f32
    %187 = vector.broadcast %cst_119 : f32 to vector<16x1xf32>
    %188 = arith.divf %186, %187 : vector<16x1xf32>
    %189 = vector.broadcast %181 : vector<16x1xf32> to vector<16x128xf32>
    %190 = arith.subf %173, %189 : vector<16x128xf32>
    %cst_120 = arith.constant 9.99999974E-6 : f32
    %191 = vector.broadcast %cst_120 : f32 to vector<16x1xf32>
    %192 = arith.addf %188, %191 : vector<16x1xf32>
    %193 = math.rsqrt %192 : vector<16x1xf32>
    %194 = vector.broadcast %193 : vector<16x1xf32> to vector<16x128xf32>
    %195 = arith.mulf %190, %194 : vector<16x128xf32>
    %196 = vector.broadcast %175 : vector<1x128xf32> to vector<16x128xf32>
    %197 = arith.mulf %195, %196 : vector<16x128xf32>
    %198 = vector.broadcast %177 : vector<1x128xf32> to vector<16x128xf32>
    %199 = arith.addf %197, %198 : vector<16x128xf32>
    %200 = arith.truncf %199 : vector<16x128xf32> to vector<16x128xbf16>
    %c0_121 = arith.constant 0 : index
    %c0_122 = arith.constant 0 : index
    %c0_123 = arith.constant 0 : index
    %201 = vector.load %arg12[%c0_121, %c0_122, %c0_123] : memref<1x128x256xbf16, #tpu.memory_space<vmem>>, vector<1x128x256xbf16>
    %202 = vector.shape_cast %201 : vector<1x128x256xbf16> to vector<128x256xbf16>
    %cst_124 = arith.constant dense<0.000000e+00> : vector<16x256xf32>
    %203 = tpu.matmul %200, %202, %cst_124 {dimension_numbers = #tpu.dot_dimension_numbers<[1], [0], [0], [1], [0, 0, 1, 1], [], []>} : vector<16x128xbf16>, vector<128x256xbf16>, vector<16x256xf32> -> vector<16x256xf32>
    %c0_125 = arith.constant 0 : index
    %c0_126 = arith.constant 0 : index
    %c0_127 = arith.constant 0 : index
    %204 = vector.load %arg13[%c0_125, %c0_126, %c0_127] : memref<1x1x256xf32, #tpu.memory_space<vmem>>, vector<1x1x256xf32>
    %205 = vector.shape_cast %204 : vector<1x1x256xf32> to vector<1x256xf32>
    %206 = vector.broadcast %205 : vector<1x256xf32> to vector<16x256xf32>
    %207 = arith.addf %203, %206 : vector<16x256xf32>
    %cst_128 = arith.constant 0.000000e+00 : f32
    %208 = vector.broadcast %cst_128 : f32 to vector<16x256xf32>
    %209 = arith.maximumf %207, %208 : vector<16x256xf32>
    %210 = arith.truncf %209 : vector<16x256xf32> to vector<16x256xbf16>
    %c0_129 = arith.constant 0 : index
    %c0_130 = arith.constant 0 : index
    %c0_131 = arith.constant 0 : index
    %211 = vector.load %arg14[%c0_129, %c0_130, %c0_131] : memref<1x256x128xbf16, #tpu.memory_space<vmem>>, vector<1x256x128xbf16>
    %212 = vector.shape_cast %211 : vector<1x256x128xbf16> to vector<256x128xbf16>
    %cst_132 = arith.constant dense<0.000000e+00> : vector<16x128xf32>
    %213 = tpu.matmul %210, %212, %cst_132 {dimension_numbers = #tpu.dot_dimension_numbers<[1], [0], [0], [1], [0, 0, 1, 1], [], []>} : vector<16x256xbf16>, vector<256x128xbf16>, vector<16x128xf32> -> vector<16x128xf32>
    %c0_133 = arith.constant 0 : index
    %c0_134 = arith.constant 0 : index
    %c0_135 = arith.constant 0 : index
    %214 = vector.load %arg15[%c0_133, %c0_134, %c0_135] : memref<1x1x128xf32, #tpu.memory_space<vmem>>, vector<1x1x128xf32>
    %215 = vector.shape_cast %214 : vector<1x1x128xf32> to vector<1x128xf32>
    %216 = vector.broadcast %215 : vector<1x128xf32> to vector<16x128xf32>
    %217 = arith.addf %213, %216 : vector<16x128xf32>
    %218 = arith.addf %173, %217 : vector<16x128xf32>
    %219 = vector.shape_cast %218 : vector<16x128xf32> to vector<2x8x128xf32>
    %c0_136 = arith.constant 0 : index
    %c0_137 = arith.constant 0 : index
    %c0_138 = arith.constant 0 : index
    %220 = vector.load %arg16[%c0_136, %c0_137, %c0_138] : memref<2x8x128xf32, #tpu.memory_space<vmem>>, vector<2x8x128xf32>
    tpu.vector_store %arg16[%c0_136, %c0_137, %c0_138], %219 {strides = array<i32>} : memref<2x8x128xf32, #tpu.memory_space<vmem>>, vector<2x8x128xf32>,
    return
  }
  func.func @transform_0(%arg0: i32, %arg1: i32) -> (i32, i32, i32) {
    %c0_i32 = arith.constant 0 : i32
    %c0_i32_0 = arith.constant 0 : i32
    %c0_i32_1 = arith.constant 0 : i32
    return %arg0, %c0_i32, %c0_i32_0 : i32, i32, i32
  }
  func.func @transform_1(%arg0: i32, %arg1: i32) -> (i32, i32, i32) {
    %c0_i32 = arith.constant 0 : i32
    %c0_i32_0 = arith.constant 0 : i32
    %c0_i32_1 = arith.constant 0 : i32
    return %arg1, %c0_i32, %c0_i32_0 : i32, i32, i32
  }
  func.func @transform_2(%arg0: i32, %arg1: i32) -> (i32, i32, i32) {
    %c0_i32 = arith.constant 0 : i32
    %c0_i32_0 = arith.constant 0 : i32
    %c0_i32_1 = arith.constant 0 : i32
    return %arg1, %c0_i32, %c0_i32_0 : i32, i32, i32
  }
  func.func @transform_3(%arg0: i32, %arg1: i32) -> (i32, i32, i32, i32) {
    %c0_i32 = arith.constant 0 : i32
    %c0_i32_0 = arith.constant 0 : i32
    %c0_i32_1 = arith.constant 0 : i32
    %c0_i32_2 = arith.constant 0 : i32
    return %arg1, %c0_i32, %c0_i32_0, %c0_i32_1 : i32, i32, i32, i32
  }
  func.func @transform_4(%arg0: i32, %arg1: i32) -> (i32, i32, i32, i32) {
    %c0_i32 = arith.constant 0 : i32
    %c0_i32_0 = arith.constant 0 : i32
    %c0_i32_1 = arith.constant 0 : i32
    %c0_i32_2 = arith.constant 0 : i32
    return %arg1, %c0_i32, %c0_i32_0, %c0_i32_1 : i32, i32, i32, i32
  }
  func.func @transform_5(%arg0: i32, %arg1: i32) -> (i32, i32, i32, i32) {
    %c0_i32 = arith.constant 0 : i32
    %c0_i32_0 = arith.constant 0 : i32
    %c0_i32_1 = arith.constant 0 : i32
    %c0_i32_2 = arith.constant 0 : i32
    return %arg1, %c0_i32, %c0_i32_0, %c0_i32_1 : i32, i32, i32, i32
  }
  func.func @transform_6(%arg0: i32, %arg1: i32) -> (i32, i32, i32, i32) {
    %c0_i32 = arith.constant 0 : i32
    %c0_i32_0 = arith.constant 0 : i32
    %c0_i32_1 = arith.constant 0 : i32
    %c0_i32_2 = arith.constant 0 : i32
    return %arg1, %c0_i32, %c0_i32_0, %c0_i32_1 : i32, i32, i32, i32
  }
  func.func @transform_7(%arg0: i32, %arg1: i32) -> (i32, i32, i32) {
    %c0_i32 = arith.constant 0 : i32
    %c0_i32_0 = arith.constant 0 : i32
    %c0_i32_1 = arith.constant 0 : i32
    return %arg1, %c0_i32, %c0_i32_0 : i32, i32, i32
  }
  func.func @transform_8(%arg0: i32, %arg1: i32) -> (i32, i32, i32) {
    %c0_i32 = arith.constant 0 : i32
    %c0_i32_0 = arith.constant 0 : i32
    %c0_i32_1 = arith.constant 0 : i32
    return %arg1, %c0_i32, %c0_i32_0 : i32, i32, i32
  }
  func.func @transform_9(%arg0: i32, %arg1: i32) -> (i32, i32, i32) {
    %c0_i32 = arith.constant 0 : i32
    %c0_i32_0 = arith.constant 0 : i32
    %c0_i32_1 = arith.constant 0 : i32
    return %arg1, %c0_i32, %c0_i32_0 : i32, i32, i32
  }
  func.func @transform_10(%arg0: i32, %arg1: i32) -> (i32, i32, i32) {
    %c0_i32 = arith.constant 0 : i32
    %c0_i32_0 = arith.constant 0 : i32
    %c0_i32_1 = arith.constant 0 : i32
    return %arg1, %c0_i32, %c0_i32_0 : i32, i32, i32
  }
  func.func @transform_11(%arg0: i32, %arg1: i32) -> (i32, i32, i32) {
    %c0_i32 = arith.constant 0 : i32
    %c0_i32_0 = arith.constant 0 : i32
    %c0_i32_1 = arith.constant 0 : i32
    return %arg1, %c0_i32, %c0_i32_0 : i32, i32, i32
  }
  func.func @transform_12(%arg0: i32, %arg1: i32) -> (i32, i32, i32) {
    %c0_i32 = arith.constant 0 : i32
    %c0_i32_0 = arith.constant 0 : i32
    %c0_i32_1 = arith.constant 0 : i32
    return %arg1, %c0_i32, %c0_i32_0 : i32, i32, i32
  }
  func.func @transform_13(%arg0: i32, %arg1: i32) -> (i32, i32, i32) {
    %c0_i32 = arith.constant 0 : i32
    %c0_i32_0 = arith.constant 0 : i32
    %c0_i32_1 = arith.constant 0 : i32
    return %arg1, %c0_i32, %c0_i32_0 : i32, i32, i32
  }
  func.func @transform_14(%arg0: i32, %arg1: i32) -> (i32, i32, i32) {
    %c0_i32 = arith.constant 0 : i32
    %c0_i32_0 = arith.constant 0 : i32
    %c0_i32_1 = arith.constant 0 : i32
    return %arg0, %c0_i32, %c0_i32_0 : i32, i32, i32
  }
}

</mosaic_0001>

<llo_original>
// kernel: tpu_custom_call.1
$region0: #{tpu_custom_call.1}
  #allocation0 [shape = 'u32[]', space=smem, size = 0x4, offset = 0x4, fixed_abs, tag = 'smem constant byte address 0x4 - core index']
  #allocation1 [shape = 'u32[144,128]{1,0:T(1,128)}', space=vmem, size = 0x12000, scoped, tag = 'internal scratch']
  %s0 = inlined_call_operand.vmem [shape: f32[2,8,128], index: 0, kind: input, shape index: {}]
  %s1 = inlined_call_operand.vmem [shape: f32[2,1,128], index: 1, kind: input, shape index: {}]
  %s2 = inlined_call_operand.vmem [shape: f32[2,1,128], index: 2, kind: input, shape index: {}]
  %s3 = inlined_call_operand.vmem [shape: bf16[2,4,128,32], index: 3, kind: input, shape index: {}]
  %s4 = inlined_call_operand.vmem [shape: bf16[2,4,128,32], index: 4, kind: input, shape index: {}]
  %s5 = inlined_call_operand.vmem [shape: bf16[2,4,128,32], index: 5, kind: input, shape index: {}]
  %s6 = inlined_call_operand.vmem [shape: bf16[2,4,32,128], index: 6, kind: input, shape index: {}]
  %s7 = inlined_call_operand.vmem [shape: f32[2,1,128], index: 7, kind: input, shape index: {}]
  %s8 = inlined_call_operand.vmem [shape: f32[2,1,128], index: 8, kind: input, shape index: {}]
  %s9 = inlined_call_operand.vmem [shape: f32[2,1,128], index: 9, kind: input, shape index: {}]
  %s10 = inlined_call_operand.vmem [shape: bf16[2,128,256], index: 10, kind: input, shape index: {}]
  %s11 = inlined_call_operand.vmem [shape: f32[2,1,256], index: 11, kind: input, shape index: {}]
  %s12 = inlined_call_operand.vmem [shape: bf16[2,256,128], index: 12, kind: input, shape index: {}]
  %s13 = inlined_call_operand.vmem [shape: f32[2,1,128], index: 13, kind: input, shape index: {}]
  %s14 = inlined_call_operand.hbm [shape: f32[2,8,128], index: 14, kind: output, shape index: {}]
  %s15 = sld [smem:[#allocation0]]
  $region93: #{tpu_custom_call.1} parent=0
    _
  %s17 = ssub.s32 1, %s15
  %s18 = scalar_select 0, %s17, %s15
  $region1: #{tpu_custom_call.1} parent=0
    #allocation2 [shape = 'u8[8192]{0}', space=vmem, size = 0x2000, scoped, tag = 'output window, operand 0, single buffered']
    #allocation3 [shape = 's32[2]{0}', space=sflag, size = 0x8, scoped, tag = 'scoped memory for tpu_custom_call.1']
    %19 = vsyncpa [#allocation3], 0
    loop: start=0, step=1, limit=4
    $region2: #{tpu_custom_call.1} parent=1 // loop_pre_header
      _
    $region3: #{tpu_custom_call.1} parent=1 // loop_header
      %s21 = sphi 0, %s25
      %p22 = scmp.ge.s32.totalorder %s21, 4
      %s28 = sphi 0, %s40
      %s29 = sphi 0, %s36
      %s30 = sphi 0, %s28
      %s31 = sphi 0, %s29
      %s32 = sphi 0, %s30
      %s33 = sphi 0, %s31
      %s43 = sphi 0, %s45
      %s46 = sphi 0, %s43
      %s47 = sphi 0, %s46
      %s63 = sphi 0, %s47
      %s69 = sphi 0, %s71
      %s72 = sphi 0, %s69
      %s73 = sphi 0, %s72
      %s89 = sphi 0, %s73
      %s95 = sphi 0, %s97
      %s98 = sphi 0, %s95
      %s99 = sphi 0, %s98
      %s115 = sphi 0, %s99
      %s121 = sphi 0, %s123
      %s124 = sphi 0, %s121
      %s125 = sphi 0, %s124
      %s141 = sphi 0, %s125
      %s147 = sphi 0, %s149
      %s150 = sphi 0, %s147
      %s151 = sphi 0, %s150
      %s167 = sphi 0, %s151
      %s173 = sphi 0, %s175
      %s176 = sphi 0, %s173
      %s177 = sphi 0, %s176
      %s193 = sphi 0, %s177
      %s199 = sphi 0, %s201
      %s202 = sphi 0, %s199
      %s203 = sphi 0, %s202
      %s219 = sphi 0, %s203
      %s225 = sphi 0, %s227
      %s228 = sphi 0, %s225
      %s229 = sphi 0, %s228
      %s245 = sphi 0, %s229
      %s251 = sphi 0, %s253
      %s254 = sphi 0, %s251
      %s255 = sphi 0, %s254
      %s271 = sphi 0, %s255
      %s277 = sphi 0, %s279
      %s280 = sphi 0, %s277
      %s281 = sphi 0, %s280
      %s297 = sphi 0, %s281
      %s303 = sphi 0, %s305
      %s306 = sphi 0, %s303
      %s307 = sphi 0, %s306
      %s323 = sphi 0, %s307
      %s329 = sphi 0, %s331
      %s332 = sphi 0, %s329
      %s333 = sphi 0, %s332
      %s349 = sphi 0, %s333
      %s355 = sphi 0, %s357
      %s358 = sphi 0, %s355
      %s359 = sphi 0, %s358
      %s375 = sphi 0, %s359
      %s381 = sphi 0, %s383
      %s384 = sphi 0, %s381
      %s385 = sphi 0, %s384
      %s401 = sphi 0, %s385
      %s407 = sphi 0, %s409
      %s410 = sphi 0, %s407
      %s411 = sphi 0, %s410
      %s427 = sphi 0, %s411
    $region4: #{tpu_custom_call.1} parent=1 // loop_header_branch
      %24 = sbr.rel (%p22) target = $region8
    $region5: #{tpu_custom_call.1} parent=1 // loop_body
      %s26 = ssub.s32 %s21, 1
      %s27 = ssub.s32 %s21, 2
      %s34 = sadd.s32 1, %s29
      %p35 = scmp.ge.s32.totalorder %s34, 2
      %s36 = scalar_select %p35, 0, %s34
      %s37 = sadd.s32 1, %s28
      %s38 = scalar_select %p35, %s37, %s28
      %p39 = scmp.ge.s32.totalorder %s38, 1
      %s40 = scalar_select %p39, 0, %s38
      %s41 = ssub.s32 %s28, %s40
      %p42 = scmp.eq.s32.totalorder %s41, 0
      %s44 = sadd.s32 %s43, 1
      %s45 = scalar_select %p42, %s43, %s44
      %p48 = pneg %p42
      %p49 = scmp.eq.s32.totalorder %s21, 1
      %p50 = por %p48, %p49
      %p51 = scmp.ne.s32.totalorder %s43, %s46
      %p52 = scmp.eq.s32.totalorder %s21, 0
      %p53 = por %p51, %p52
      %p54 = scmp.ne.s32.totalorder %s43, %s46
      %p55 = scmp.eq.s32.totalorder %s26, 1
      %p56 = por %p54, %p55
      %p57 = scmp.ne.s32.totalorder %s46, %s47
      %p58 = scmp.eq.s32.totalorder %s26, 0
      %p59 = por %p57, %p58
      %p60 = scmp.ne.s32.totalorder %s46, %s47
      %p61 = scmp.eq.s32.totalorder %s27, 1
      %p62 = por %p60, %p61
      %p64 = scmp.ne.s32.totalorder %s47, %s63
      %p65 = scmp.eq.s32.totalorder %s27, 0
      %p66 = por %p64, %p65
      %s67 = ssub.s32 %s29, %s36
      %p68 = scmp.eq.s32.totalorder %s67, 0
      %s70 = sadd.s32 %s69, 1
      %s71 = scalar_select %p68, %s69, %s70
      %p74 = pneg %p68
      %p75 = scmp.eq.s32.totalorder %s21, 1
      %p76 = por %p74, %p75
      %p77 = scmp.ne.s32.totalorder %s69, %s72
      %p78 = scmp.eq.s32.totalorder %s21, 0
      %p79 = por %p77, %p78
      %p80 = scmp.ne.s32.totalorder %s69, %s72
      %p81 = scmp.eq.s32.totalorder %s26, 1
      %p82 = por %p80, %p81
      %p83 = scmp.ne.s32.totalorder %s72, %s73
      %p84 = scmp.eq.s32.totalorder %s26, 0
      %p85 = por %p83, %p84
      %p86 = scmp.ne.s32.totalorder %s72, %s73
      %p87 = scmp.eq.s32.totalorder %s27, 1
      %p88 = por %p86, %p87
      %p90 = scmp.ne.s32.totalorder %s73, %s89
      %p91 = scmp.eq.s32.totalorder %s27, 0
      %p92 = por %p90, %p91
      %s93 = ssub.s32 %s29, %s36
      %p94 = scmp.eq.s32.totalorder %s93, 0
      %s96 = sadd.s32 %s95, 1
      %s97 = scalar_select %p94, %s95, %s96
      %p100 = pneg %p94
      %p101 = scmp.eq.s32.totalorder %s21, 1
      %p102 = por %p100, %p101
      %p103 = scmp.ne.s32.totalorder %s95, %s98
      %p104 = scmp.eq.s32.totalorder %s21, 0
      %p105 = por %p103, %p104
      %p106 = scmp.ne.s32.totalorder %s95, %s98
      %p107 = scmp.eq.s32.totalorder %s26, 1
      %p108 = por %p106, %p107
      %p109 = scmp.ne.s32.totalorder %s98, %s99
      %p110 = scmp.eq.s32.totalorder %s26, 0
      %p111 = por %p109, %p110
      %p112 = scmp.ne.s32.totalorder %s98, %s99
      %p113 = scmp.eq.s32.totalorder %s27, 1
      %p114 = por %p112, %p113
      %p116 = scmp.ne.s32.totalorder %s99, %s115
      %p117 = scmp.eq.s32.totalorder %s27, 0
      %p118 = por %p116, %p117
      %s119 = ssub.s32 %s29, %s36
      %p120 = scmp.eq.s32.totalorder %s119, 0
      %s122 = sadd.s32 %s121, 1
      %s123 = scalar_select %p120, %s121, %s122
      %p126 = pneg %p120
      %p127 = scmp.eq.s32.totalorder %s21, 1
      %p128 = por %p126, %p127
      %p129 = scmp.ne.s32.totalorder %s121, %s124
      %p130 = scmp.eq.s32.totalorder %s21, 0
      %p131 = por %p129, %p130
      %p132 = scmp.ne.s32.totalorder %s121, %s124
      %p133 = scmp.eq.s32.totalorder %s26, 1
      %p134 = por %p132, %p133
      %p135 = scmp.ne.s32.totalorder %s124, %s125
      %p136 = scmp.eq.s32.totalorder %s26, 0
      %p137 = por %p135, %p136
      %p138 = scmp.ne.s32.totalorder %s124, %s125
      %p139 = scmp.eq.s32.totalorder %s27, 1
      %p140 = por %p138, %p139
      %p142 = scmp.ne.s32.totalorder %s125, %s141
      %p143 = scmp.eq.s32.totalorder %s27, 0
      %p144 = por %p142, %p143
      %s145 = ssub.s32 %s29, %s36
      %p146 = scmp.eq.s32.totalorder %s145, 0
      %s148 = sadd.s32 %s147, 1
      %s149 = scalar_select %p146, %s147, %s148
      %p152 = pneg %p146
      %p153 = scmp.eq.s32.totalorder %s21, 1
      %p154 = por %p152, %p153
      %p155 = scmp.ne.s32.totalorder %s147, %s150
      %p156 = scmp.eq.s32.totalorder %s21, 0
      %p157 = por %p155, %p156
      %p158 = scmp.ne.s32.totalorder %s147, %s150
      %p159 = scmp.eq.s32.totalorder %s26, 1
      %p160 = por %p158, %p159
      %p161 = scmp.ne.s32.totalorder %s150, %s151
      %p162 = scmp.eq.s32.totalorder %s26, 0
      %p163 = por %p161, %p162
      %p164 = scmp.ne.s32.totalorder %s150, %s151
      %p165 = scmp.eq.s32.totalorder %s27, 1
      %p166 = por %p164, %p165
      %p168 = scmp.ne.s32.totalorder %s151, %s167
      %p169 = scmp.eq.s32.totalorder %s27, 0
      %p170 = por %p168, %p169
      %s171 = ssub.s32 %s29, %s36
      %p172 = scmp.eq.s32.totalorder %s171, 0
      %s174 = sadd.s32 %s173, 1
      %s175 = scalar_select %p172, %s173, %s174
      %p178 = pneg %p172
      %p179 = scmp.eq.s32.totalorder %s21, 1
      %p180 = por %p178, %p179
      %p181 = scmp.ne.s32.totalorder %s173, %s176
      %p182 = scmp.eq.s32.totalorder %s21, 0
      %p183 = por %p181, %p182
      %p184 = scmp.ne.s32.totalorder %s173, %s176
      %p185 = scmp.eq.s32.totalorder %s26, 1
      %p186 = por %p184, %p185
      %p187 = scmp.ne.s32.totalorder %s176, %s177
      %p188 = scmp.eq.s32.totalorder %s26, 0
      %p189 = por %p187, %p188
      %p190 = scmp.ne.s32.totalorder %s176, %s177
      %p191 = scmp.eq.s32.totalorder %s27, 1
      %p192 = por %p190, %p191
      %p194 = scmp.ne.s32.totalorder %s177, %s193
      %p195 = scmp.eq.s32.totalorder %s27, 0
      %p196 = por %p194, %p195
      %s197 = ssub.s32 %s29, %s36
      %p198 = scmp.eq.s32.totalorder %s197, 0
      %s200 = sadd.s32 %s199, 1
      %s201 = scalar_select %p198, %s199, %s200
      %p204 = pneg %p198
      %p205 = scmp.eq.s32.totalorder %s21, 1
      %p206 = por %p204, %p205
      %p207 = scmp.ne.s32.totalorder %s199, %s202
      %p208 = scmp.eq.s32.totalorder %s21, 0
      %p209 = por %p207, %p208
      %p210 = scmp.ne.s32.totalorder %s199, %s202
      %p211 = scmp.eq.s32.totalorder %s26, 1
      %p212 = por %p210, %p211
      %p213 = scmp.ne.s32.totalorder %s202, %s203
      %p214 = scmp.eq.s32.totalorder %s26, 0
      %p215 = por %p213, %p214
      %p216 = scmp.ne.s32.totalorder %s202, %s203
      %p217 = scmp.eq.s32.totalorder %s27, 1
      %p218 = por %p216, %p217
      %p220 = scmp.ne.s32.totalorder %s203, %s219
      %p221 = scmp.eq.s32.totalorder %s27, 0
      %p222 = por %p220, %p221
      %s223 = ssub.s32 %s29, %s36
      %p224 = scmp.eq.s32.totalorder %s223, 0
      %s226 = sadd.s32 %s225, 1
      %s227 = scalar_select %p224, %s225, %s226
      %p230 = pneg %p224
      %p231 = scmp.eq.s32.totalorder %s21, 1
      %p232 = por %p230, %p231
      %p233 = scmp.ne.s32.totalorder %s225, %s228
      %p234 = scmp.eq.s32.totalorder %s21, 0
      %p235 = por %p233, %p234
      %p236 = scmp.ne.s32.totalorder %s225, %s228
      %p237 = scmp.eq.s32.totalorder %s26, 1
      %p238 = por %p236, %p237
      %p239 = scmp.ne.s32.totalorder %s228, %s229
      %p240 = scmp.eq.s32.totalorder %s26, 0
      %p241 = por %p239, %p240
      %p242 = scmp.ne.s32.totalorder %s228, %s229
      %p243 = scmp.eq.s32.totalorder %s27, 1
      %p244 = por %p242, %p243
      %p246 = scmp.ne.s32.totalorder %s229, %s245
      %p247 = scmp.eq.s32.totalorder %s27, 0
      %p248 = por %p246, %p247
      %s249 = ssub.s32 %s29, %s36
      %p250 = scmp.eq.s32.totalorder %s249, 0
      %s252 = sadd.s32 %s251, 1
      %s253 = scalar_select %p250, %s251, %s252
      %p256 = pneg %p250
      %p257 = scmp.eq.s32.totalorder %s21, 1
      %p258 = por %p256, %p257
      %p259 = scmp.ne.s32.totalorder %s251, %s254
      %p260 = scmp.eq.s32.totalorder %s21, 0
      %p261 = por %p259, %p260
      %p262 = scmp.ne.s32.totalorder %s251, %s254
      %p263 = scmp.eq.s32.totalorder %s26, 1
      %p264 = por %p262, %p263
      %p265 = scmp.ne.s32.totalorder %s254, %s255
      %p266 = scmp.eq.s32.totalorder %s26, 0
      %p267 = por %p265, %p266
      %p268 = scmp.ne.s32.totalorder %s254, %s255
      %p269 = scmp.eq.s32.totalorder %s27, 1
      %p270 = por %p268, %p269
      %p272 = scmp.ne.s32.totalorder %s255, %s271
      %p273 = scmp.eq.s32.totalorder %s27, 0
      %p274 = por %p272, %p273
      %s275 = ssub.s32 %s29, %s36
      %p276 = scmp.eq.s32.totalorder %s275, 0
      %s278 = sadd.s32 %s277, 1
      %s279 = scalar_select %p276, %s277, %s278
      %p282 = pneg %p276
      %p283 = scmp.eq.s32.totalorder %s21, 1
      %p284 = por %p282, %p283
      %p285 = scmp.ne.s32.totalorder %s277, %s280
      %p286 = scmp.eq.s32.totalorder %s21, 0
      %p287 = por %p285, %p286
      %p288 = scmp.ne.s32.totalorder %s277, %s280
      %p289 = scmp.eq.s32.totalorder %s26, 1
      %p290 = por %p288, %p289
      %p291 = scmp.ne.s32.totalorder %s280, %s281
      %p292 = scmp.eq.s32.totalorder %s26, 0
      %p293 = por %p291, %p292
      %p294 = scmp.ne.s32.totalorder %s280, %s281
      %p295 = scmp.eq.s32.totalorder %s27, 1
      %p296 = por %p294, %p295
      %p298 = scmp.ne.s32.totalorder %s281, %s297
      %p299 = scmp.eq.s32.totalorder %s27, 0
      %p300 = por %p298, %p299
      %s301 = ssub.s32 %s29, %s36
      %p302 = scmp.eq.s32.totalorder %s301, 0
      %s304 = sadd.s32 %s303, 1
      %s305 = scalar_select %p302, %s303, %s304
      %p308 = pneg %p302
      %p309 = scmp.eq.s32.totalorder %s21, 1
      %p310 = por %p308, %p309
      %p311 = scmp.ne.s32.totalorder %s303, %s306
      %p312 = scmp.eq.s32.totalorder %s21, 0
      %p313 = por %p311, %p312
      %p314 = scmp.ne.s32.totalorder %s303, %s306
      %p315 = scmp.eq.s32.totalorder %s26, 1
      %p316 = por %p314, %p315
      %p317 = scmp.ne.s32.totalorder %s306, %s307
      %p318 = scmp.eq.s32.totalorder %s26, 0
      %p319 = por %p317, %p318
      %p320 = scmp.ne.s32.totalorder %s306, %s307
      %p321 = scmp.eq.s32.totalorder %s27, 1
      %p322 = por %p320, %p321
      %p324 = scmp.ne.s32.totalorder %s307, %s323
      %p325 = scmp.eq.s32.totalorder %s27, 0
      %p326 = por %p324, %p325
      %s327 = ssub.s32 %s29, %s36
      %p328 = scmp.eq.s32.totalorder %s327, 0
      %s330 = sadd.s32 %s329, 1
      %s331 = scalar_select %p328, %s329, %s330
      %p334 = pneg %p328
      %p335 = scmp.eq.s32.totalorder %s21, 1
      %p336 = por %p334, %p335
      %p337 = scmp.ne.s32.totalorder %s329, %s332
      %p338 = scmp.eq.s32.totalorder %s21, 0
      %p339 = por %p337, %p338
      %p340 = scmp.ne.s32.totalorder %s329, %s332
      %p341 = scmp.eq.s32.totalorder %s26, 1
      %p342 = por %p340, %p341
      %p343 = scmp.ne.s32.totalorder %s332, %s333
      %p344 = scmp.eq.s32.totalorder %s26, 0
      %p345 = por %p343, %p344
      %p346 = scmp.ne.s32.totalorder %s332, %s333
      %p347 = scmp.eq.s32.totalorder %s27, 1
      %p348 = por %p346, %p347
      %p350 = scmp.ne.s32.totalorder %s333, %s349
      %p351 = scmp.eq.s32.totalorder %s27, 0
      %p352 = por %p350, %p351
      %s353 = ssub.s32 %s29, %s36
      %p354 = scmp.eq.s32.totalorder %s353, 0
      %s356 = sadd.s32 %s355, 1
      %s357 = scalar_select %p354, %s355, %s356
      %p360 = pneg %p354
      %p361 = scmp.eq.s32.totalorder %s21, 1
      %p362 = por %p360, %p361
      %p363 = scmp.ne.s32.totalorder %s355, %s358
      %p364 = scmp.eq.s32.totalorder %s21, 0
      %p365 = por %p363, %p364
      %p366 = scmp.ne.s32.totalorder %s355, %s358
      %p367 = scmp.eq.s32.totalorder %s26, 1
      %p368 = por %p366, %p367
      %p369 = scmp.ne.s32.totalorder %s358, %s359
      %p370 = scmp.eq.s32.totalorder %s26, 0
      %p371 = por %p369, %p370
      %p372 = scmp.ne.s32.totalorder %s358, %s359
      %p373 = scmp.eq.s32.totalorder %s27, 1
      %p374 = por %p372, %p373
      %p376 = scmp.ne.s32.totalorder %s359, %s375
      %p377 = scmp.eq.s32.totalorder %s27, 0
      %p378 = por %p376, %p377
      %s379 = ssub.s32 %s29, %s36
      %p380 = scmp.eq.s32.totalorder %s379, 0
      %s382 = sadd.s32 %s381, 1
      %s383 = scalar_select %p380, %s381, %s382
      %p386 = pneg %p380
      %p387 = scmp.eq.s32.totalorder %s21, 1
      %p388 = por %p386, %p387
      %p389 = scmp.ne.s32.totalorder %s381, %s384
      %p390 = scmp.eq.s32.totalorder %s21, 0
      %p391 = por %p389, %p390
      %p392 = scmp.ne.s32.totalorder %s381, %s384
      %p393 = scmp.eq.s32.totalorder %s26, 1
      %p394 = por %p392, %p393
      %p395 = scmp.ne.s32.totalorder %s384, %s385
      %p396 = scmp.eq.s32.totalorder %s26, 0
      %p397 = por %p395, %p396
      %p398 = scmp.ne.s32.totalorder %s384, %s385
      %p399 = scmp.eq.s32.totalorder %s27, 1
      %p400 = por %p398, %p399
      %p402 = scmp.ne.s32.totalorder %s385, %s401
      %p403 = scmp.eq.s32.totalorder %s27, 0
      %p404 = por %p402, %p403
      %s405 = ssub.s32 %s28, %s40
      %p406 = scmp.eq.s32.totalorder %s405, 0
      %s408 = sadd.s32 %s407, 1
      %s409 = scalar_select %p406, %s407, %s408
      %p412 = pneg %p406
      %p413 = scmp.eq.s32.totalorder %s21, 1
      %p414 = por %p412, %p413
      %p415 = scmp.ne.s32.totalorder %s407, %s410
      %p416 = scmp.eq.s32.totalorder %s21, 0
      %p417 = por %p415, %p416
      %p418 = scmp.ne.s32.totalorder %s407, %s410
      %p419 = scmp.eq.s32.totalorder %s26, 1
      %p420 = por %p418, %p419
      %p421 = scmp.ne.s32.totalorder %s410, %s411
      %p422 = scmp.eq.s32.totalorder %s26, 0
      %p423 = por %p421, %p422
      %p424 = scmp.ne.s32.totalorder %s410, %s411
      %p425 = scmp.eq.s32.totalorder %s27, 1
      %p426 = por %p424, %p425
      %p428 = scmp.ne.s32.totalorder %s411, %s427
      %p429 = scmp.eq.s32.totalorder %s27, 0
      %p430 = por %p428, %p429
      %p431 = scmp.le.s32.totalorder 1, %s21
      %p432 = scmp.lt.s32.totalorder %s21, 3
      %p433 = pnand %p431, %p432
      %p434 = pneg %p433
      // Predicated region
      $region9: #{tpu_custom_call.1} parent=5 // pred_check
        _
      $region10: #{tpu_custom_call.1} parent=5 // pred_check_branch
        %436 = sbr.rel (%p433) target = $region12
      $region11: #{tpu_custom_call.1} parent=5 // pred_region
        %s437 = ssub.s32 %s21, 1
        // Predicated region
        $region13: #{tpu_custom_call.1} parent=11 // pred_check
          %p438 = pneg %p59
        $region14: #{tpu_custom_call.1} parent=11 // pred_check_branch
          %440 = sbr.rel (%p438) target = $region16
        $region15: #{tpu_custom_call.1} parent=11 // pred_region
          %s441 = smul.u32 2, %s30
          %p442 = scmp.lt.s32.totalorder %s441, 1
          %s443 = scalar_select %p442, %s441, 1
          %s444 = smul.addr %s443, 8
          %s445 = scalar_lea.vmem %s0, %s444
          %s446 = smul.u32 2, %s30
        $region16: #{tpu_custom_call.1} parent=11 // pred_fallthru
          _
      $region12: #{tpu_custom_call.1} parent=5 // pred_fallthru
        _
      %p447 = scmp.lt.s32.totalorder %s21, 2
      // Predicated region
      $region17: #{tpu_custom_call.1} parent=5 // pred_check
        %p448 = pneg %p447
      $region18: #{tpu_custom_call.1} parent=5 // pred_check_branch
        %450 = sbr.rel (%p448) target = $region20
      $region19: #{tpu_custom_call.1} parent=5 // pred_region
        // Predicated region
        $region21: #{tpu_custom_call.1} parent=19 // pred_check
          %p451 = pneg %p79
        $region22: #{tpu_custom_call.1} parent=19 // pred_check_branch
          %453 = sbr.rel (%p451) target = $region24
        $region23: #{tpu_custom_call.1} parent=19 // pred_region
          %p454 = scmp.lt.s32.totalorder %s29, 1
          %s455 = scalar_select %p454, %s29, 1
          %s456 = scalar_lea.vmem %s1, %s455
        $region24: #{tpu_custom_call.1} parent=19 // pred_fallthru
          _
        // Predicated region
        $region25: #{tpu_custom_call.1} parent=19 // pred_check
          %p457 = pneg %p105
        $region26: #{tpu_custom_call.1} parent=19 // pred_check_branch
          %459 = sbr.rel (%p457) target = $region28
        $region27: #{tpu_custom_call.1} parent=19 // pred_region
          %p460 = scmp.lt.s32.totalorder %s29, 1
          %s461 = scalar_select %p460, %s29, 1
          %s462 = scalar_lea.vmem %s2, %s461
        $region28: #{tpu_custom_call.1} parent=19 // pred_fallthru
          _
        // Predicated region
        $region29: #{tpu_custom_call.1} parent=19 // pred_check
          %p463 = pneg %p131
        $region30: #{tpu_custom_call.1} parent=19 // pred_check_branch
          %465 = sbr.rel (%p463) target = $region32
        $region31: #{tpu_custom_call.1} parent=19 // pred_region
          %p466 = scmp.lt.s32.totalorder %s29, 1
          %s467 = scalar_select %p466, %s29, 1
          %s468 = smul.addr %s467, 64
          %s469 = smul.addr %s468, 4
          %s470 = scalar_lea.vmem %s3, %s469
        $region32: #{tpu_custom_call.1} parent=19 // pred_fallthru
          _
        // Predicated region
        $region33: #{tpu_custom_call.1} parent=19 // pred_check
          %p471 = pneg %p157
        $region34: #{tpu_custom_call.1} parent=19 // pred_check_branch
          %473 = sbr.rel (%p471) target = $region36
        $region35: #{tpu_custom_call.1} parent=19 // pred_region
          %p474 = scmp.lt.s32.totalorder %s29, 1
          %s475 = scalar_select %p474, %s29, 1
          %s476 = smul.addr %s475, 64
          %s477 = smul.addr %s476, 4
          %s478 = scalar_lea.vmem %s4, %s477
        $region36: #{tpu_custom_call.1} parent=19 // pred_fallthru
          _
        // Predicated region
        $region37: #{tpu_custom_call.1} parent=19 // pred_check
          %p479 = pneg %p183
        $region38: #{tpu_custom_call.1} parent=19 // pred_check_branch
          %481 = sbr.rel (%p479) target = $region40
        $region39: #{tpu_custom_call.1} parent=19 // pred_region
          %p482 = scmp.lt.s32.totalorder %s29, 1
          %s483 = scalar_select %p482, %s29, 1
          %s484 = smul.addr %s483, 64
          %s485 = smul.addr %s484, 4
          %s486 = scalar_lea.vmem %s5, %s485
        $region40: #{tpu_custom_call.1} parent=19 // pred_fallthru
          _
        // Predicated region
        $region41: #{tpu_custom_call.1} parent=19 // pred_check
          %p487 = pneg %p209
        $region42: #{tpu_custom_call.1} parent=19 // pred_check_branch
          %489 = sbr.rel (%p487) target = $region44
        $region43: #{tpu_custom_call.1} parent=19 // pred_region
          %p490 = scmp.lt.s32.totalorder %s29, 1
          %s491 = scalar_select %p490, %s29, 1
          %s492 = smul.addr %s491, 16
          %s493 = smul.addr %s492, 4
          %s494 = scalar_lea.vmem %s6, %s493
        $region44: #{tpu_custom_call.1} parent=19 // pred_fallthru
          _
        // Predicated region
        $region45: #{tpu_custom_call.1} parent=19 // pred_check
          %p495 = pneg %p235
        $region46: #{tpu_custom_call.1} parent=19 // pred_check_branch
          %497 = sbr.rel (%p495) target = $region48
        $region47: #{tpu_custom_call.1} parent=19 // pred_region
          %p498 = scmp.lt.s32.totalorder %s29, 1
          %s499 = scalar_select %p498, %s29, 1
          %s500 = scalar_lea.vmem %s7, %s499
        $region48: #{tpu_custom_call.1} parent=19 // pred_fallthru
          _
        // Predicated region
        $region49: #{tpu_custom_call.1} parent=19 // pred_check
          %p501 = pneg %p261
        $region50: #{tpu_custom_call.1} parent=19 // pred_check_branch
          %503 = sbr.rel (%p501) target = $region52
        $region51: #{tpu_custom_call.1} parent=19 // pred_region
          %p504 = scmp.lt.s32.totalorder %s29, 1
          %s505 = scalar_select %p504, %s29, 1
          %s506 = scalar_lea.vmem %s8, %s505
        $region52: #{tpu_custom_call.1} parent=19 // pred_fallthru
          _
        // Predicated region
        $region53: #{tpu_custom_call.1} parent=19 // pred_check
          %p507 = pneg %p287
        $region54: #{tpu_custom_call.1} parent=19 // pred_check_branch
          %509 = sbr.rel (%p507) target = $region56
        $region55: #{tpu_custom_call.1} parent=19 // pred_region
          %p510 = scmp.lt.s32.totalorder %s29, 1
          %s511 = scalar_select %p510, %s29, 1
          %s512 = scalar_lea.vmem %s9, %s511
        $region56: #{tpu_custom_call.1} parent=19 // pred_fallthru
          _
        // Predicated region
        $region57: #{tpu_custom_call.1} parent=19 // pred_check
          %p513 = pneg %p313
        $region58: #{tpu_custom_call.1} parent=19 // pred_check_branch
          %515 = sbr.rel (%p513) target = $region60
        $region59: #{tpu_custom_call.1} parent=19 // pred_region
          %p516 = scmp.lt.s32.totalorder %s29, 1
          %s517 = scalar_select %p516, %s29, 1
          %s518 = smul.addr %s517, 32
          %s519 = smul.addr %s518, 4
          %s520 = scalar_lea.vmem %s10, %s519
        $region60: #{tpu_custom_call.1} parent=19 // pred_fallthru
          _
        // Predicated region
        $region61: #{tpu_custom_call.1} parent=19 // pred_check
          %p521 = pneg %p339
        $region62: #{tpu_custom_call.1} parent=19 // pred_check_branch
          %523 = sbr.rel (%p521) target = $region64
        $region63: #{tpu_custom_call.1} parent=19 // pred_region
          %p524 = scmp.lt.s32.totalorder %s29, 1
          %s525 = scalar_select %p524, %s29, 1
          %s526 = smul.addr %s525, 2
          %s527 = scalar_lea.vmem %s11, %s526
        $region64: #{tpu_custom_call.1} parent=19 // pred_fallthru
          _
        // Predicated region
        $region65: #{tpu_custom_call.1} parent=19 // pred_check
          %p528 = pneg %p365
        $region66: #{tpu_custom_call.1} parent=19 // pred_check_branch
          %530 = sbr.rel (%p528) target = $region68
        $region67: #{tpu_custom_call.1} parent=19 // pred_region
          %p531 = scmp.lt.s32.totalorder %s29, 1
          %s532 = scalar_select %p531, %s29, 1
          %s533 = smul.addr %s532, 32
          %s534 = smul.addr %s533, 4
          %s535 = scalar_lea.vmem %s12, %s534
        $region68: #{tpu_custom_call.1} parent=19 // pred_fallthru
          _
        // Predicated region
        $region69: #{tpu_custom_call.1} parent=19 // pred_check
          %p536 = pneg %p391
        $region70: #{tpu_custom_call.1} parent=19 // pred_check_branch
          %538 = sbr.rel (%p536) target = $region72
        $region71: #{tpu_custom_call.1} parent=19 // pred_region
          %p539 = scmp.lt.s32.totalorder %s29, 1
          %s540 = scalar_select %p539, %s29, 1
          %s541 = scalar_lea.vmem %s13, %s540
        $region72: #{tpu_custom_call.1} parent=19 // pred_fallthru
          _
      $region20: #{tpu_custom_call.1} parent=5 // pred_fallthru
        _
      %p542 = scmp.le.s32.totalorder 1, %s21
      %p543 = scmp.lt.s32.totalorder %s21, 3
      %p544 = pnand %p542, %p543
      %p545 = pneg %p544
      // Predicated region
      $region73: #{tpu_custom_call.1} parent=5 // pred_check
        _
      $region74: #{tpu_custom_call.1} parent=5 // pred_check_branch
        %547 = sbr.rel (%p544) target = $region76
      $region75: #{tpu_custom_call.1} parent=5 // pred_region
        %s548 = ssub.s32 %s21, 1
        %s549 = smul.u32 2, %s30
        %p550 = scmp.lt.s32.totalorder %s549, 1
        %s551 = scalar_select %p550, %s549, 1
        %s552 = smul.addr %s551, 8
        %s553 = scalar_lea.vmem %s0, %s552
        %p554 = pneg %p59
        %p555 = pneg %p56
        %p556 = scmp.lt.s32.totalorder %s31, 1
        %s557 = scalar_select %p556, %s31, 1
        %s558 = scalar_lea.vmem %s1, %s557
        %p559 = pneg %p85
        %p560 = pneg %p82
        %p561 = scmp.lt.s32.totalorder %s31, 1
        %s562 = scalar_select %p561, %s31, 1
        %s563 = scalar_lea.vmem %s2, %s562
        %p564 = pneg %p111
        %p565 = pneg %p108
        %p566 = scmp.lt.s32.totalorder %s31, 1
        %s567 = scalar_select %p566, %s31, 1
        %s568 = smul.addr %s567, 64
        %s569 = smul.addr %s568, 4
        %s570 = scalar_lea.vmem %s3, %s569
        %p571 = pneg %p137
        %p572 = pneg %p134
        %p573 = scmp.lt.s32.totalorder %s31, 1
        %s574 = scalar_select %p573, %s31, 1
        %s575 = smul.addr %s574, 64
        %s576 = smul.addr %s575, 4
        %s577 = scalar_lea.vmem %s4, %s576
        %p578 = pneg %p163
        %p579 = pneg %p160
        %p580 = scmp.lt.s32.totalorder %s31, 1
        %s581 = scalar_select %p580, %s31, 1
        %s582 = smul.addr %s581, 64
        %s583 = smul.addr %s582, 4
        %s584 = scalar_lea.vmem %s5, %s583
        %p585 = pneg %p189
        %p586 = pneg %p186
        %p587 = scmp.lt.s32.totalorder %s31, 1
        %s588 = scalar_select %p587, %s31, 1
        %s589 = smul.addr %s588, 16
        %s590 = smul.addr %s589, 4
        %s591 = scalar_lea.vmem %s6, %s590
        %p592 = pneg %p215
        %p593 = pneg %p212
        %p594 = scmp.lt.s32.totalorder %s31, 1
        %s595 = scalar_select %p594, %s31, 1
        %s596 = scalar_lea.vmem %s7, %s595
        %p597 = pneg %p241
        %p598 = pneg %p238
        %p599 = scmp.lt.s32.totalorder %s31, 1
        %s600 = scalar_select %p599, %s31, 1
        %s601 = scalar_lea.vmem %s8, %s600
        %p602 = pneg %p267
        %p603 = pneg %p264
        %p604 = scmp.lt.s32.totalorder %s31, 1
        %s605 = scalar_select %p604, %s31, 1
        %s606 = scalar_lea.vmem %s9, %s605
        %p607 = pneg %p293
        %p608 = pneg %p290
        %p609 = scmp.lt.s32.totalorder %s31, 1
        %s610 = scalar_select %p609, %s31, 1
        %s611 = smul.addr %s610, 32
        %s612 = smul.addr %s611, 4
        %s613 = scalar_lea.vmem %s10, %s612
        %p614 = pneg %p319
        %p615 = pneg %p316
        %p616 = scmp.lt.s32.totalorder %s31, 1
        %s617 = scalar_select %p616, %s31, 1
        %s618 = smul.addr %s617, 2
        %s619 = scalar_lea.vmem %s11, %s618
        %p620 = pneg %p345
        %p621 = pneg %p342
        %p622 = scmp.lt.s32.totalorder %s31, 1
        %s623 = scalar_select %p622, %s31, 1
        %s624 = smul.addr %s623, 32
        %s625 = smul.addr %s624, 4
        %s626 = scalar_lea.vmem %s12, %s625
        %p627 = pneg %p371
        %p628 = pneg %p368
        %p629 = scmp.lt.s32.totalorder %s31, 1
        %s630 = scalar_select %p629, %s31, 1
        %s631 = scalar_lea.vmem %s13, %s630
        %p632 = pneg %p397
        %p633 = pneg %p394
        %p634 = pneg %p423
        %p635 = pneg %p420
        %s636 = smul.u32 2, %s30
        %p637 = scmp.lt.s32.totalorder %s636, 1
        %s638 = scalar_select %p637, %s636, 1
        %s639 = smul.addr %s638, 8
        %s640 = scalar_lea.vmem %s0, %s639
        %s641 = smul.u32 2, %s30
        %p642 = scmp.lt.s32.totalorder %s31, 1
        %s643 = scalar_select %p642, %s31, 1
        %s644 = scalar_lea.vmem %s1, %s643
        %p645 = scmp.lt.s32.totalorder %s31, 1
        %s646 = scalar_select %p645, %s31, 1
        %s647 = scalar_lea.vmem %s2, %s646
        %p648 = scmp.lt.s32.totalorder %s31, 1
        %s649 = scalar_select %p648, %s31, 1
        %s650 = smul.addr %s649, 64
        %s651 = smul.addr %s650, 4
        %s652 = scalar_lea.vmem %s3, %s651
        %p653 = scmp.lt.s32.totalorder %s31, 1
        %s654 = scalar_select %p653, %s31, 1
        %s655 = smul.addr %s654, 64
        %s656 = smul.addr %s655, 4
        %s657 = scalar_lea.vmem %s4, %s656
        %p658 = scmp.lt.s32.totalorder %s31, 1
        %s659 = scalar_select %p658, %s31, 1
        %s660 = smul.addr %s659, 64
        %s661 = smul.addr %s660, 4
        %s662 = scalar_lea.vmem %s5, %s661
        %p663 = scmp.lt.s32.totalorder %s31, 1
        %s664 = scalar_select %p663, %s31, 1
        %s665 = smul.addr %s664, 16
        %s666 = smul.addr %s665, 4
        %s667 = scalar_lea.vmem %s6, %s666
        %p668 = scmp.lt.s32.totalorder %s31, 1
        %s669 = scalar_select %p668, %s31, 1
        %s670 = scalar_lea.vmem %s7, %s669
        %p671 = scmp.lt.s32.totalorder %s31, 1
        %s672 = scalar_select %p671, %s31, 1
        %s673 = scalar_lea.vmem %s8, %s672
        %p674 = scmp.lt.s32.totalorder %s31, 1
        %s675 = scalar_select %p674, %s31, 1
        %s676 = scalar_lea.vmem %s9, %s675
        %p677 = scmp.lt.s32.totalorder %s31, 1
        %s678 = scalar_select %p677, %s31, 1
        %s679 = smul.addr %s678, 32
        %s680 = smul.addr %s679, 4
        %s681 = scalar_lea.vmem %s10, %s680
        %p682 = scmp.lt.s32.totalorder %s31, 1
        %s683 = scalar_select %p682, %s31, 1
        %s684 = smul.addr %s683, 2
        %s685 = scalar_lea.vmem %s11, %s684
        %p686 = scmp.lt.s32.totalorder %s31, 1
        %s687 = scalar_select %p686, %s31, 1
        %s688 = smul.addr %s687, 32
        %s689 = smul.addr %s688, 4
        %s690 = scalar_lea.vmem %s12, %s689
        %p691 = scmp.lt.s32.totalorder %s31, 1
        %s692 = scalar_select %p691, %s31, 1
        %s693 = scalar_lea.vmem %s13, %s692
        %s694 = smul.u32 2, %s30
        %p696 = scmp.eq.s32.totalorder %s31, 0
        // Predicated region
        $region77: #{tpu_custom_call.1} parent=75 // pred_check
          %p697 = pneg %p696
        $region78: #{tpu_custom_call.1} parent=75 // pred_check_branch
          %699 = sbr.rel (%p697) target = $region80
        $region79: #{tpu_custom_call.1} parent=75 // pred_region
          %v700 = vld [vmem:[%s640] sm:$0xff]
          %v701 = vld [vmem:[%s640 + $0x8] sm:$0xff]
          %702 = vst [vmem:[#allocation2] sm:$0xff] %v700
          %703 = vst [vmem:[#allocation2 + $0x8] sm:$0xff] %v701
        $region80: #{tpu_custom_call.1} parent=75 // pred_fallthru
          _
        %v704 = vld [vmem:[#allocation2] sm:$0xff]
        %v705 = vld [vmem:[#allocation2 + $0x8] sm:$0xff]
        %v706 = vld [vmem:[%s644] sm:$0x1]
        %v707 = vld [vmem:[%s647] sm:$0x1]
        %708 = vadd.xlane.f32.xlu0 %v704
        %v709 = vpop.xlane.xlu0 %708
        %710 = vadd.xlane.f32.xlu0 %v705
        %v711 = vpop.xlane.xlu0 %710
        %v712 = vrcp.pop 128.0
        %v713 = vmul.f32 %v709, %v712
        %v714 = vmul.f32 %v711, %v712
        %v715 = vsub.f32 %v704, %v713
        %v716 = vsub.f32 %v705, %v714
        %v717 = vmul.f32 %v715, %v715
        %v718 = vmul.f32 %v716, %v716
        %719 = vadd.xlane.f32.xlu0 %v717
        %v720 = vpop.xlane.xlu0 %719
        %721 = vadd.xlane.f32.xlu0 %v718
        %v722 = vpop.xlane.xlu0 %721
        %v723 = vmul.f32 %v720, %v712
        %v724 = vmul.f32 %v722, %v712
        %v725 = vadd.f32 %v723, 1e-05
        %v726 = vadd.f32 %v724, 1e-05
        %v727 = vrsqrt.pop %v725
        %v728 = vrsqrt.pop %v726
        %v729 = vmul.f32 %v715, %v727
        %v730 = vmul.f32 %v716, %v728
        %v732 = vlaneseq
        %v733 = vshrl.u32 %v732, 7
        %v734 = vsub.s32 0, %v733
        %v735 = vrot.slane %v706, %v734
        %v737 = vmul.f32 %v729, %v735
        %v738 = vmul.f32 %v730, %v735
        %v740 = vlaneseq
        %v741 = vshrl.u32 %v740, 7
        %v742 = vsub.s32 0, %v741
        %v743 = vrot.slane %v707, %v742
        %v745 = vadd.f32 %v737, %v743
        %v746 = vadd.f32 %v738, %v743
        %v747 = vpack.c.bf16 %v746, %v745
        %v748 = vld [vmem:[%s652] sm:$0xf]
        %v749 = vld [vmem:[%s652 + $0x4] sm:$0xf]
        %v750 = vld [vmem:[%s652 + $0x8] sm:$0xf]
        %v751 = vld [vmem:[%s652 + $0xc] sm:$0xf]
        %v752 = vld [vmem:[%s652 + $0x10] sm:$0xf]
        %v753 = vld [vmem:[%s652 + $0x14] sm:$0xf]
        %v754 = vld [vmem:[%s652 + $0x18] sm:$0xf]
        %v755 = vld [vmem:[%s652 + $0x1c] sm:$0xf]
        %v756 = vld [vmem:[%s652 + $0x20] sm:$0xf]
        %v757 = vld [vmem:[%s652 + $0x24] sm:$0xf]
        %v758 = vld [vmem:[%s652 + $0x28] sm:$0xf]
        %v759 = vld [vmem:[%s652 + $0x2c] sm:$0xf]
        %v760 = vld [vmem:[%s652 + $0x30] sm:$0xf]
        %v761 = vld [vmem:[%s652 + $0x34] sm:$0xf]
        %v762 = vld [vmem:[%s652 + $0x38] sm:$0xf]
        %v763 = vld [vmem:[%s652 + $0x3c] sm:$0xf]
        %v780 = vunpack.c.l.b16 %v748
        %v781 = vunpack.c.l.b16 %v749
        %v782 = vunpack.c.l.b16 %v750
        %v783 = vunpack.c.l.b16 %v751
        %v784 = vunpack.c.l.b16 %v752
        %v785 = vunpack.c.l.b16 %v753
        %v786 = vunpack.c.l.b16 %v754
        %v787 = vunpack.c.l.b16 %v755
        %v788 = vunpack.c.l.b16 %v756
        %v789 = vunpack.c.l.b16 %v757
        %v790 = vunpack.c.l.b16 %v758
        %v791 = vunpack.c.l.b16 %v759
        %v792 = vunpack.c.l.b16 %v760
        %v793 = vunpack.c.l.b16 %v761
        %v794 = vunpack.c.l.b16 %v762
        %v795 = vunpack.c.l.b16 %v763
        %v796 = vpack.c.b16 %v781, %v780
        %v797 = vpack.c.b16 %v783, %v782
        %v798 = vpack.c.b16 %v785, %v784
        %v799 = vpack.c.b16 %v787, %v786
        %v800 = vpack.c.b16 %v789, %v788
        %v801 = vpack.c.b16 %v791, %v790
        %v802 = vpack.c.b16 %v793, %v792
        %v803 = vpack.c.b16 %v795, %v794
        %812 = vmatprep.subr.bf16.mxu0 0
        %813 = vmatpush1.bf16.msra.mxu0 %v803
        %814 = vmatprep.subr.bf16.mxu0 0
        %815 = vmatpush1.bf16.msra.mxu0 %v802
        %816 = vmatprep.subr.bf16.mxu0 0
        %817 = vmatpush1.bf16.msra.mxu0 %v801
        %818 = vmatprep.subr.bf16.mxu0 0
        %819 = vmatpush1.bf16.msra.mxu0 %v800
        %820 = vmatprep.subr.bf16.mxu0 0
        %821 = vmatpush1.bf16.msra.mxu0 %v799
        %822 = vmatprep.subr.bf16.mxu0 0
        %823 = vmatpush1.bf16.msra.mxu0 %v798
        %824 = vmatprep.subr.bf16.mxu0 0
        %825 = vmatpush1.bf16.msra.mxu0 %v797
        %826 = vmatprep.subr.bf16.mxu0 0
        %827 = vmatpush1.bf16.msra.mxu0 %v796
        %828 = vmatprep.subr.bf16.mxu0 0
        %829 = vmatpush2.bf16.msra.mxu0 0
        %830 = vmatprep.subr.bf16.mxu0 0
        %831 = vmatpush2.bf16.msra.mxu0 0
        %832 = vmatprep.subr.bf16.mxu0 0
        %833 = vmatpush2.bf16.msra.mxu0 0
        %834 = vmatprep.subr.bf16.mxu0 0
        %835 = vmatpush2.bf16.msra.mxu0 0
        %836 = vmatprep.subr.bf16.mxu0 0
        %837 = vmatpush2.bf16.msra.mxu0 0
        %838 = vmatprep.subr.bf16.mxu0 0
        %839 = vmatpush2.bf16.msra.mxu0 0
        %840 = vmatprep.subr.bf16.mxu0 0
        %841 = vmatpush2.bf16.msra.mxu0 0
        %842 = vmatprep.subr.bf16.mxu0 0
        %843 = vmatpush2.bf16.msra.mxu0 0
        %844 = vmatprep.mubr.bf16.mxu0 0
        %845 = vmatmul.mubr.bf16.gmra.mxu0 %v747
        %v846 = vpop.f32.mrf.mxu0
        %v847 = vadd.f32 0.0, %v846
        %v848 = vpop.f32.mrf.mxu0
        %v849 = vpop.f32.mrf.mxu0
        %v850 = vadd.f32 0.0, %v849
        %v851 = vpop.f32.mrf.mxu0
        %852 = vdwg.mxu0
        %v853 = vld [vmem:[%s657] sm:$0xf]
        %v854 = vld [vmem:[%s657 + $0x4] sm:$0xf]
        %v855 = vld [vmem:[%s657 + $0x8] sm:$0xf]
        %v856 = vld [vmem:[%s657 + $0xc] sm:$0xf]
        %v857 = vld [vmem:[%s657 + $0x10] sm:$0xf]
        %v858 = vld [vmem:[%s657 + $0x14] sm:$0xf]
        %v859 = vld [vmem:[%s657 + $0x18] sm:$0xf]
        %v860 = vld [vmem:[%s657 + $0x1c] sm:$0xf]
        %v861 = vld [vmem:[%s657 + $0x20] sm:$0xf]
        %v862 = vld [vmem:[%s657 + $0x24] sm:$0xf]
        %v863 = vld [vmem:[%s657 + $0x28] sm:$0xf]
        %v864 = vld [vmem:[%s657 + $0x2c] sm:$0xf]
        %v865 = vld [vmem:[%s657 + $0x30] sm:$0xf]
        %v866 = vld [vmem:[%s657 + $0x34] sm:$0xf]
        %v867 = vld [vmem:[%s657 + $0x38] sm:$0xf]
        %v868 = vld [vmem:[%s657 + $0x3c] sm:$0xf]
        %v885 = vunpack.c.l.b16 %v853
        %v886 = vunpack.c.l.b16 %v854
        %v887 = vunpack.c.l.b16 %v855
        %v888 = vunpack.c.l.b16 %v856
        %v889 = vunpack.c.l.b16 %v857
        %v890 = vunpack.c.l.b16 %v858
        %v891 = vunpack.c.l.b16 %v859
        %v892 = vunpack.c.l.b16 %v860
        %v893 = vunpack.c.l.b16 %v861
        %v894 = vunpack.c.l.b16 %v862
        %v895 = vunpack.c.l.b16 %v863
        %v896 = vunpack.c.l.b16 %v864
        %v897 = vunpack.c.l.b16 %v865
        %v898 = vunpack.c.l.b16 %v866
        %v899 = vunpack.c.l.b16 %v867
        %v900 = vunpack.c.l.b16 %v868
        %v901 = vpack.c.b16 %v886, %v885
        %v902 = vpack.c.b16 %v888, %v887
        %v903 = vpack.c.b16 %v890, %v889
        %v904 = vpack.c.b16 %v892, %v891
        %v905 = vpack.c.b16 %v894, %v893
        %v906 = vpack.c.b16 %v896, %v895
        %v907 = vpack.c.b16 %v898, %v897
        %v908 = vpack.c.b16 %v900, %v899
        %917 = vmatprep.subr.bf16.mxu0 0
        %918 = vmatpush1.bf16.msra.mxu0 %v908
        %919 = vmatprep.subr.bf16.mxu0 0
        %920 = vmatpush1.bf16.msra.mxu0 %v907
        %921 = vmatprep.subr.bf16.mxu0 0
        %922 = vmatpush1.bf16.msra.mxu0 %v906
        %923 = vmatprep.subr.bf16.mxu0 0
        %924 = vmatpush1.bf16.msra.mxu0 %v905
        %925 = vmatprep.subr.bf16.mxu0 0
        %926 = vmatpush1.bf16.msra.mxu0 %v904
        %927 = vmatprep.subr.bf16.mxu0 0
        %928 = vmatpush1.bf16.msra.mxu0 %v903
        %929 = vmatprep.subr.bf16.mxu0 0
        %930 = vmatpush1.bf16.msra.mxu0 %v902
        %931 = vmatprep.subr.bf16.mxu0 0
        %932 = vmatpush1.bf16.msra.mxu0 %v901
        %933 = vmatprep.subr.bf16.mxu0 0
        %934 = vmatpush2.bf16.msra.mxu0 0
        %935 = vmatprep.subr.bf16.mxu0 0
        %936 = vmatpush2.bf16.msra.mxu0 0
        %937 = vmatprep.subr.bf16.mxu0 0
        %938 = vmatpush2.bf16.msra.mxu0 0
        %939 = vmatprep.subr.bf16.mxu0 0
        %940 = vmatpush2.bf16.msra.mxu0 0
        %941 = vmatprep.subr.bf16.mxu0 0
        %942 = vmatpush2.bf16.msra.mxu0 0
        %943 = vmatprep.subr.bf16.mxu0 0
        %944 = vmatpush2.bf16.msra.mxu0 0
        %945 = vmatprep.subr.bf16.mxu0 0
        %946 = vmatpush2.bf16.msra.mxu0 0
        %947 = vmatprep.subr.bf16.mxu0 0
        %948 = vmatpush2.bf16.msra.mxu0 0
        %949 = vmatprep.mubr.bf16.mxu0 0
        %950 = vmatmul.mubr.bf16.gmra.mxu0 %v747
        %v951 = vpop.f32.mrf.mxu0
        %v952 = vadd.f32 0.0, %v951
        %v953 = vpop.f32.mrf.mxu0
        %v954 = vpop.f32.mrf.mxu0
        %v955 = vadd.f32 0.0, %v954
        %v956 = vpop.f32.mrf.mxu0
        %957 = vdwg.mxu0
        %v958 = vld [vmem:[%s662] sm:$0xf]
        %v959 = vld [vmem:[%s662 + $0x4] sm:$0xf]
        %v960 = vld [vmem:[%s662 + $0x8] sm:$0xf]
        %v961 = vld [vmem:[%s662 + $0xc] sm:$0xf]
        %v962 = vld [vmem:[%s662 + $0x10] sm:$0xf]
        %v963 = vld [vmem:[%s662 + $0x14] sm:$0xf]
        %v964 = vld [vmem:[%s662 + $0x18] sm:$0xf]
        %v965 = vld [vmem:[%s662 + $0x1c] sm:$0xf]
        %v966 = vld [vmem:[%s662 + $0x20] sm:$0xf]
        %v967 = vld [vmem:[%s662 + $0x24] sm:$0xf]
        %v968 = vld [vmem:[%s662 + $0x28] sm:$0xf]
        %v969 = vld [vmem:[%s662 + $0x2c] sm:$0xf]
        %v970 = vld [vmem:[%s662 + $0x30] sm:$0xf]
        %v971 = vld [vmem:[%s662 + $0x34] sm:$0xf]
        %v972 = vld [vmem:[%s662 + $0x38] sm:$0xf]
        %v973 = vld [vmem:[%s662 + $0x3c] sm:$0xf]
        %v990 = vunpack.c.l.b16 %v958
        %v991 = vunpack.c.l.b16 %v959
        %v992 = vunpack.c.l.b16 %v960
        %v993 = vunpack.c.l.b16 %v961
        %v994 = vunpack.c.l.b16 %v962
        %v995 = vunpack.c.l.b16 %v963
        %v996 = vunpack.c.l.b16 %v964
        %v997 = vunpack.c.l.b16 %v965
        %v998 = vunpack.c.l.b16 %v966
        %v999 = vunpack.c.l.b16 %v967
        %v1000 = vunpack.c.l.b16 %v968
        %v1001 = vunpack.c.l.b16 %v969
        %v1002 = vunpack.c.l.b16 %v970
        %v1003 = vunpack.c.l.b16 %v971
        %v1004 = vunpack.c.l.b16 %v972
        %v1005 = vunpack.c.l.b16 %v973
        %v1006 = vpack.c.b16 %v991, %v990
        %v1007 = vpack.c.b16 %v993, %v992
        %v1008 = vpack.c.b16 %v995, %v994
        %v1009 = vpack.c.b16 %v997, %v996
        %v1010 = vpack.c.b16 %v999, %v998
        %v1011 = vpack.c.b16 %v1001, %v1000
        %v1012 = vpack.c.b16 %v1003, %v1002
        %v1013 = vpack.c.b16 %v1005, %v1004
        %1022 = vmatprep.subr.bf16.mxu0 0
        %1023 = vmatpush1.bf16.msra.mxu0 %v1013
        %1024 = vmatprep.subr.bf16.mxu0 0
        %1025 = vmatpush1.bf16.msra.mxu0 %v1012
        %1026 = vmatprep.subr.bf16.mxu0 0
        %1027 = vmatpush1.bf16.msra.mxu0 %v1011
        %1028 = vmatprep.subr.bf16.mxu0 0
        %1029 = vmatpush1.bf16.msra.mxu0 %v1010
        %1030 = vmatprep.subr.bf16.mxu0 0
        %1031 = vmatpush1.bf16.msra.mxu0 %v1009
        %1032 = vmatprep.subr.bf16.mxu0 0
        %1033 = vmatpush1.bf16.msra.mxu0 %v1008
        %1034 = vmatprep.subr.bf16.mxu0 0
        %1035 = vmatpush1.bf16.msra.mxu0 %v1007
        %1036 = vmatprep.subr.bf16.mxu0 0
        %1037 = vmatpush1.bf16.msra.mxu0 %v1006
        %1038 = vmatprep.subr.bf16.mxu0 0
        %1039 = vmatpush2.bf16.msra.mxu0 0
        %1040 = vmatprep.subr.bf16.mxu0 0
        %1041 = vmatpush2.bf16.msra.mxu0 0
        %1042 = vmatprep.subr.bf16.mxu0 0
        %1043 = vmatpush2.bf16.msra.mxu0 0
        %1044 = vmatprep.subr.bf16.mxu0 0
        %1045 = vmatpush2.bf16.msra.mxu0 0
        %1046 = vmatprep.subr.bf16.mxu0 0
        %1047 = vmatpush2.bf16.msra.mxu0 0
        %1048 = vmatprep.subr.bf16.mxu0 0
        %1049 = vmatpush2.bf16.msra.mxu0 0
        %1050 = vmatprep.subr.bf16.mxu0 0
        %1051 = vmatpush2.bf16.msra.mxu0 0
        %1052 = vmatprep.subr.bf16.mxu0 0
        %1053 = vmatpush2.bf16.msra.mxu0 0
        %1054 = vmatprep.mubr.bf16.mxu0 0
        %1055 = vmatmul.mubr.bf16.gmra.mxu0 %v747
        %v1056 = vpop.f32.mrf.mxu0
        %v1057 = vadd.f32 0.0, %v1056
        %v1058 = vpop.f32.mrf.mxu0
        %v1059 = vpop.f32.mrf.mxu0
        %v1060 = vadd.f32 0.0, %v1059
        %v1061 = vpop.f32.mrf.mxu0
        %1062 = vdwg.mxu0
        %v1063 = vpack.c.bf16 %v847, %v847
        %v1064 = vpack.c.bf16 %v850, %v850
        %v1065 = vpack.c.bf16 %v952, %v952
        %v1066 = vpack.c.bf16 %v955, %v955
        %v1067 = vpack.c.bf16 %v1057, %v1057
        %v1068 = vpack.c.bf16 %v1060, %v1060
        %vm1069 = vcmask 261120
        %v1071 = vsel %vm1069, %v1063, 0
        %v1074 = vsel %vm1069, %v1065, 0
        %1076 = vmatprep.subr.bf16.mxu0 0
        %1077 = vmatpush1.bf16.xpose.msra.mxu0 0
        %1078 = vmatprep.subr.bf16.mxu0 0
        %1079 = vmatpush1.bf16.xpose.msra.mxu0 0
        %1080 = vmatprep.subr.bf16.mxu0 0
        %1081 = vmatpush1.bf16.xpose.msra.mxu0 0
        %1082 = vmatprep.subr.bf16.mxu0 0
        %1083 = vmatpush1.bf16.xpose.msra.mxu0 0
        %1084 = vmatprep.subr.bf16.mxu0 0
        %1085 = vmatpush1.bf16.xpose.msra.mxu0 0
        %1086 = vmatprep.subr.bf16.mxu0 0
        %1087 = vmatpush1.bf16.xpose.msra.mxu0 0
        %1088 = vmatprep.subr.bf16.mxu0 0
        %1089 = vmatpush1.bf16.xpose.msra.mxu0 0
        %1090 = vmatprep.subr.bf16.mxu0 0
        %1091 = vmatpush1.bf16.xpose.msra.mxu0 %v1074
        %1092 = vmatprep.subr.bf16.mxu0 0
        %1093 = vmatpush2.bf16.xpose.msra.mxu0 0
        %1094 = vmatprep.subr.bf16.mxu0 0
        %1095 = vmatpush2.bf16.xpose.msra.mxu0 0
        %1096 = vmatprep.subr.bf16.mxu0 0
        %1097 = vmatpush2.bf16.xpose.msra.mxu0 0
        %1098 = vmatprep.subr.bf16.mxu0 0
        %1099 = vmatpush2.bf16.xpose.msra.mxu0 0
        %1100 = vmatprep.subr.bf16.mxu0 0
        %1101 = vmatpush2.bf16.xpose.msra.mxu0 0
        %1102 = vmatprep.subr.bf16.mxu0 0
        %1103 = vmatpush2.bf16.xpose.msra.mxu0 0
        %1104 = vmatprep.subr.bf16.mxu0 0
        %1105 = vmatpush2.bf16.xpose.msra.mxu0 0
        %1106 = vmatprep.subr.bf16.mxu0 0
        %1107 = vmatpush2.bf16.xpose.msra.mxu0 0
        %1108 = vmatprep.mubr.bf16.mxu0 0
        %1109 = vmatmul.mubr.bf16.gmra.mxu0 %v1071
        %v1110 = vpop.f32.mrf.mxu0
        %v1111 = vadd.f32 0.0, %v1110
        %v1112 = vpop.f32.mrf.mxu0
        %v1113 = vpop.f32.mrf.mxu0
        %v1114 = vpop.f32.mrf.mxu0
        %1115 = vdwg.mxu0
        %v1117 = vsel %vm1069, %v1064, 0
        %v1120 = vsel %vm1069, %v1066, 0
        %1122 = vmatprep.subr.bf16.mxu0 0
        %1123 = vmatpush1.bf16.xpose.msra.mxu0 0
        %1124 = vmatprep.subr.bf16.mxu0 0
        %1125 = vmatpush1.bf16.xpose.msra.mxu0 0
        %1126 = vmatprep.subr.bf16.mxu0 0
        %1127 = vmatpush1.bf16.xpose.msra.mxu0 0
        %1128 = vmatprep.subr.bf16.mxu0 0
        %1129 = vmatpush1.bf16.xpose.msra.mxu0 0
        %1130 = vmatprep.subr.bf16.mxu0 0
        %1131 = vmatpush1.bf16.xpose.msra.mxu0 0
        %1132 = vmatprep.subr.bf16.mxu0 0
        %1133 = vmatpush1.bf16.xpose.msra.mxu0 0
        %1134 = vmatprep.subr.bf16.mxu0 0
        %1135 = vmatpush1.bf16.xpose.msra.mxu0 0
        %1136 = vmatprep.subr.bf16.mxu0 0
        %1137 = vmatpush1.bf16.xpose.msra.mxu0 %v1120
        %1138 = vmatprep.subr.bf16.mxu0 0
        %1139 = vmatpush2.bf16.xpose.msra.mxu0 0
        %1140 = vmatprep.subr.bf16.mxu0 0
        %1141 = vmatpush2.bf16.xpose.msra.mxu0 0
        %1142 = vmatprep.subr.bf16.mxu0 0
        %1143 = vmatpush2.bf16.xpose.msra.mxu0 0
        %1144 = vmatprep.subr.bf16.mxu0 0
        %1145 = vmatpush2.bf16.xpose.msra.mxu0 0
        %1146 = vmatprep.subr.bf16.mxu0 0
        %1147 = vmatpush2.bf16.xpose.msra.mxu0 0
        %1148 = vmatprep.subr.bf16.mxu0 0
        %1149 = vmatpush2.bf16.xpose.msra.mxu0 0
        %1150 = vmatprep.subr.bf16.mxu0 0
        %1151 = vmatpush2.bf16.xpose.msra.mxu0 0
        %1152 = vmatprep.subr.bf16.mxu0 0
        %1153 = vmatpush2.bf16.xpose.msra.mxu0 0
        %1154 = vmatprep.mubr.bf16.mxu0 0
        %1155 = vmatmul.mubr.bf16.gmra.mxu0 %v1117
        %v1156 = vpop.f32.mrf.mxu0
        %v1157 = vadd.f32 0.0, %v1156
        %v1158 = vpop.f32.mrf.mxu0
        %v1159 = vpop.f32.mrf.mxu0
        %v1160 = vpop.f32.mrf.mxu0
        %1161 = vdwg.mxu0
        %vm1162 = vcmask 64512
        %v1163 = vsel %vm1162, %v1111, -inf
        %1164 = vmax.xlane.f32.xlu0 %v1163
        %v1165 = vpop.xlane.xlu0 %1164
        %v1166 = vsel %vm1162, %v1157, -inf
        %1167 = vmax.xlane.f32.xlu0 %v1166
        %v1168 = vpop.xlane.xlu0 %1167
        %v1169 = vsub.f32 %v1111, %v1165
        %v1170 = vsub.f32 %v1157, %v1168
        %v1171 = vmul.f32 %v1169, 1.442695
        %v1172 = vpow.pop %v1171
        %v1173 = vmul.f32 %v1170, 1.442695
        %v1174 = vpow.pop %v1173
        %v1175 = vsel %vm1162, %v1172, 0.0
        %1176 = vadd.xlane.f32.xlu0 %v1175
        %v1177 = vpop.xlane.xlu0 %1176
        %v1178 = vsel %vm1162, %v1174, 0.0
        %1179 = vadd.xlane.f32.xlu0 %v1178
        %v1180 = vpop.xlane.xlu0 %1179
        %v1181 = vrcp.pop %v1177
        %v1182 = vrcp.pop %v1180
        %v1183 = vmul.f32 %v1172, %v1181
        %v1184 = vmul.f32 %v1174, %v1182
        %v1185 = vpack.c.bf16 %v1183, %v1183
        %v1186 = vpack.c.bf16 %v1184, %v1184
        %v1188 = vsel %vm1162, %v1185, 0
        %vm1190 = vcmask 1043456
        %v1192 = vsel %vm1190, %v1067, 0
        %1194 = vmatprep.subr.bf16.mxu0 0
        %1195 = vmatpush1.bf16.msra.mxu0 0
        %1196 = vmatprep.subr.bf16.mxu0 0
        %1197 = vmatpush1.bf16.msra.mxu0 0
        %1198 = vmatprep.subr.bf16.mxu0 0
        %1199 = vmatpush1.bf16.msra.mxu0 0
        %1200 = vmatprep.subr.bf16.mxu0 0
        %1201 = vmatpush1.bf16.msra.mxu0 0
        %1202 = vmatprep.subr.bf16.mxu0 0
        %1203 = vmatpush1.bf16.msra.mxu0 0
        %1204 = vmatprep.subr.bf16.mxu0 0
        %1205 = vmatpush1.bf16.msra.mxu0 0
        %1206 = vmatprep.subr.bf16.mxu0 0
        %1207 = vmatpush1.bf16.msra.mxu0 0
        %1208 = vmatprep.subr.bf16.mxu0 0
        %1209 = vmatpush1.bf16.msra.mxu0 %v1192
        %1210 = vmatprep.subr.bf16.mxu0 0
        %1211 = vmatpush2.bf16.msra.mxu0 0
        %1212 = vmatprep.subr.bf16.mxu0 0
        %1213 = vmatpush2.bf16.msra.mxu0 0
        %1214 = vmatprep.subr.bf16.mxu0 0
        %1215 = vmatpush2.bf16.msra.mxu0 0
        %1216 = vmatprep.subr.bf16.mxu0 0
        %1217 = vmatpush2.bf16.msra.mxu0 0
        %1218 = vmatprep.subr.bf16.mxu0 0
        %1219 = vmatpush2.bf16.msra.mxu0 0
        %1220 = vmatprep.subr.bf16.mxu0 0
        %1221 = vmatpush2.bf16.msra.mxu0 0
        %1222 = vmatprep.subr.bf16.mxu0 0
        %1223 = vmatpush2.bf16.msra.mxu0 0
        %1224 = vmatprep.subr.bf16.mxu0 0
        %1225 = vmatpush2.bf16.msra.mxu0 0
        %1226 = vmatprep.mubr.bf16.mxu0 0
        %1227 = vmatmul.mubr.bf16.gmra.mxu0 %v1188
        %v1228 = vpop.f32.mrf.mxu0
        %v1229 = vadd.f32 0.0, %v1228
        %v1230 = vpop.f32.mrf.mxu0
        %v1231 = vpop.f32.mrf.mxu0
        %v1232 = vpop.f32.mrf.mxu0
        %1233 = vdwg.mxu0
        %v1235 = vsel %vm1162, %v1186, 0
        %v1238 = vsel %vm1190, %v1068, 0
        %1240 = vmatprep.subr.bf16.mxu0 0
        %1241 = vmatpush1.bf16.msra.mxu0 0
        %1242 = vmatprep.subr.bf16.mxu0 0
        %1243 = vmatpush1.bf16.msra.mxu0 0
        %1244 = vmatprep.subr.bf16.mxu0 0
        %1245 = vmatpush1.bf16.msra.mxu0 0
        %1246 = vmatprep.subr.bf16.mxu0 0
        %1247 = vmatpush1.bf16.msra.mxu0 0
        %1248 = vmatprep.subr.bf16.mxu0 0
        %1249 = vmatpush1.bf16.msra.mxu0 0
        %1250 = vmatprep.subr.bf16.mxu0 0
        %1251 = vmatpush1.bf16.msra.mxu0 0
        %1252 = vmatprep.subr.bf16.mxu0 0
        %1253 = vmatpush1.bf16.msra.mxu0 0
        %1254 = vmatprep.subr.bf16.mxu0 0
        %1255 = vmatpush1.bf16.msra.mxu0 %v1238
        %1256 = vmatprep.subr.bf16.mxu0 0
        %1257 = vmatpush2.bf16.msra.mxu0 0
        %1258 = vmatprep.subr.bf16.mxu0 0
        %1259 = vmatpush2.bf16.msra.mxu0 0
        %1260 = vmatprep.subr.bf16.mxu0 0
        %1261 = vmatpush2.bf16.msra.mxu0 0
        %1262 = vmatprep.subr.bf16.mxu0 0
        %1263 = vmatpush2.bf16.msra.mxu0 0
        %1264 = vmatprep.subr.bf16.mxu0 0
        %1265 = vmatpush2.bf16.msra.mxu0 0
        %1266 = vmatprep.subr.bf16.mxu0 0
        %1267 = vmatpush2.bf16.msra.mxu0 0
        %1268 = vmatprep.subr.bf16.mxu0 0
        %1269 = vmatpush2.bf16.msra.mxu0 0
        %1270 = vmatprep.subr.bf16.mxu0 0
        %1271 = vmatpush2.bf16.msra.mxu0 0
        %1272 = vmatprep.mubr.bf16.mxu0 0
        %1273 = vmatmul.mubr.bf16.gmra.mxu0 %v1235
        %v1274 = vpop.f32.mrf.mxu0
        %v1275 = vadd.f32 0.0, %v1274
        %v1276 = vpop.f32.mrf.mxu0
        %v1277 = vpop.f32.mrf.mxu0
        %v1278 = vpop.f32.mrf.mxu0
        %1279 = vdwg.mxu0
        %v1280 = vpack.c.bf16 %v1275, %v1229
        %v1281 = vld [vmem:[%s667] sm:$0xf]
        %v1282 = vld [vmem:[%s667 + $0x4] sm:$0xf]
        %v1283 = vld [vmem:[%s667 + $0x8] sm:$0xf]
        %v1284 = vld [vmem:[%s667 + $0xc] sm:$0xf]
        %s1285 = scalar_lea.vmem %s652, 64
        %v1286 = vld [vmem:[%s1285] sm:$0xf]
        %v1287 = vld [vmem:[%s1285 + $0x4] sm:$0xf]
        %v1288 = vld [vmem:[%s1285 + $0x8] sm:$0xf]
        %v1289 = vld [vmem:[%s1285 + $0xc] sm:$0xf]
        %v1290 = vld [vmem:[%s1285 + $0x10] sm:$0xf]
        %v1291 = vld [vmem:[%s1285 + $0x14] sm:$0xf]
        %v1292 = vld [vmem:[%s1285 + $0x18] sm:$0xf]
        %v1293 = vld [vmem:[%s1285 + $0x1c] sm:$0xf]
        %v1294 = vld [vmem:[%s1285 + $0x20] sm:$0xf]
        %v1295 = vld [vmem:[%s1285 + $0x24] sm:$0xf]
        %v1296 = vld [vmem:[%s1285 + $0x28] sm:$0xf]
        %v1297 = vld [vmem:[%s1285 + $0x2c] sm:$0xf]
        %v1298 = vld [vmem:[%s1285 + $0x30] sm:$0xf]
        %v1299 = vld [vmem:[%s1285 + $0x34] sm:$0xf]
        %v1300 = vld [vmem:[%s1285 + $0x38] sm:$0xf]
        %v1301 = vld [vmem:[%s1285 + $0x3c] sm:$0xf]
        %v1318 = vunpack.c.l.b16 %v1286
        %v1319 = vunpack.c.l.b16 %v1287
        %v1320 = vunpack.c.l.b16 %v1288
        %v1321 = vunpack.c.l.b16 %v1289
        %v1322 = vunpack.c.l.b16 %v1290
        %v1323 = vunpack.c.l.b16 %v1291
        %v1324 = vunpack.c.l.b16 %v1292
        %v1325 = vunpack.c.l.b16 %v1293
        %v1326 = vunpack.c.l.b16 %v1294
        %v1327 = vunpack.c.l.b16 %v1295
        %v1328 = vunpack.c.l.b16 %v1296
        %v1329 = vunpack.c.l.b16 %v1297
        %v1330 = vunpack.c.l.b16 %v1298
        %v1331 = vunpack.c.l.b16 %v1299
        %v1332 = vunpack.c.l.b16 %v1300
        %v1333 = vunpack.c.l.b16 %v1301
        %v1334 = vpack.c.b16 %v1319, %v1318
        %v1335 = vpack.c.b16 %v1321, %v1320
        %v1336 = vpack.c.b16 %v1323, %v1322
        %v1337 = vpack.c.b16 %v1325, %v1324
        %v1338 = vpack.c.b16 %v1327, %v1326
        %v1339 = vpack.c.b16 %v1329, %v1328
        %v1340 = vpack.c.b16 %v1331, %v1330
        %v1341 = vpack.c.b16 %v1333, %v1332
        %1350 = vmatprep.subr.bf16.mxu0 0
        %1351 = vmatpush1.bf16.msra.mxu0 %v1341
        %1352 = vmatprep.subr.bf16.mxu0 0
        %1353 = vmatpush1.bf16.msra.mxu0 %v1340
        %1354 = vmatprep.subr.bf16.mxu0 0
        %1355 = vmatpush1.bf16.msra.mxu0 %v1339
        %1356 = vmatprep.subr.bf16.mxu0 0
        %1357 = vmatpush1.bf16.msra.mxu0 %v1338
        %1358 = vmatprep.subr.bf16.mxu0 0
        %1359 = vmatpush1.bf16.msra.mxu0 %v1337
        %1360 = vmatprep.subr.bf16.mxu0 0
        %1361 = vmatpush1.bf16.msra.mxu0 %v1336
        %1362 = vmatprep.subr.bf16.mxu0 0
        %1363 = vmatpush1.bf16.msra.mxu0 %v1335
        %1364 = vmatprep.subr.bf16.mxu0 0
        %1365 = vmatpush1.bf16.msra.mxu0 %v1334
        %1366 = vmatprep.subr.bf16.mxu0 0
        %1367 = vmatpush2.bf16.msra.mxu0 0
        %1368 = vmatprep.subr.bf16.mxu0 0
        %1369 = vmatpush2.bf16.msra.mxu0 0
        %1370 = vmatprep.subr.bf16.mxu0 0
        %1371 = vmatpush2.bf16.msra.mxu0 0
        %1372 = vmatprep.subr.bf16.mxu0 0
        %1373 = vmatpush2.bf16.msra.mxu0 0
        %1374 = vmatprep.subr.bf16.mxu0 0
        %1375 = vmatpush2.bf16.msra.mxu0 0
        %1376 = vmatprep.subr.bf16.mxu0 0
        %1377 = vmatpush2.bf16.msra.mxu0 0
        %1378 = vmatprep.subr.bf16.mxu0 0
        %1379 = vmatpush2.bf16.msra.mxu0 0
        %1380 = vmatprep.subr.bf16.mxu0 0
        %1381 = vmatpush2.bf16.msra.mxu0 0
        %1382 = vmatprep.mubr.bf16.mxu0 0
        %1383 = vmatmul.mubr.bf16.gmra.mxu0 %v747
        %v1384 = vpop.f32.mrf.mxu0
        %v1385 = vadd.f32 0.0, %v1384
        %v1386 = vpop.f32.mrf.mxu0
        %v1387 = vpop.f32.mrf.mxu0
        %v1388 = vadd.f32 0.0, %v1387
        %v1389 = vpop.f32.mrf.mxu0
        %1390 = vdwg.mxu0
        %s1391 = scalar_lea.vmem %s657, 64
        %v1392 = vld [vmem:[%s1391] sm:$0xf]
        %v1393 = vld [vmem:[%s1391 + $0x4] sm:$0xf]
        %v1394 = vld [vmem:[%s1391 + $0x8] sm:$0xf]
        %v1395 = vld [vmem:[%s1391 + $0xc] sm:$0xf]
        %v1396 = vld [vmem:[%s1391 + $0x10] sm:$0xf]
        %v1397 = vld [vmem:[%s1391 + $0x14] sm:$0xf]
        %v1398 = vld [vmem:[%s1391 + $0x18] sm:$0xf]
        %v1399 = vld [vmem:[%s1391 + $0x1c] sm:$0xf]
        %v1400 = vld [vmem:[%s1391 + $0x20] sm:$0xf]
        %v1401 = vld [vmem:[%s1391 + $0x24] sm:$0xf]
        %v1402 = vld [vmem:[%s1391 + $0x28] sm:$0xf]
        %v1403 = vld [vmem:[%s1391 + $0x2c] sm:$0xf]
        %v1404 = vld [vmem:[%s1391 + $0x30] sm:$0xf]
        %v1405 = vld [vmem:[%s1391 + $0x34] sm:$0xf]
        %v1406 = vld [vmem:[%s1391 + $0x38] sm:$0xf]
        %v1407 = vld [vmem:[%s1391 + $0x3c] sm:$0xf]
        %v1424 = vunpack.c.l.b16 %v1392
        %v1425 = vunpack.c.l.b16 %v1393
        %v1426 = vunpack.c.l.b16 %v1394
        %v1427 = vunpack.c.l.b16 %v1395
        %v1428 = vunpack.c.l.b16 %v1396
        %v1429 = vunpack.c.l.b16 %v1397
        %v1430 = vunpack.c.l.b16 %v1398
        %v1431 = vunpack.c.l.b16 %v1399
        %v1432 = vunpack.c.l.b16 %v1400
        %v1433 = vunpack.c.l.b16 %v1401
        %v1434 = vunpack.c.l.b16 %v1402
        %v1435 = vunpack.c.l.b16 %v1403
        %v1436 = vunpack.c.l.b16 %v1404
        %v1437 = vunpack.c.l.b16 %v1405
        %v1438 = vunpack.c.l.b16 %v1406
        %v1439 = vunpack.c.l.b16 %v1407
        %v1440 = vpack.c.b16 %v1425, %v1424
        %v1441 = vpack.c.b16 %v1427, %v1426
        %v1442 = vpack.c.b16 %v1429, %v1428
        %v1443 = vpack.c.b16 %v1431, %v1430
        %v1444 = vpack.c.b16 %v1433, %v1432
        %v1445 = vpack.c.b16 %v1435, %v1434
        %v1446 = vpack.c.b16 %v1437, %v1436
        %v1447 = vpack.c.b16 %v1439, %v1438
        %1456 = vmatprep.subr.bf16.mxu0 0
        %1457 = vmatpush1.bf16.msra.mxu0 %v1447
        %1458 = vmatprep.subr.bf16.mxu0 0
        %1459 = vmatpush1.bf16.msra.mxu0 %v1446
        %1460 = vmatprep.subr.bf16.mxu0 0
        %1461 = vmatpush1.bf16.msra.mxu0 %v1445
        %1462 = vmatprep.subr.bf16.mxu0 0
        %1463 = vmatpush1.bf16.msra.mxu0 %v1444
        %1464 = vmatprep.subr.bf16.mxu0 0
        %1465 = vmatpush1.bf16.msra.mxu0 %v1443
        %1466 = vmatprep.subr.bf16.mxu0 0
        %1467 = vmatpush1.bf16.msra.mxu0 %v1442
        %1468 = vmatprep.subr.bf16.mxu0 0
        %1469 = vmatpush1.bf16.msra.mxu0 %v1441
        %1470 = vmatprep.subr.bf16.mxu0 0
        %1471 = vmatpush1.bf16.msra.mxu0 %v1440
        %1472 = vmatprep.subr.bf16.mxu0 0
        %1473 = vmatpush2.bf16.msra.mxu0 0
        %1474 = vmatprep.subr.bf16.mxu0 0
        %1475 = vmatpush2.bf16.msra.mxu0 0
        %1476 = vmatprep.subr.bf16.mxu0 0
        %1477 = vmatpush2.bf16.msra.mxu0 0
        %1478 = vmatprep.subr.bf16.mxu0 0
        %1479 = vmatpush2.bf16.msra.mxu0 0
        %1480 = vmatprep.subr.bf16.mxu0 0
        %1481 = vmatpush2.bf16.msra.mxu0 0
        %1482 = vmatprep.subr.bf16.mxu0 0
        %1483 = vmatpush2.bf16.msra.mxu0 0
        %1484 = vmatprep.subr.bf16.mxu0 0
        %1485 = vmatpush2.bf16.msra.mxu0 0
        %1486 = vmatprep.subr.bf16.mxu0 0
        %1487 = vmatpush2.bf16.msra.mxu0 0
        %1488 = vmatprep.mubr.bf16.mxu0 0
        %1489 = vmatmul.mubr.bf16.gmra.mxu0 %v747
        %v1490 = vpop.f32.mrf.mxu0
        %v1491 = vadd.f32 0.0, %v1490
        %v1492 = vpop.f32.mrf.mxu0
        %v1493 = vpop.f32.mrf.mxu0
        %v1494 = vadd.f32 0.0, %v1493
        %v1495 = vpop.f32.mrf.mxu0
        %1496 = vdwg.mxu0
        %s1497 = scalar_lea.vmem %s662, 64
        %v1498 = vld [vmem:[%s1497] sm:$0xf]
        %v1499 = vld [vmem:[%s1497 + $0x4] sm:$0xf]
        %v1500 = vld [vmem:[%s1497 + $0x8] sm:$0xf]
        %v1501 = vld [vmem:[%s1497 + $0xc] sm:$0xf]
        %v1502 = vld [vmem:[%s1497 + $0x10] sm:$0xf]
        %v1503 = vld [vmem:[%s1497 + $0x14] sm:$0xf]
        %v1504 = vld [vmem:[%s1497 + $0x18] sm:$0xf]
        %v1505 = vld [vmem:[%s1497 + $0x1c] sm:$0xf]
        %v1506 = vld [vmem:[%s1497 + $0x20] sm:$0xf]
        %v1507 = vld [vmem:[%s1497 + $0x24] sm:$0xf]
        %v1508 = vld [vmem:[%s1497 + $0x28] sm:$0xf]
        %v1509 = vld [vmem:[%s1497 + $0x2c] sm:$0xf]
        %v1510 = vld [vmem:[%s1497 + $0x30] sm:$0xf]
        %v1511 = vld [vmem:[%s1497 + $0x34] sm:$0xf]
        %v1512 = vld [vmem:[%s1497 + $0x38] sm:$0xf]
        %v1513 = vld [vmem:[%s1497 + $0x3c] sm:$0xf]
        %v1530 = vunpack.c.l.b16 %v1498
        %v1531 = vunpack.c.l.b16 %v1499
        %v1532 = vunpack.c.l.b16 %v1500
        %v1533 = vunpack.c.l.b16 %v1501
        %v1534 = vunpack.c.l.b16 %v1502
        %v1535 = vunpack.c.l.b16 %v1503
        %v1536 = vunpack.c.l.b16 %v1504
        %v1537 = vunpack.c.l.b16 %v1505
        %v1538 = vunpack.c.l.b16 %v1506
        %v1539 = vunpack.c.l.b16 %v1507
        %v1540 = vunpack.c.l.b16 %v1508
        %v1541 = vunpack.c.l.b16 %v1509
        %v1542 = vunpack.c.l.b16 %v1510
        %v1543 = vunpack.c.l.b16 %v1511
        %v1544 = vunpack.c.l.b16 %v1512
        %v1545 = vunpack.c.l.b16 %v1513
        %v1546 = vpack.c.b16 %v1531, %v1530
        %v1547 = vpack.c.b16 %v1533, %v1532
        %v1548 = vpack.c.b16 %v1535, %v1534
        %v1549 = vpack.c.b16 %v1537, %v1536
        %v1550 = vpack.c.b16 %v1539, %v1538
        %v1551 = vpack.c.b16 %v1541, %v1540
        %v1552 = vpack.c.b16 %v1543, %v1542
        %v1553 = vpack.c.b16 %v1545, %v1544
        %1562 = vmatprep.subr.bf16.mxu0 0
        %1563 = vmatpush1.bf16.msra.mxu0 %v1553
        %1564 = vmatprep.subr.bf16.mxu0 0
        %1565 = vmatpush1.bf16.msra.mxu0 %v1552
        %1566 = vmatprep.subr.bf16.mxu0 0
        %1567 = vmatpush1.bf16.msra.mxu0 %v1551
        %1568 = vmatprep.subr.bf16.mxu0 0
        %1569 = vmatpush1.bf16.msra.mxu0 %v1550
        %1570 = vmatprep.subr.bf16.mxu0 0
        %1571 = vmatpush1.bf16.msra.mxu0 %v1549
        %1572 = vmatprep.subr.bf16.mxu0 0
        %1573 = vmatpush1.bf16.msra.mxu0 %v1548
        %1574 = vmatprep.subr.bf16.mxu0 0
        %1575 = vmatpush1.bf16.msra.mxu0 %v1547
        %1576 = vmatprep.subr.bf16.mxu0 0
        %1577 = vmatpush1.bf16.msra.mxu0 %v1546
        %1578 = vmatprep.subr.bf16.mxu0 0
        %1579 = vmatpush2.bf16.msra.mxu0 0
        %1580 = vmatprep.subr.bf16.mxu0 0
        %1581 = vmatpush2.bf16.msra.mxu0 0
        %1582 = vmatprep.subr.bf16.mxu0 0
        %1583 = vmatpush2.bf16.msra.mxu0 0
        %1584 = vmatprep.subr.bf16.mxu0 0
        %1585 = vmatpush2.bf16.msra.mxu0 0
        %1586 = vmatprep.subr.bf16.mxu0 0
        %1587 = vmatpush2.bf16.msra.mxu0 0
        %1588 = vmatprep.subr.bf16.mxu0 0
        %1589 = vmatpush2.bf16.msra.mxu0 0
        %1590 = vmatprep.subr.bf16.mxu0 0
        %1591 = vmatpush2.bf16.msra.mxu0 0
        %1592 = vmatprep.subr.bf16.mxu0 0
        %1593 = vmatpush2.bf16.msra.mxu0 0
        %1594 = vmatprep.mubr.bf16.mxu0 0
        %1595 = vmatmul.mubr.bf16.gmra.mxu0 %v747
        %v1596 = vpop.f32.mrf.mxu0
        %v1597 = vadd.f32 0.0, %v1596
        %v1598 = vpop.f32.mrf.mxu0
        %v1599 = vpop.f32.mrf.mxu0
        %v1600 = vadd.f32 0.0, %v1599
        %v1601 = vpop.f32.mrf.mxu0
        %1602 = vdwg.mxu0
        %v1603 = vpack.c.bf16 %v1385, %v1385
        %v1604 = vpack.c.bf16 %v1388, %v1388
        %v1605 = vpack.c.bf16 %v1491, %v1491
        %v1606 = vpack.c.bf16 %v1494, %v1494
        %v1607 = vpack.c.bf16 %v1597, %v1597
        %v1608 = vpack.c.bf16 %v1600, %v1600
        %v1610 = vsel %vm1069, %v1603, 0
        %v1613 = vsel %vm1069, %v1605, 0
        %1615 = vmatprep.subr.bf16.mxu0 0
        %1616 = vmatpush1.bf16.xpose.msra.mxu0 0
        %1617 = vmatprep.subr.bf16.mxu0 0
        %1618 = vmatpush1.bf16.xpose.msra.mxu0 0
        %1619 = vmatprep.subr.bf16.mxu0 0
        %1620 = vmatpush1.bf16.xpose.msra.mxu0 0
        %1621 = vmatprep.subr.bf16.mxu0 0
        %1622 = vmatpush1.bf16.xpose.msra.mxu0 0
        %1623 = vmatprep.subr.bf16.mxu0 0
        %1624 = vmatpush1.bf16.xpose.msra.mxu0 0
        %1625 = vmatprep.subr.bf16.mxu0 0
        %1626 = vmatpush1.bf16.xpose.msra.mxu0 0
        %1627 = vmatprep.subr.bf16.mxu0 0
        %1628 = vmatpush1.bf16.xpose.msra.mxu0 0
        %1629 = vmatprep.subr.bf16.mxu0 0
        %1630 = vmatpush1.bf16.xpose.msra.mxu0 %v1613
        %1631 = vmatprep.subr.bf16.mxu0 0
        %1632 = vmatpush2.bf16.xpose.msra.mxu0 0
        %1633 = vmatprep.subr.bf16.mxu0 0
        %1634 = vmatpush2.bf16.xpose.msra.mxu0 0
        %1635 = vmatprep.subr.bf16.mxu0 0
        %1636 = vmatpush2.bf16.xpose.msra.mxu0 0
        %1637 = vmatprep.subr.bf16.mxu0 0
        %1638 = vmatpush2.bf16.xpose.msra.mxu0 0
        %1639 = vmatprep.subr.bf16.mxu0 0
        %1640 = vmatpush2.bf16.xpose.msra.mxu0 0
        %1641 = vmatprep.subr.bf16.mxu0 0
        %1642 = vmatpush2.bf16.xpose.msra.mxu0 0
        %1643 = vmatprep.subr.bf16.mxu0 0
        %1644 = vmatpush2.bf16.xpose.msra.mxu0 0
        %1645 = vmatprep.subr.bf16.mxu0 0
        %1646 = vmatpush2.bf16.xpose.msra.mxu0 0
        %1647 = vmatprep.mubr.bf16.mxu0 0
        %1648 = vmatmul.mubr.bf16.gmra.mxu0 %v1610
        %v1649 = vpop.f32.mrf.mxu0
        %v1650 = vadd.f32 0.0, %v1649
        %v1651 = vpop.f32.mrf.mxu0
        %v1652 = vpop.f32.mrf.mxu0
        %v1653 = vpop.f32.mrf.mxu0
        %1654 = vdwg.mxu0
        %v1656 = vsel %vm1069, %v1604, 0
        %v1659 = vsel %vm1069, %v1606, 0
        %1661 = vmatprep.subr.bf16.mxu0 0
        %1662 = vmatpush1.bf16.xpose.msra.mxu0 0
        %1663 = vmatprep.subr.bf16.mxu0 0
        %1664 = vmatpush1.bf16.xpose.msra.mxu0 0
        %1665 = vmatprep.subr.bf16.mxu0 0
        %1666 = vmatpush1.bf16.xpose.msra.mxu0 0
        %1667 = vmatprep.subr.bf16.mxu0 0
        %1668 = vmatpush1.bf16.xpose.msra.mxu0 0
        %1669 = vmatprep.subr.bf16.mxu0 0
        %1670 = vmatpush1.bf16.xpose.msra.mxu0 0
        %1671 = vmatprep.subr.bf16.mxu0 0
        %1672 = vmatpush1.bf16.xpose.msra.mxu0 0
        %1673 = vmatprep.subr.bf16.mxu0 0
        %1674 = vmatpush1.bf16.xpose.msra.mxu0 0
        %1675 = vmatprep.subr.bf16.mxu0 0
        %1676 = vmatpush1.bf16.xpose.msra.mxu0 %v1659
        %1677 = vmatprep.subr.bf16.mxu0 0
        %1678 = vmatpush2.bf16.xpose.msra.mxu0 0
        %1679 = vmatprep.subr.bf16.mxu0 0
        %1680 = vmatpush2.bf16.xpose.msra.mxu0 0
        %1681 = vmatprep.subr.bf16.mxu0 0
        %1682 = vmatpush2.bf16.xpose.msra.mxu0 0
        %1683 = vmatprep.subr.bf16.mxu0 0
        %1684 = vmatpush2.bf16.xpose.msra.mxu0 0
        %1685 = vmatprep.subr.bf16.mxu0 0
        %1686 = vmatpush2.bf16.xpose.msra.mxu0 0
        %1687 = vmatprep.subr.bf16.mxu0 0
        %1688 = vmatpush2.bf16.xpose.msra.mxu0 0
        %1689 = vmatprep.subr.bf16.mxu0 0
        %1690 = vmatpush2.bf16.xpose.msra.mxu0 0
        %1691 = vmatprep.subr.bf16.mxu0 0
        %1692 = vmatpush2.bf16.xpose.msra.mxu0 0
        %1693 = vmatprep.mubr.bf16.mxu0 0
        %1694 = vmatmul.mubr.bf16.gmra.mxu0 %v1656
        %v1695 = vpop.f32.mrf.mxu0
        %v1696 = vadd.f32 0.0, %v1695
        %v1697 = vpop.f32.mrf.mxu0
        %v1698 = vpop.f32.mrf.mxu0
        %v1699 = vpop.f32.mrf.mxu0
        %1700 = vdwg.mxu0
        %v1701 = vsel %vm1162, %v1650, -inf
        %1702 = vmax.xlane.f32.xlu0 %v1701
        %v1703 = vpop.xlane.xlu0 %1702
        %v1704 = vsel %vm1162, %v1696, -inf
        %1705 = vmax.xlane.f32.xlu0 %v1704
        %v1706 = vpop.xlane.xlu0 %1705
        %v1707 = vsub.f32 %v1650, %v1703
        %v1708 = vsub.f32 %v1696, %v1706
        %v1709 = vmul.f32 %v1707, 1.442695
        %v1710 = vpow.pop %v1709
        %v1711 = vmul.f32 %v1708, 1.442695
        %v1712 = vpow.pop %v1711
        %v1713 = vsel %vm1162, %v1710, 0.0
        %1714 = vadd.xlane.f32.xlu0 %v1713
        %v1715 = vpop.xlane.xlu0 %1714
        %v1716 = vsel %vm1162, %v1712, 0.0
        %1717 = vadd.xlane.f32.xlu0 %v1716
        %v1718 = vpop.xlane.xlu0 %1717
        %v1719 = vrcp.pop %v1715
        %v1720 = vrcp.pop %v1718
        %v1721 = vmul.f32 %v1710, %v1719
        %v1722 = vmul.f32 %v1712, %v1720
        %v1723 = vpack.c.bf16 %v1721, %v1721
        %v1724 = vpack.c.bf16 %v1722, %v1722
        %v1726 = vsel %vm1162, %v1723, 0
        %v1729 = vsel %vm1190, %v1607, 0
        %1731 = vmatprep.subr.bf16.mxu0 0
        %1732 = vmatpush1.bf16.msra.mxu0 0
        %1733 = vmatprep.subr.bf16.mxu0 0
        %1734 = vmatpush1.bf16.msra.mxu0 0
        %1735 = vmatprep.subr.bf16.mxu0 0
        %1736 = vmatpush1.bf16.msra.mxu0 0
        %1737 = vmatprep.subr.bf16.mxu0 0
        %1738 = vmatpush1.bf16.msra.mxu0 0
        %1739 = vmatprep.subr.bf16.mxu0 0
        %1740 = vmatpush1.bf16.msra.mxu0 0
        %1741 = vmatprep.subr.bf16.mxu0 0
        %1742 = vmatpush1.bf16.msra.mxu0 0
        %1743 = vmatprep.subr.bf16.mxu0 0
        %1744 = vmatpush1.bf16.msra.mxu0 0
        %1745 = vmatprep.subr.bf16.mxu0 0
        %1746 = vmatpush1.bf16.msra.mxu0 %v1729
        %1747 = vmatprep.subr.bf16.mxu0 0
        %1748 = vmatpush2.bf16.msra.mxu0 0
        %1749 = vmatprep.subr.bf16.mxu0 0
        %1750 = vmatpush2.bf16.msra.mxu0 0
        %1751 = vmatprep.subr.bf16.mxu0 0
        %1752 = vmatpush2.bf16.msra.mxu0 0
        %1753 = vmatprep.subr.bf16.mxu0 0
        %1754 = vmatpush2.bf16.msra.mxu0 0
        %1755 = vmatprep.subr.bf16.mxu0 0
        %1756 = vmatpush2.bf16.msra.mxu0 0
        %1757 = vmatprep.subr.bf16.mxu0 0
        %1758 = vmatpush2.bf16.msra.mxu0 0
        %1759 = vmatprep.subr.bf16.mxu0 0
        %1760 = vmatpush2.bf16.msra.mxu0 0
        %1761 = vmatprep.subr.bf16.mxu0 0
        %1762 = vmatpush2.bf16.msra.mxu0 0
        %1763 = vmatprep.mubr.bf16.mxu0 0
        %1764 = vmatmul.mubr.bf16.gmra.mxu0 %v1726
        %v1765 = vpop.f32.mrf.mxu0
        %v1766 = vadd.f32 0.0, %v1765
        %v1767 = vpop.f32.mrf.mxu0
        %v1768 = vpop.f32.mrf.mxu0
        %v1769 = vpop.f32.mrf.mxu0
        %1770 = vdwg.mxu0
        %v1772 = vsel %vm1162, %v1724, 0
        %v1775 = vsel %vm1190, %v1608, 0
        %1777 = vmatprep.subr.bf16.mxu0 0
        %1778 = vmatpush1.bf16.msra.mxu0 0
        %1779 = vmatprep.subr.bf16.mxu0 0
        %1780 = vmatpush1.bf16.msra.mxu0 0
        %1781 = vmatprep.subr.bf16.mxu0 0
        %1782 = vmatpush1.bf16.msra.mxu0 0
        %1783 = vmatprep.subr.bf16.mxu0 0
        %1784 = vmatpush1.bf16.msra.mxu0 0
        %1785 = vmatprep.subr.bf16.mxu0 0
        %1786 = vmatpush1.bf16.msra.mxu0 0
        %1787 = vmatprep.subr.bf16.mxu0 0
        %1788 = vmatpush1.bf16.msra.mxu0 0
        %1789 = vmatprep.subr.bf16.mxu0 0
        %1790 = vmatpush1.bf16.msra.mxu0 0
        %1791 = vmatprep.subr.bf16.mxu0 0
        %1792 = vmatpush1.bf16.msra.mxu0 %v1775
        %1793 = vmatprep.subr.bf16.mxu0 0
        %1794 = vmatpush2.bf16.msra.mxu0 0
        %1795 = vmatprep.subr.bf16.mxu0 0
        %1796 = vmatpush2.bf16.msra.mxu0 0
        %1797 = vmatprep.subr.bf16.mxu0 0
        %1798 = vmatpush2.bf16.msra.mxu0 0
        %1799 = vmatprep.subr.bf16.mxu0 0
        %1800 = vmatpush2.bf16.msra.mxu0 0
        %1801 = vmatprep.subr.bf16.mxu0 0
        %1802 = vmatpush2.bf16.msra.mxu0 0
        %1803 = vmatprep.subr.bf16.mxu0 0
        %1804 = vmatpush2.bf16.msra.mxu0 0
        %1805 = vmatprep.subr.bf16.mxu0 0
        %1806 = vmatpush2.bf16.msra.mxu0 0
        %1807 = vmatprep.subr.bf16.mxu0 0
        %1808 = vmatpush2.bf16.msra.mxu0 0
        %1809 = vmatprep.mubr.bf16.mxu0 0
        %1810 = vmatmul.mubr.bf16.gmra.mxu0 %v1772
        %v1811 = vpop.f32.mrf.mxu0
        %v1812 = vadd.f32 0.0, %v1811
        %v1813 = vpop.f32.mrf.mxu0
        %v1814 = vpop.f32.mrf.mxu0
        %v1815 = vpop.f32.mrf.mxu0
        %1816 = vdwg.mxu0
        %v1817 = vpack.c.bf16 %v1812, %v1766
        %s1818 = scalar_lea.vmem %s667, 16
        %v1819 = vld [vmem:[%s1818] sm:$0xf]
        %v1820 = vld [vmem:[%s1818 + $0x4] sm:$0xf]
        %v1821 = vld [vmem:[%s1818 + $0x8] sm:$0xf]
        %v1822 = vld [vmem:[%s1818 + $0xc] sm:$0xf]
        %v1827 = vunpack.c.l.b16 %v1819
        %v1828 = vunpack.c.l.b16 %v1820
        %v1829 = vunpack.c.l.b16 %v1821
        %v1830 = vunpack.c.l.b16 %v1822
        %v1831 = vpack.c.b16 %v1828, %v1827
        %v1832 = vpack.c.b16 %v1830, %v1829
        %v1836 = vsel %vm1069, %v1817, 0
        %1838 = vmatprep.subr.bf16.mxu0 0
        %1839 = vmatpush1.bf16.msra.mxu0 0
        %1840 = vmatprep.subr.bf16.mxu0 0
        %1841 = vmatpush1.bf16.msra.mxu0 0
        %1842 = vmatprep.subr.bf16.mxu0 0
        %1843 = vmatpush1.bf16.msra.mxu0 0
        %1844 = vmatprep.subr.bf16.mxu0 0
        %1845 = vmatpush1.bf16.msra.mxu0 0
        %1846 = vmatprep.subr.bf16.mxu0 0
        %1847 = vmatpush1.bf16.msra.mxu0 0
        %1848 = vmatprep.subr.bf16.mxu0 0
        %1849 = vmatpush1.bf16.msra.mxu0 0
        %1850 = vmatprep.subr.bf16.mxu0 0
        %1851 = vmatpush1.bf16.msra.mxu0 %v1832
        %1852 = vmatprep.subr.bf16.mxu0 0
        %1853 = vmatpush1.bf16.msra.mxu0 %v1831
        %1854 = vmatprep.subr.bf16.mxu0 0
        %1855 = vmatpush2.bf16.msra.mxu0 0
        %1856 = vmatprep.subr.bf16.mxu0 0
        %1857 = vmatpush2.bf16.msra.mxu0 0
        %1858 = vmatprep.subr.bf16.mxu0 0
        %1859 = vmatpush2.bf16.msra.mxu0 0
        %1860 = vmatprep.subr.bf16.mxu0 0
        %1861 = vmatpush2.bf16.msra.mxu0 0
        %1862 = vmatprep.subr.bf16.mxu0 0
        %1863 = vmatpush2.bf16.msra.mxu0 0
        %1864 = vmatprep.subr.bf16.mxu0 0
        %1865 = vmatpush2.bf16.msra.mxu0 0
        %1866 = vmatprep.subr.bf16.mxu0 0
        %1867 = vmatpush2.bf16.msra.mxu0 0
        %1868 = vmatprep.subr.bf16.mxu0 0
        %1869 = vmatpush2.bf16.msra.mxu0 0
        %1870 = vmatprep.mubr.bf16.mxu0 0
        %1871 = vmatmul.mubr.bf16.gmra.mxu0 %v1836
        %v1872 = vpop.f32.mrf.mxu0
        %v1873 = vadd.f32 0.0, %v1872
        %v1874 = vpop.f32.mrf.mxu0
        %v1875 = vpop.f32.mrf.mxu0
        %v1876 = vadd.f32 0.0, %v1875
        %v1877 = vpop.f32.mrf.mxu0
        %1878 = vdwg.mxu0
        %v1883 = vunpack.c.l.b16 %v1281
        %v1884 = vunpack.c.l.b16 %v1282
        %v1885 = vunpack.c.l.b16 %v1283
        %v1886 = vunpack.c.l.b16 %v1284
        %v1887 = vpack.c.b16 %v1884, %v1883
        %v1888 = vpack.c.b16 %v1886, %v1885
        %v1892 = vsel %vm1069, %v1280, 0
        %1894 = vmatprep.subr.bf16.mxu0 0
        %1895 = vmatpush1.bf16.msra.mxu0 0
        %1896 = vmatprep.subr.bf16.mxu0 0
        %1897 = vmatpush1.bf16.msra.mxu0 0
        %1898 = vmatprep.subr.bf16.mxu0 0
        %1899 = vmatpush1.bf16.msra.mxu0 0
        %1900 = vmatprep.subr.bf16.mxu0 0
        %1901 = vmatpush1.bf16.msra.mxu0 0
        %1902 = vmatprep.subr.bf16.mxu0 0
        %1903 = vmatpush1.bf16.msra.mxu0 0
        %1904 = vmatprep.subr.bf16.mxu0 0
        %1905 = vmatpush1.bf16.msra.mxu0 0
        %1906 = vmatprep.subr.bf16.mxu0 0
        %1907 = vmatpush1.bf16.msra.mxu0 %v1888
        %1908 = vmatprep.subr.bf16.mxu0 0
        %1909 = vmatpush1.bf16.msra.mxu0 %v1887
        %1910 = vmatprep.subr.bf16.mxu0 0
        %1911 = vmatpush2.bf16.msra.mxu0 0
        %1912 = vmatprep.subr.bf16.mxu0 0
        %1913 = vmatpush2.bf16.msra.mxu0 0
        %1914 = vmatprep.subr.bf16.mxu0 0
        %1915 = vmatpush2.bf16.msra.mxu0 0
        %1916 = vmatprep.subr.bf16.mxu0 0
        %1917 = vmatpush2.bf16.msra.mxu0 0
        %1918 = vmatprep.subr.bf16.mxu0 0
        %1919 = vmatpush2.bf16.msra.mxu0 0
        %1920 = vmatprep.subr.bf16.mxu0 0
        %1921 = vmatpush2.bf16.msra.mxu0 0
        %1922 = vmatprep.subr.bf16.mxu0 0
        %1923 = vmatpush2.bf16.msra.mxu0 0
        %1924 = vmatprep.subr.bf16.mxu0 0
        %1925 = vmatpush2.bf16.msra.mxu0 0
        %1926 = vmatprep.mubr.bf16.mxu0 0
        %1927 = vmatmul.mubr.bf16.gmra.mxu0 %v1892
        %v1928 = vpop.f32.mrf.mxu0
        %v1929 = vadd.f32 %v1873, %v1928
        %v1930 = vpop.f32.mrf.mxu0
        %v1931 = vpop.f32.mrf.mxu0
        %v1932 = vadd.f32 %v1876, %v1931
        %v1933 = vpop.f32.mrf.mxu0
        %1934 = vdwg.mxu0
        %s1935 = scalar_lea.vmem %s652, 128
        %v1936 = vld [vmem:[%s1935] sm:$0xf]
        %v1937 = vld [vmem:[%s1935 + $0x4] sm:$0xf]
        %v1938 = vld [vmem:[%s1935 + $0x8] sm:$0xf]
        %v1939 = vld [vmem:[%s1935 + $0xc] sm:$0xf]
        %v1940 = vld [vmem:[%s1935 + $0x10] sm:$0xf]
        %v1941 = vld [vmem:[%s1935 + $0x14] sm:$0xf]
        %v1942 = vld [vmem:[%s1935 + $0x18] sm:$0xf]
        %v1943 = vld [vmem:[%s1935 + $0x1c] sm:$0xf]
        %v1944 = vld [vmem:[%s1935 + $0x20] sm:$0xf]
        %v1945 = vld [vmem:[%s1935 + $0x24] sm:$0xf]
        %v1946 = vld [vmem:[%s1935 + $0x28] sm:$0xf]
        %v1947 = vld [vmem:[%s1935 + $0x2c] sm:$0xf]
        %v1948 = vld [vmem:[%s1935 + $0x30] sm:$0xf]
        %v1949 = vld [vmem:[%s1935 + $0x34] sm:$0xf]
        %v1950 = vld [vmem:[%s1935 + $0x38] sm:$0xf]
        %v1951 = vld [vmem:[%s1935 + $0x3c] sm:$0xf]
        %v1968 = vunpack.c.l.b16 %v1936
        %v1969 = vunpack.c.l.b16 %v1937
        %v1970 = vunpack.c.l.b16 %v1938
        %v1971 = vunpack.c.l.b16 %v1939
        %v1972 = vunpack.c.l.b16 %v1940
        %v1973 = vunpack.c.l.b16 %v1941
        %v1974 = vunpack.c.l.b16 %v1942
        %v1975 = vunpack.c.l.b16 %v1943
        %v1976 = vunpack.c.l.b16 %v1944
        %v1977 = vunpack.c.l.b16 %v1945
        %v1978 = vunpack.c.l.b16 %v1946
        %v1979 = vunpack.c.l.b16 %v1947
        %v1980 = vunpack.c.l.b16 %v1948
        %v1981 = vunpack.c.l.b16 %v1949
        %v1982 = vunpack.c.l.b16 %v1950
        %v1983 = vunpack.c.l.b16 %v1951
        %v1984 = vpack.c.b16 %v1969, %v1968
        %v1985 = vpack.c.b16 %v1971, %v1970
        %v1986 = vpack.c.b16 %v1973, %v1972
        %v1987 = vpack.c.b16 %v1975, %v1974
        %v1988 = vpack.c.b16 %v1977, %v1976
        %v1989 = vpack.c.b16 %v1979, %v1978
        %v1990 = vpack.c.b16 %v1981, %v1980
        %v1991 = vpack.c.b16 %v1983, %v1982
        %2000 = vmatprep.subr.bf16.mxu0 0
        %2001 = vmatpush1.bf16.msra.mxu0 %v1991
        %2002 = vmatprep.subr.bf16.mxu0 0
        %2003 = vmatpush1.bf16.msra.mxu0 %v1990
        %2004 = vmatprep.subr.bf16.mxu0 0
        %2005 = vmatpush1.bf16.msra.mxu0 %v1989
        %2006 = vmatprep.subr.bf16.mxu0 0
        %2007 = vmatpush1.bf16.msra.mxu0 %v1988
        %2008 = vmatprep.subr.bf16.mxu0 0
        %2009 = vmatpush1.bf16.msra.mxu0 %v1987
        %2010 = vmatprep.subr.bf16.mxu0 0
        %2011 = vmatpush1.bf16.msra.mxu0 %v1986
        %2012 = vmatprep.subr.bf16.mxu0 0
        %2013 = vmatpush1.bf16.msra.mxu0 %v1985
        %2014 = vmatprep.subr.bf16.mxu0 0
        %2015 = vmatpush1.bf16.msra.mxu0 %v1984
        %2016 = vmatprep.subr.bf16.mxu0 0
        %2017 = vmatpush2.bf16.msra.mxu0 0
        %2018 = vmatprep.subr.bf16.mxu0 0
        %2019 = vmatpush2.bf16.msra.mxu0 0
        %2020 = vmatprep.subr.bf16.mxu0 0
        %2021 = vmatpush2.bf16.msra.mxu0 0
        %2022 = vmatprep.subr.bf16.mxu0 0
        %2023 = vmatpush2.bf16.msra.mxu0 0
        %2024 = vmatprep.subr.bf16.mxu0 0
        %2025 = vmatpush2.bf16.msra.mxu0 0
        %2026 = vmatprep.subr.bf16.mxu0 0
        %2027 = vmatpush2.bf16.msra.mxu0 0
        %2028 = vmatprep.subr.bf16.mxu0 0
        %2029 = vmatpush2.bf16.msra.mxu0 0
        %2030 = vmatprep.subr.bf16.mxu0 0
        %2031 = vmatpush2.bf16.msra.mxu0 0
        %2032 = vmatprep.mubr.bf16.mxu0 0
        %2033 = vmatmul.mubr.bf16.gmra.mxu0 %v747
        %v2034 = vpop.f32.mrf.mxu0
        %v2035 = vadd.f32 0.0, %v2034
        %v2036 = vpop.f32.mrf.mxu0
        %v2037 = vpop.f32.mrf.mxu0
        %v2038 = vadd.f32 0.0, %v2037
        %v2039 = vpop.f32.mrf.mxu0
        %2040 = vdwg.mxu0
        %s2041 = scalar_lea.vmem %s657, 128
        %v2042 = vld [vmem:[%s2041] sm:$0xf]
        %v2043 = vld [vmem:[%s2041 + $0x4] sm:$0xf]
        %v2044 = vld [vmem:[%s2041 + $0x8] sm:$0xf]
        %v2045 = vld [vmem:[%s2041 + $0xc] sm:$0xf]
        %v2046 = vld [vmem:[%s2041 + $0x10] sm:$0xf]
        %v2047 = vld [vmem:[%s2041 + $0x14] sm:$0xf]
        %v2048 = vld [vmem:[%s2041 + $0x18] sm:$0xf]
        %v2049 = vld [vmem:[%s2041 + $0x1c] sm:$0xf]
        %v2050 = vld [vmem:[%s2041 + $0x20] sm:$0xf]
        %v2051 = vld [vmem:[%s2041 + $0x24] sm:$0xf]
        %v2052 = vld [vmem:[%s2041 + $0x28] sm:$0xf]
        %v2053 = vld [vmem:[%s2041 + $0x2c] sm:$0xf]
        %v2054 = vld [vmem:[%s2041 + $0x30] sm:$0xf]
        %v2055 = vld [vmem:[%s2041 + $0x34] sm:$0xf]
        %v2056 = vld [vmem:[%s2041 + $0x38] sm:$0xf]
        %v2057 = vld [vmem:[%s2041 + $0x3c] sm:$0xf]
        %v2074 = vunpack.c.l.b16 %v2042
        %v2075 = vunpack.c.l.b16 %v2043
        %v2076 = vunpack.c.l.b16 %v2044
        %v2077 = vunpack.c.l.b16 %v2045
        %v2078 = vunpack.c.l.b16 %v2046
        %v2079 = vunpack.c.l.b16 %v2047
        %v2080 = vunpack.c.l.b16 %v2048
        %v2081 = vunpack.c.l.b16 %v2049
        %v2082 = vunpack.c.l.b16 %v2050
        %v2083 = vunpack.c.l.b16 %v2051
        %v2084 = vunpack.c.l.b16 %v2052
        %v2085 = vunpack.c.l.b16 %v2053
        %v2086 = vunpack.c.l.b16 %v2054
        %v2087 = vunpack.c.l.b16 %v2055
        %v2088 = vunpack.c.l.b16 %v2056
        %v2089 = vunpack.c.l.b16 %v2057
        %v2090 = vpack.c.b16 %v2075, %v2074
        %v2091 = vpack.c.b16 %v2077, %v2076
        %v2092 = vpack.c.b16 %v2079, %v2078
        %v2093 = vpack.c.b16 %v2081, %v2080
        %v2094 = vpack.c.b16 %v2083, %v2082
        %v2095 = vpack.c.b16 %v2085, %v2084
        %v2096 = vpack.c.b16 %v2087, %v2086
        %v2097 = vpack.c.b16 %v2089, %v2088
        %2106 = vmatprep.subr.bf16.mxu0 0
        %2107 = vmatpush1.bf16.msra.mxu0 %v2097
        %2108 = vmatprep.subr.bf16.mxu0 0
        %2109 = vmatpush1.bf16.msra.mxu0 %v2096
        %2110 = vmatprep.subr.bf16.mxu0 0
        %2111 = vmatpush1.bf16.msra.mxu0 %v2095
        %2112 = vmatprep.subr.bf16.mxu0 0
        %2113 = vmatpush1.bf16.msra.mxu0 %v2094
        %2114 = vmatprep.subr.bf16.mxu0 0
        %2115 = vmatpush1.bf16.msra.mxu0 %v2093
        %2116 = vmatprep.subr.bf16.mxu0 0
        %2117 = vmatpush1.bf16.msra.mxu0 %v2092
        %2118 = vmatprep.subr.bf16.mxu0 0
        %2119 = vmatpush1.bf16.msra.mxu0 %v2091
        %2120 = vmatprep.subr.bf16.mxu0 0
        %2121 = vmatpush1.bf16.msra.mxu0 %v2090
        %2122 = vmatprep.subr.bf16.mxu0 0
        %2123 = vmatpush2.bf16.msra.mxu0 0
        %2124 = vmatprep.subr.bf16.mxu0 0
        %2125 = vmatpush2.bf16.msra.mxu0 0
        %2126 = vmatprep.subr.bf16.mxu0 0
        %2127 = vmatpush2.bf16.msra.mxu0 0
        %2128 = vmatprep.subr.bf16.mxu0 0
        %2129 = vmatpush2.bf16.msra.mxu0 0
        %2130 = vmatprep.subr.bf16.mxu0 0
        %2131 = vmatpush2.bf16.msra.mxu0 0
        %2132 = vmatprep.subr.bf16.mxu0 0
        %2133 = vmatpush2.bf16.msra.mxu0 0
        %2134 = vmatprep.subr.bf16.mxu0 0
        %2135 = vmatpush2.bf16.msra.mxu0 0
        %2136 = vmatprep.subr.bf16.mxu0 0
        %2137 = vmatpush2.bf16.msra.mxu0 0
        %2138 = vmatprep.mubr.bf16.mxu0 0
        %2139 = vmatmul.mubr.bf16.gmra.mxu0 %v747
        %v2140 = vpop.f32.mrf.mxu0
        %v2141 = vadd.f32 0.0, %v2140
        %v2142 = vpop.f32.mrf.mxu0
        %v2143 = vpop.f32.mrf.mxu0
        %v2144 = vadd.f32 0.0, %v2143
        %v2145 = vpop.f32.mrf.mxu0
        %2146 = vdwg.mxu0
        %s2147 = scalar_lea.vmem %s662, 128
        %v2148 = vld [vmem:[%s2147] sm:$0xf]
        %v2149 = vld [vmem:[%s2147 + $0x4] sm:$0xf]
        %v2150 = vld [vmem:[%s2147 + $0x8] sm:$0xf]
        %v2151 = vld [vmem:[%s2147 + $0xc] sm:$0xf]
        %v2152 = vld [vmem:[%s2147 + $0x10] sm:$0xf]
        %v2153 = vld [vmem:[%s2147 + $0x14] sm:$0xf]
        %v2154 = vld [vmem:[%s2147 + $0x18] sm:$0xf]
        %v2155 = vld [vmem:[%s2147 + $0x1c] sm:$0xf]
        %v2156 = vld [vmem:[%s2147 + $0x20] sm:$0xf]
        %v2157 = vld [vmem:[%s2147 + $0x24] sm:$0xf]
        %v2158 = vld [vmem:[%s2147 + $0x28] sm:$0xf]
        %v2159 = vld [vmem:[%s2147 + $0x2c] sm:$0xf]
        %v2160 = vld [vmem:[%s2147 + $0x30] sm:$0xf]
        %v2161 = vld [vmem:[%s2147 + $0x34] sm:$0xf]
        %v2162 = vld [vmem:[%s2147 + $0x38] sm:$0xf]
        %v2163 = vld [vmem:[%s2147 + $0x3c] sm:$0xf]
        %v2180 = vunpack.c.l.b16 %v2148
        %v2181 = vunpack.c.l.b16 %v2149
        %v2182 = vunpack.c.l.b16 %v2150
        %v2183 = vunpack.c.l.b16 %v2151
        %v2184 = vunpack.c.l.b16 %v2152
        %v2185 = vunpack.c.l.b16 %v2153
        %v2186 = vunpack.c.l.b16 %v2154
        %v2187 = vunpack.c.l.b16 %v2155
        %v2188 = vunpack.c.l.b16 %v2156
        %v2189 = vunpack.c.l.b16 %v2157
        %v2190 = vunpack.c.l.b16 %v2158
        %v2191 = vunpack.c.l.b16 %v2159
        %v2192 = vunpack.c.l.b16 %v2160
        %v2193 = vunpack.c.l.b16 %v2161
        %v2194 = vunpack.c.l.b16 %v2162
        %v2195 = vunpack.c.l.b16 %v2163
        %v2196 = vpack.c.b16 %v2181, %v2180
        %v2197 = vpack.c.b16 %v2183, %v2182
        %v2198 = vpack.c.b16 %v2185, %v2184
        %v2199 = vpack.c.b16 %v2187, %v2186
        %v2200 = vpack.c.b16 %v2189, %v2188
        %v2201 = vpack.c.b16 %v2191, %v2190
        %v2202 = vpack.c.b16 %v2193, %v2192
        %v2203 = vpack.c.b16 %v2195, %v2194
        %2212 = vmatprep.subr.bf16.mxu0 0
        %2213 = vmatpush1.bf16.msra.mxu0 %v2203
        %2214 = vmatprep.subr.bf16.mxu0 0
        %2215 = vmatpush1.bf16.msra.mxu0 %v2202
        %2216 = vmatprep.subr.bf16.mxu0 0
        %2217 = vmatpush1.bf16.msra.mxu0 %v2201
        %2218 = vmatprep.subr.bf16.mxu0 0
        %2219 = vmatpush1.bf16.msra.mxu0 %v2200
        %2220 = vmatprep.subr.bf16.mxu0 0
        %2221 = vmatpush1.bf16.msra.mxu0 %v2199
        %2222 = vmatprep.subr.bf16.mxu0 0
        %2223 = vmatpush1.bf16.msra.mxu0 %v2198
        %2224 = vmatprep.subr.bf16.mxu0 0
        %2225 = vmatpush1.bf16.msra.mxu0 %v2197
        %2226 = vmatprep.subr.bf16.mxu0 0
        %2227 = vmatpush1.bf16.msra.mxu0 %v2196
        %2228 = vmatprep.subr.bf16.mxu0 0
        %2229 = vmatpush2.bf16.msra.mxu0 0
        %2230 = vmatprep.subr.bf16.mxu0 0
        %2231 = vmatpush2.bf16.msra.mxu0 0
        %2232 = vmatprep.subr.bf16.mxu0 0
        %2233 = vmatpush2.bf16.msra.mxu0 0
        %2234 = vmatprep.subr.bf16.mxu0 0
        %2235 = vmatpush2.bf16.msra.mxu0 0
        %2236 = vmatprep.subr.bf16.mxu0 0
        %2237 = vmatpush2.bf16.msra.mxu0 0
        %2238 = vmatprep.subr.bf16.mxu0 0
        %2239 = vmatpush2.bf16.msra.mxu0 0
        %2240 = vmatprep.subr.bf16.mxu0 0
        %2241 = vmatpush2.bf16.msra.mxu0 0
        %2242 = vmatprep.subr.bf16.mxu0 0
        %2243 = vmatpush2.bf16.msra.mxu0 0
        %2244 = vmatprep.mubr.bf16.mxu0 0
        %2245 = vmatmul.mubr.bf16.gmra.mxu0 %v747
        %v2246 = vpop.f32.mrf.mxu0
        %v2247 = vadd.f32 0.0, %v2246
        %v2248 = vpop.f32.mrf.mxu0
        %v2249 = vpop.f32.mrf.mxu0
        %v2250 = vadd.f32 0.0, %v2249
        %v2251 = vpop.f32.mrf.mxu0
        %2252 = vdwg.mxu0
        %v2253 = vpack.c.bf16 %v2035, %v2035
        %v2254 = vpack.c.bf16 %v2038, %v2038
        %v2255 = vpack.c.bf16 %v2141, %v2141
        %v2256 = vpack.c.bf16 %v2144, %v2144
        %v2257 = vpack.c.bf16 %v2247, %v2247
        %v2258 = vpack.c.bf16 %v2250, %v2250
        %v2260 = vsel %vm1069, %v2253, 0
        %v2263 = vsel %vm1069, %v2255, 0
        %2265 = vmatprep.subr.bf16.mxu0 0
        %2266 = vmatpush1.bf16.xpose.msra.mxu0 0
        %2267 = vmatprep.subr.bf16.mxu0 0
        %2268 = vmatpush1.bf16.xpose.msra.mxu0 0
        %2269 = vmatprep.subr.bf16.mxu0 0
        %2270 = vmatpush1.bf16.xpose.msra.mxu0 0
        %2271 = vmatprep.subr.bf16.mxu0 0
        %2272 = vmatpush1.bf16.xpose.msra.mxu0 0
        %2273 = vmatprep.subr.bf16.mxu0 0
        %2274 = vmatpush1.bf16.xpose.msra.mxu0 0
        %2275 = vmatprep.subr.bf16.mxu0 0
        %2276 = vmatpush1.bf16.xpose.msra.mxu0 0
        %2277 = vmatprep.subr.bf16.mxu0 0
        %2278 = vmatpush1.bf16.xpose.msra.mxu0 0
        %2279 = vmatprep.subr.bf16.mxu0 0
        %2280 = vmatpush1.bf16.xpose.msra.mxu0 %v2263
        %2281 = vmatprep.subr.bf16.mxu0 0
        %2282 = vmatpush2.bf16.xpose.msra.mxu0 0
        %2283 = vmatprep.subr.bf16.mxu0 0
        %2284 = vmatpush2.bf16.xpose.msra.mxu0 0
        %2285 = vmatprep.subr.bf16.mxu0 0
        %2286 = vmatpush2.bf16.xpose.msra.mxu0 0
        %2287 = vmatprep.subr.bf16.mxu0 0
        %2288 = vmatpush2.bf16.xpose.msra.mxu0 0
        %2289 = vmatprep.subr.bf16.mxu0 0
        %2290 = vmatpush2.bf16.xpose.msra.mxu0 0
        %2291 = vmatprep.subr.bf16.mxu0 0
        %2292 = vmatpush2.bf16.xpose.msra.mxu0 0
        %2293 = vmatprep.subr.bf16.mxu0 0
        %2294 = vmatpush2.bf16.xpose.msra.mxu0 0
        %2295 = vmatprep.subr.bf16.mxu0 0
        %2296 = vmatpush2.bf16.xpose.msra.mxu0 0
        %2297 = vmatprep.mubr.bf16.mxu0 0
        %2298 = vmatmul.mubr.bf16.gmra.mxu0 %v2260
        %v2299 = vpop.f32.mrf.mxu0
        %v2300 = vadd.f32 0.0, %v2299
        %v2301 = vpop.f32.mrf.mxu0
        %v2302 = vpop.f32.mrf.mxu0
        %v2303 = vpop.f32.mrf.mxu0
        %2304 = vdwg.mxu0
        %v2306 = vsel %vm1069, %v2254, 0
        %v2309 = vsel %vm1069, %v2256, 0
        %2311 = vmatprep.subr.bf16.mxu0 0
        %2312 = vmatpush1.bf16.xpose.msra.mxu0 0
        %2313 = vmatprep.subr.bf16.mxu0 0
        %2314 = vmatpush1.bf16.xpose.msra.mxu0 0
        %2315 = vmatprep.subr.bf16.mxu0 0
        %2316 = vmatpush1.bf16.xpose.msra.mxu0 0
        %2317 = vmatprep.subr.bf16.mxu0 0
        %2318 = vmatpush1.bf16.xpose.msra.mxu0 0
        %2319 = vmatprep.subr.bf16.mxu0 0
        %2320 = vmatpush1.bf16.xpose.msra.mxu0 0
        %2321 = vmatprep.subr.bf16.mxu0 0
        %2322 = vmatpush1.bf16.xpose.msra.mxu0 0
        %2323 = vmatprep.subr.bf16.mxu0 0
        %2324 = vmatpush1.bf16.xpose.msra.mxu0 0
        %2325 = vmatprep.subr.bf16.mxu0 0
        %2326 = vmatpush1.bf16.xpose.msra.mxu0 %v2309
        %2327 = vmatprep.subr.bf16.mxu0 0
        %2328 = vmatpush2.bf16.xpose.msra.mxu0 0
        %2329 = vmatprep.subr.bf16.mxu0 0
        %2330 = vmatpush2.bf16.xpose.msra.mxu0 0
        %2331 = vmatprep.subr.bf16.mxu0 0
        %2332 = vmatpush2.bf16.xpose.msra.mxu0 0
        %2333 = vmatprep.subr.bf16.mxu0 0
        %2334 = vmatpush2.bf16.xpose.msra.mxu0 0
        %2335 = vmatprep.subr.bf16.mxu0 0
        %2336 = vmatpush2.bf16.xpose.msra.mxu0 0
        %2337 = vmatprep.subr.bf16.mxu0 0
        %2338 = vmatpush2.bf16.xpose.msra.mxu0 0
        %2339 = vmatprep.subr.bf16.mxu0 0
        %2340 = vmatpush2.bf16.xpose.msra.mxu0 0
        %2341 = vmatprep.subr.bf16.mxu0 0
        %2342 = vmatpush2.bf16.xpose.msra.mxu0 0
        %2343 = vmatprep.mubr.bf16.mxu0 0
        %2344 = vmatmul.mubr.bf16.gmra.mxu0 %v2306
        %v2345 = vpop.f32.mrf.mxu0
        %v2346 = vadd.f32 0.0, %v2345
        %v2347 = vpop.f32.mrf.mxu0
        %v2348 = vpop.f32.mrf.mxu0
        %v2349 = vpop.f32.mrf.mxu0
        %2350 = vdwg.mxu0
        %v2351 = vsel %vm1162, %v2300, -inf
        %2352 = vmax.xlane.f32.xlu0 %v2351
        %v2353 = vpop.xlane.xlu0 %2352
        %v2354 = vsel %vm1162, %v2346, -inf
        %2355 = vmax.xlane.f32.xlu0 %v2354
        %v2356 = vpop.xlane.xlu0 %2355
        %v2357 = vsub.f32 %v2300, %v2353
        %v2358 = vsub.f32 %v2346, %v2356
        %v2359 = vmul.f32 %v2357, 1.442695
        %v2360 = vpow.pop %v2359
        %v2361 = vmul.f32 %v2358, 1.442695
        %v2362 = vpow.pop %v2361
        %v2363 = vsel %vm1162, %v2360, 0.0
        %2364 = vadd.xlane.f32.xlu0 %v2363
        %v2365 = vpop.xlane.xlu0 %2364
        %v2366 = vsel %vm1162, %v2362, 0.0
        %2367 = vadd.xlane.f32.xlu0 %v2366
        %v2368 = vpop.xlane.xlu0 %2367
        %v2369 = vrcp.pop %v2365
        %v2370 = vrcp.pop %v2368
        %v2371 = vmul.f32 %v2360, %v2369
        %v2372 = vmul.f32 %v2362, %v2370
        %v2373 = vpack.c.bf16 %v2371, %v2371
        %v2374 = vpack.c.bf16 %v2372, %v2372
        %v2376 = vsel %vm1162, %v2373, 0
        %v2379 = vsel %vm1190, %v2257, 0
        %2381 = vmatprep.subr.bf16.mxu0 0
        %2382 = vmatpush1.bf16.msra.mxu0 0
        %2383 = vmatprep.subr.bf16.mxu0 0
        %2384 = vmatpush1.bf16.msra.mxu0 0
        %2385 = vmatprep.subr.bf16.mxu0 0
        %2386 = vmatpush1.bf16.msra.mxu0 0
        %2387 = vmatprep.subr.bf16.mxu0 0
        %2388 = vmatpush1.bf16.msra.mxu0 0
        %2389 = vmatprep.subr.bf16.mxu0 0
        %2390 = vmatpush1.bf16.msra.mxu0 0
        %2391 = vmatprep.subr.bf16.mxu0 0
        %2392 = vmatpush1.bf16.msra.mxu0 0
        %2393 = vmatprep.subr.bf16.mxu0 0
        %2394 = vmatpush1.bf16.msra.mxu0 0
        %2395 = vmatprep.subr.bf16.mxu0 0
        %2396 = vmatpush1.bf16.msra.mxu0 %v2379
        %2397 = vmatprep.subr.bf16.mxu0 0
        %2398 = vmatpush2.bf16.msra.mxu0 0
        %2399 = vmatprep.subr.bf16.mxu0 0
        %2400 = vmatpush2.bf16.msra.mxu0 0
        %2401 = vmatprep.subr.bf16.mxu0 0
        %2402 = vmatpush2.bf16.msra.mxu0 0
        %2403 = vmatprep.subr.bf16.mxu0 0
        %2404 = vmatpush2.bf16.msra.mxu0 0
        %2405 = vmatprep.subr.bf16.mxu0 0
        %2406 = vmatpush2.bf16.msra.mxu0 0
        %2407 = vmatprep.subr.bf16.mxu0 0
        %2408 = vmatpush2.bf16.msra.mxu0 0
        %2409 = vmatprep.subr.bf16.mxu0 0
        %2410 = vmatpush2.bf16.msra.mxu0 0
        %2411 = vmatprep.subr.bf16.mxu0 0
        %2412 = vmatpush2.bf16.msra.mxu0 0
        %2413 = vmatprep.mubr.bf16.mxu0 0
        %2414 = vmatmul.mubr.bf16.gmra.mxu0 %v2376
        %v2415 = vpop.f32.mrf.mxu0
        %v2416 = vadd.f32 0.0, %v2415
        %v2417 = vpop.f32.mrf.mxu0
        %v2418 = vpop.f32.mrf.mxu0
        %v2419 = vpop.f32.mrf.mxu0
        %2420 = vdwg.mxu0
        %v2422 = vsel %vm1162, %v2374, 0
        %v2425 = vsel %vm1190, %v2258, 0
        %2427 = vmatprep.subr.bf16.mxu0 0
        %2428 = vmatpush1.bf16.msra.mxu0 0
        %2429 = vmatprep.subr.bf16.mxu0 0
        %2430 = vmatpush1.bf16.msra.mxu0 0
        %2431 = vmatprep.subr.bf16.mxu0 0
        %2432 = vmatpush1.bf16.msra.mxu0 0
        %2433 = vmatprep.subr.bf16.mxu0 0
        %2434 = vmatpush1.bf16.msra.mxu0 0
        %2435 = vmatprep.subr.bf16.mxu0 0
        %2436 = vmatpush1.bf16.msra.mxu0 0
        %2437 = vmatprep.subr.bf16.mxu0 0
        %2438 = vmatpush1.bf16.msra.mxu0 0
        %2439 = vmatprep.subr.bf16.mxu0 0
        %2440 = vmatpush1.bf16.msra.mxu0 0
        %2441 = vmatprep.subr.bf16.mxu0 0
        %2442 = vmatpush1.bf16.msra.mxu0 %v2425
        %2443 = vmatprep.subr.bf16.mxu0 0
        %2444 = vmatpush2.bf16.msra.mxu0 0
        %2445 = vmatprep.subr.bf16.mxu0 0
        %2446 = vmatpush2.bf16.msra.mxu0 0
        %2447 = vmatprep.subr.bf16.mxu0 0
        %2448 = vmatpush2.bf16.msra.mxu0 0
        %2449 = vmatprep.subr.bf16.mxu0 0
        %2450 = vmatpush2.bf16.msra.mxu0 0
        %2451 = vmatprep.subr.bf16.mxu0 0
        %2452 = vmatpush2.bf16.msra.mxu0 0
        %2453 = vmatprep.subr.bf16.mxu0 0
        %2454 = vmatpush2.bf16.msra.mxu0 0
        %2455 = vmatprep.subr.bf16.mxu0 0
        %2456 = vmatpush2.bf16.msra.mxu0 0
        %2457 = vmatprep.subr.bf16.mxu0 0
        %2458 = vmatpush2.bf16.msra.mxu0 0
        %2459 = vmatprep.mubr.bf16.mxu0 0
        %2460 = vmatmul.mubr.bf16.gmra.mxu0 %v2422
        %v2461 = vpop.f32.mrf.mxu0
        %v2462 = vadd.f32 0.0, %v2461
        %v2463 = vpop.f32.mrf.mxu0
        %v2464 = vpop.f32.mrf.mxu0
        %v2465 = vpop.f32.mrf.mxu0
        %2466 = vdwg.mxu0
        %v2467 = vpack.c.bf16 %v2462, %v2416
        %s2468 = scalar_lea.vmem %s667, 32
        %v2469 = vld [vmem:[%s2468] sm:$0xf]
        %v2470 = vld [vmem:[%s2468 + $0x4] sm:$0xf]
        %v2471 = vld [vmem:[%s2468 + $0x8] sm:$0xf]
        %v2472 = vld [vmem:[%s2468 + $0xc] sm:$0xf]
        %v2477 = vunpack.c.l.b16 %v2469
        %v2478 = vunpack.c.l.b16 %v2470
        %v2479 = vunpack.c.l.b16 %v2471
        %v2480 = vunpack.c.l.b16 %v2472
        %v2481 = vpack.c.b16 %v2478, %v2477
        %v2482 = vpack.c.b16 %v2480, %v2479
        %v2486 = vsel %vm1069, %v2467, 0
        %2488 = vmatprep.subr.bf16.mxu0 0
        %2489 = vmatpush1.bf16.msra.mxu0 0
        %2490 = vmatprep.subr.bf16.mxu0 0
        %2491 = vmatpush1.bf16.msra.mxu0 0
        %2492 = vmatprep.subr.bf16.mxu0 0
        %2493 = vmatpush1.bf16.msra.mxu0 0
        %2494 = vmatprep.subr.bf16.mxu0 0
        %2495 = vmatpush1.bf16.msra.mxu0 0
        %2496 = vmatprep.subr.bf16.mxu0 0
        %2497 = vmatpush1.bf16.msra.mxu0 0
        %2498 = vmatprep.subr.bf16.mxu0 0
        %2499 = vmatpush1.bf16.msra.mxu0 0
        %2500 = vmatprep.subr.bf16.mxu0 0
        %2501 = vmatpush1.bf16.msra.mxu0 %v2482
        %2502 = vmatprep.subr.bf16.mxu0 0
        %2503 = vmatpush1.bf16.msra.mxu0 %v2481
        %2504 = vmatprep.subr.bf16.mxu0 0
        %2505 = vmatpush2.bf16.msra.mxu0 0
        %2506 = vmatprep.subr.bf16.mxu0 0
        %2507 = vmatpush2.bf16.msra.mxu0 0
        %2508 = vmatprep.subr.bf16.mxu0 0
        %2509 = vmatpush2.bf16.msra.mxu0 0
        %2510 = vmatprep.subr.bf16.mxu0 0
        %2511 = vmatpush2.bf16.msra.mxu0 0
        %2512 = vmatprep.subr.bf16.mxu0 0
        %2513 = vmatpush2.bf16.msra.mxu0 0
        %2514 = vmatprep.subr.bf16.mxu0 0
        %2515 = vmatpush2.bf16.msra.mxu0 0
        %2516 = vmatprep.subr.bf16.mxu0 0
        %2517 = vmatpush2.bf16.msra.mxu0 0
        %2518 = vmatprep.subr.bf16.mxu0 0
        %2519 = vmatpush2.bf16.msra.mxu0 0
        %2520 = vmatprep.mubr.bf16.mxu0 0
        %2521 = vmatmul.mubr.bf16.gmra.mxu0 %v2486
        %v2522 = vpop.f32.mrf.mxu0
        %v2523 = vadd.f32 0.0, %v2522
        %v2524 = vpop.f32.mrf.mxu0
        %v2525 = vpop.f32.mrf.mxu0
        %v2526 = vadd.f32 0.0, %v2525
        %v2527 = vpop.f32.mrf.mxu0
        %2528 = vdwg.mxu0
        %v2529 = vadd.f32 %v1929, %v2523
        %v2530 = vadd.f32 %v1932, %v2526
        %s2531 = scalar_lea.vmem %s652, 192
        %v2532 = vld [vmem:[%s2531] sm:$0xf]
        %v2533 = vld [vmem:[%s2531 + $0x4] sm:$0xf]
        %v2534 = vld [vmem:[%s2531 + $0x8] sm:$0xf]
        %v2535 = vld [vmem:[%s2531 + $0xc] sm:$0xf]
        %v2536 = vld [vmem:[%s2531 + $0x10] sm:$0xf]
        %v2537 = vld [vmem:[%s2531 + $0x14] sm:$0xf]
        %v2538 = vld [vmem:[%s2531 + $0x18] sm:$0xf]
        %v2539 = vld [vmem:[%s2531 + $0x1c] sm:$0xf]
        %v2540 = vld [vmem:[%s2531 + $0x20] sm:$0xf]
        %v2541 = vld [vmem:[%s2531 + $0x24] sm:$0xf]
        %v2542 = vld [vmem:[%s2531 + $0x28] sm:$0xf]
        %v2543 = vld [vmem:[%s2531 + $0x2c] sm:$0xf]
        %v2544 = vld [vmem:[%s2531 + $0x30] sm:$0xf]
        %v2545 = vld [vmem:[%s2531 + $0x34] sm:$0xf]
        %v2546 = vld [vmem:[%s2531 + $0x38] sm:$0xf]
        %v2547 = vld [vmem:[%s2531 + $0x3c] sm:$0xf]
        %v2564 = vunpack.c.l.b16 %v2532
        %v2565 = vunpack.c.l.b16 %v2533
        %v2566 = vunpack.c.l.b16 %v2534
        %v2567 = vunpack.c.l.b16 %v2535
        %v2568 = vunpack.c.l.b16 %v2536
        %v2569 = vunpack.c.l.b16 %v2537
        %v2570 = vunpack.c.l.b16 %v2538
        %v2571 = vunpack.c.l.b16 %v2539
        %v2572 = vunpack.c.l.b16 %v2540
        %v2573 = vunpack.c.l.b16 %v2541
        %v2574 = vunpack.c.l.b16 %v2542
        %v2575 = vunpack.c.l.b16 %v2543
        %v2576 = vunpack.c.l.b16 %v2544
        %v2577 = vunpack.c.l.b16 %v2545
        %v2578 = vunpack.c.l.b16 %v2546
        %v2579 = vunpack.c.l.b16 %v2547
        %v2580 = vpack.c.b16 %v2565, %v2564
        %v2581 = vpack.c.b16 %v2567, %v2566
        %v2582 = vpack.c.b16 %v2569, %v2568
        %v2583 = vpack.c.b16 %v2571, %v2570
        %v2584 = vpack.c.b16 %v2573, %v2572
        %v2585 = vpack.c.b16 %v2575, %v2574
        %v2586 = vpack.c.b16 %v2577, %v2576
        %v2587 = vpack.c.b16 %v2579, %v2578
        %2596 = vmatprep.subr.bf16.mxu0 0
        %2597 = vmatpush1.bf16.msra.mxu0 %v2587
        %2598 = vmatprep.subr.bf16.mxu0 0
        %2599 = vmatpush1.bf16.msra.mxu0 %v2586
        %2600 = vmatprep.subr.bf16.mxu0 0
        %2601 = vmatpush1.bf16.msra.mxu0 %v2585
        %2602 = vmatprep.subr.bf16.mxu0 0
        %2603 = vmatpush1.bf16.msra.mxu0 %v2584
        %2604 = vmatprep.subr.bf16.mxu0 0
        %2605 = vmatpush1.bf16.msra.mxu0 %v2583
        %2606 = vmatprep.subr.bf16.mxu0 0
        %2607 = vmatpush1.bf16.msra.mxu0 %v2582
        %2608 = vmatprep.subr.bf16.mxu0 0
        %2609 = vmatpush1.bf16.msra.mxu0 %v2581
        %2610 = vmatprep.subr.bf16.mxu0 0
        %2611 = vmatpush1.bf16.msra.mxu0 %v2580
        %2612 = vmatprep.subr.bf16.mxu0 0
        %2613 = vmatpush2.bf16.msra.mxu0 0
        %2614 = vmatprep.subr.bf16.mxu0 0
        %2615 = vmatpush2.bf16.msra.mxu0 0
        %2616 = vmatprep.subr.bf16.mxu0 0
        %2617 = vmatpush2.bf16.msra.mxu0 0
        %2618 = vmatprep.subr.bf16.mxu0 0
        %2619 = vmatpush2.bf16.msra.mxu0 0
        %2620 = vmatprep.subr.bf16.mxu0 0
        %2621 = vmatpush2.bf16.msra.mxu0 0
        %2622 = vmatprep.subr.bf16.mxu0 0
        %2623 = vmatpush2.bf16.msra.mxu0 0
        %2624 = vmatprep.subr.bf16.mxu0 0
        %2625 = vmatpush2.bf16.msra.mxu0 0
        %2626 = vmatprep.subr.bf16.mxu0 0
        %2627 = vmatpush2.bf16.msra.mxu0 0
        %2628 = vmatprep.mubr.bf16.mxu0 0
        %2629 = vmatmul.mubr.bf16.gmra.mxu0 %v747
        %v2630 = vpop.f32.mrf.mxu0
        %v2631 = vadd.f32 0.0, %v2630
        %v2632 = vpop.f32.mrf.mxu0
        %v2633 = vpop.f32.mrf.mxu0
        %v2634 = vadd.f32 0.0, %v2633
        %v2635 = vpop.f32.mrf.mxu0
        %2636 = vdwg.mxu0
        %s2637 = scalar_lea.vmem %s657, 192
        %v2638 = vld [vmem:[%s2637] sm:$0xf]
        %v2639 = vld [vmem:[%s2637 + $0x4] sm:$0xf]
        %v2640 = vld [vmem:[%s2637 + $0x8] sm:$0xf]
        %v2641 = vld [vmem:[%s2637 + $0xc] sm:$0xf]
        %v2642 = vld [vmem:[%s2637 + $0x10] sm:$0xf]
        %v2643 = vld [vmem:[%s2637 + $0x14] sm:$0xf]
        %v2644 = vld [vmem:[%s2637 + $0x18] sm:$0xf]
        %v2645 = vld [vmem:[%s2637 + $0x1c] sm:$0xf]
        %v2646 = vld [vmem:[%s2637 + $0x20] sm:$0xf]
        %v2647 = vld [vmem:[%s2637 + $0x24] sm:$0xf]
        %v2648 = vld [vmem:[%s2637 + $0x28] sm:$0xf]
        %v2649 = vld [vmem:[%s2637 + $0x2c] sm:$0xf]
        %v2650 = vld [vmem:[%s2637 + $0x30] sm:$0xf]
        %v2651 = vld [vmem:[%s2637 + $0x34] sm:$0xf]
        %v2652 = vld [vmem:[%s2637 + $0x38] sm:$0xf]
        %v2653 = vld [vmem:[%s2637 + $0x3c] sm:$0xf]
        %v2670 = vunpack.c.l.b16 %v2638
        %v2671 = vunpack.c.l.b16 %v2639
        %v2672 = vunpack.c.l.b16 %v2640
        %v2673 = vunpack.c.l.b16 %v2641
        %v2674 = vunpack.c.l.b16 %v2642
        %v2675 = vunpack.c.l.b16 %v2643
        %v2676 = vunpack.c.l.b16 %v2644
        %v2677 = vunpack.c.l.b16 %v2645
        %v2678 = vunpack.c.l.b16 %v2646
        %v2679 = vunpack.c.l.b16 %v2647
        %v2680 = vunpack.c.l.b16 %v2648
        %v2681 = vunpack.c.l.b16 %v2649
        %v2682 = vunpack.c.l.b16 %v2650
        %v2683 = vunpack.c.l.b16 %v2651
        %v2684 = vunpack.c.l.b16 %v2652
        %v2685 = vunpack.c.l.b16 %v2653
        %v2686 = vpack.c.b16 %v2671, %v2670
        %v2687 = vpack.c.b16 %v2673, %v2672
        %v2688 = vpack.c.b16 %v2675, %v2674
        %v2689 = vpack.c.b16 %v2677, %v2676
        %v2690 = vpack.c.b16 %v2679, %v2678
        %v2691 = vpack.c.b16 %v2681, %v2680
        %v2692 = vpack.c.b16 %v2683, %v2682
        %v2693 = vpack.c.b16 %v2685, %v2684
        %2702 = vmatprep.subr.bf16.mxu0 0
        %2703 = vmatpush1.bf16.msra.mxu0 %v2693
        %2704 = vmatprep.subr.bf16.mxu0 0
        %2705 = vmatpush1.bf16.msra.mxu0 %v2692
        %2706 = vmatprep.subr.bf16.mxu0 0
        %2707 = vmatpush1.bf16.msra.mxu0 %v2691
        %2708 = vmatprep.subr.bf16.mxu0 0
        %2709 = vmatpush1.bf16.msra.mxu0 %v2690
        %2710 = vmatprep.subr.bf16.mxu0 0
        %2711 = vmatpush1.bf16.msra.mxu0 %v2689
        %2712 = vmatprep.subr.bf16.mxu0 0
        %2713 = vmatpush1.bf16.msra.mxu0 %v2688
        %2714 = vmatprep.subr.bf16.mxu0 0
        %2715 = vmatpush1.bf16.msra.mxu0 %v2687
        %2716 = vmatprep.subr.bf16.mxu0 0
        %2717 = vmatpush1.bf16.msra.mxu0 %v2686
        %2718 = vmatprep.subr.bf16.mxu0 0
        %2719 = vmatpush2.bf16.msra.mxu0 0
        %2720 = vmatprep.subr.bf16.mxu0 0
        %2721 = vmatpush2.bf16.msra.mxu0 0
        %2722 = vmatprep.subr.bf16.mxu0 0
        %2723 = vmatpush2.bf16.msra.mxu0 0
        %2724 = vmatprep.subr.bf16.mxu0 0
        %2725 = vmatpush2.bf16.msra.mxu0 0
        %2726 = vmatprep.subr.bf16.mxu0 0
        %2727 = vmatpush2.bf16.msra.mxu0 0
        %2728 = vmatprep.subr.bf16.mxu0 0
        %2729 = vmatpush2.bf16.msra.mxu0 0
        %2730 = vmatprep.subr.bf16.mxu0 0
        %2731 = vmatpush2.bf16.msra.mxu0 0
        %2732 = vmatprep.subr.bf16.mxu0 0
        %2733 = vmatpush2.bf16.msra.mxu0 0
        %2734 = vmatprep.mubr.bf16.mxu0 0
        %2735 = vmatmul.mubr.bf16.gmra.mxu0 %v747
        %v2736 = vpop.f32.mrf.mxu0
        %v2737 = vadd.f32 0.0, %v2736
        %v2738 = vpop.f32.mrf.mxu0
        %v2739 = vpop.f32.mrf.mxu0
        %v2740 = vadd.f32 0.0, %v2739
        %v2741 = vpop.f32.mrf.mxu0
        %2742 = vdwg.mxu0
        %s2743 = scalar_lea.vmem %s662, 192
        %v2744 = vld [vmem:[%s2743] sm:$0xf]
        %v2745 = vld [vmem:[%s2743 + $0x4] sm:$0xf]
        %v2746 = vld [vmem:[%s2743 + $0x8] sm:$0xf]
        %v2747 = vld [vmem:[%s2743 + $0xc] sm:$0xf]
        %v2748 = vld [vmem:[%s2743 + $0x10] sm:$0xf]
        %v2749 = vld [vmem:[%s2743 + $0x14] sm:$0xf]
        %v2750 = vld [vmem:[%s2743 + $0x18] sm:$0xf]
        %v2751 = vld [vmem:[%s2743 + $0x1c] sm:$0xf]
        %v2752 = vld [vmem:[%s2743 + $0x20] sm:$0xf]
        %v2753 = vld [vmem:[%s2743 + $0x24] sm:$0xf]
        %v2754 = vld [vmem:[%s2743 + $0x28] sm:$0xf]
        %v2755 = vld [vmem:[%s2743 + $0x2c] sm:$0xf]
        %v2756 = vld [vmem:[%s2743 + $0x30] sm:$0xf]
        %v2757 = vld [vmem:[%s2743 + $0x34] sm:$0xf]
        %v2758 = vld [vmem:[%s2743 + $0x38] sm:$0xf]
        %v2759 = vld [vmem:[%s2743 + $0x3c] sm:$0xf]
        %v2776 = vunpack.c.l.b16 %v2744
        %v2777 = vunpack.c.l.b16 %v2745
        %v2778 = vunpack.c.l.b16 %v2746
        %v2779 = vunpack.c.l.b16 %v2747
        %v2780 = vunpack.c.l.b16 %v2748
        %v2781 = vunpack.c.l.b16 %v2749
        %v2782 = vunpack.c.l.b16 %v2750
        %v2783 = vunpack.c.l.b16 %v2751
        %v2784 = vunpack.c.l.b16 %v2752
        %v2785 = vunpack.c.l.b16 %v2753
        %v2786 = vunpack.c.l.b16 %v2754
        %v2787 = vunpack.c.l.b16 %v2755
        %v2788 = vunpack.c.l.b16 %v2756
        %v2789 = vunpack.c.l.b16 %v2757
        %v2790 = vunpack.c.l.b16 %v2758
        %v2791 = vunpack.c.l.b16 %v2759
        %v2792 = vpack.c.b16 %v2777, %v2776
        %v2793 = vpack.c.b16 %v2779, %v2778
        %v2794 = vpack.c.b16 %v2781, %v2780
        %v2795 = vpack.c.b16 %v2783, %v2782
        %v2796 = vpack.c.b16 %v2785, %v2784
        %v2797 = vpack.c.b16 %v2787, %v2786
        %v2798 = vpack.c.b16 %v2789, %v2788
        %v2799 = vpack.c.b16 %v2791, %v2790
        %2808 = vmatprep.subr.bf16.mxu0 0
        %2809 = vmatpush1.bf16.msra.mxu0 %v2799
        %2810 = vmatprep.subr.bf16.mxu0 0
        %2811 = vmatpush1.bf16.msra.mxu0 %v2798
        %2812 = vmatprep.subr.bf16.mxu0 0
        %2813 = vmatpush1.bf16.msra.mxu0 %v2797
        %2814 = vmatprep.subr.bf16.mxu0 0
        %2815 = vmatpush1.bf16.msra.mxu0 %v2796
        %2816 = vmatprep.subr.bf16.mxu0 0
        %2817 = vmatpush1.bf16.msra.mxu0 %v2795
        %2818 = vmatprep.subr.bf16.mxu0 0
        %2819 = vmatpush1.bf16.msra.mxu0 %v2794
        %2820 = vmatprep.subr.bf16.mxu0 0
        %2821 = vmatpush1.bf16.msra.mxu0 %v2793
        %2822 = vmatprep.subr.bf16.mxu0 0
        %2823 = vmatpush1.bf16.msra.mxu0 %v2792
        %2824 = vmatprep.subr.bf16.mxu0 0
        %2825 = vmatpush2.bf16.msra.mxu0 0
        %2826 = vmatprep.subr.bf16.mxu0 0
        %2827 = vmatpush2.bf16.msra.mxu0 0
        %2828 = vmatprep.subr.bf16.mxu0 0
        %2829 = vmatpush2.bf16.msra.mxu0 0
        %2830 = vmatprep.subr.bf16.mxu0 0
        %2831 = vmatpush2.bf16.msra.mxu0 0
        %2832 = vmatprep.subr.bf16.mxu0 0
        %2833 = vmatpush2.bf16.msra.mxu0 0
        %2834 = vmatprep.subr.bf16.mxu0 0
        %2835 = vmatpush2.bf16.msra.mxu0 0
        %2836 = vmatprep.subr.bf16.mxu0 0
        %2837 = vmatpush2.bf16.msra.mxu0 0
        %2838 = vmatprep.subr.bf16.mxu0 0
        %2839 = vmatpush2.bf16.msra.mxu0 0
        %2840 = vmatprep.mubr.bf16.mxu0 0
        %2841 = vmatmul.mubr.bf16.gmra.mxu0 %v747
        %v2842 = vpop.f32.mrf.mxu0
        %v2843 = vadd.f32 0.0, %v2842
        %v2844 = vpop.f32.mrf.mxu0
        %v2845 = vpop.f32.mrf.mxu0
        %v2846 = vadd.f32 0.0, %v2845
        %v2847 = vpop.f32.mrf.mxu0
        %2848 = vdwg.mxu0
        %v2849 = vpack.c.bf16 %v2631, %v2631
        %v2850 = vpack.c.bf16 %v2634, %v2634
        %v2851 = vpack.c.bf16 %v2737, %v2737
        %v2852 = vpack.c.bf16 %v2740, %v2740
        %v2853 = vpack.c.bf16 %v2843, %v2843
        %v2854 = vpack.c.bf16 %v2846, %v2846
        %v2856 = vsel %vm1069, %v2849, 0
        %v2859 = vsel %vm1069, %v2851, 0
        %2861 = vmatprep.subr.bf16.mxu0 0
        %2862 = vmatpush1.bf16.xpose.msra.mxu0 0
        %2863 = vmatprep.subr.bf16.mxu0 0
        %2864 = vmatpush1.bf16.xpose.msra.mxu0 0
        %2865 = vmatprep.subr.bf16.mxu0 0
        %2866 = vmatpush1.bf16.xpose.msra.mxu0 0
        %2867 = vmatprep.subr.bf16.mxu0 0
        %2868 = vmatpush1.bf16.xpose.msra.mxu0 0
        %2869 = vmatprep.subr.bf16.mxu0 0
        %2870 = vmatpush1.bf16.xpose.msra.mxu0 0
        %2871 = vmatprep.subr.bf16.mxu0 0
        %2872 = vmatpush1.bf16.xpose.msra.mxu0 0
        %2873 = vmatprep.subr.bf16.mxu0 0
        %2874 = vmatpush1.bf16.xpose.msra.mxu0 0
        %2875 = vmatprep.subr.bf16.mxu0 0
        %2876 = vmatpush1.bf16.xpose.msra.mxu0 %v2859
        %2877 = vmatprep.subr.bf16.mxu0 0
        %2878 = vmatpush2.bf16.xpose.msra.mxu0 0
        %2879 = vmatprep.subr.bf16.mxu0 0
        %2880 = vmatpush2.bf16.xpose.msra.mxu0 0
        %2881 = vmatprep.subr.bf16.mxu0 0
        %2882 = vmatpush2.bf16.xpose.msra.mxu0 0
        %2883 = vmatprep.subr.bf16.mxu0 0
        %2884 = vmatpush2.bf16.xpose.msra.mxu0 0
        %2885 = vmatprep.subr.bf16.mxu0 0
        %2886 = vmatpush2.bf16.xpose.msra.mxu0 0
        %2887 = vmatprep.subr.bf16.mxu0 0
        %2888 = vmatpush2.bf16.xpose.msra.mxu0 0
        %2889 = vmatprep.subr.bf16.mxu0 0
        %2890 = vmatpush2.bf16.xpose.msra.mxu0 0
        %2891 = vmatprep.subr.bf16.mxu0 0
        %2892 = vmatpush2.bf16.xpose.msra.mxu0 0
        %2893 = vmatprep.mubr.bf16.mxu0 0
        %2894 = vmatmul.mubr.bf16.gmra.mxu0 %v2856
        %v2895 = vpop.f32.mrf.mxu0
        %v2896 = vadd.f32 0.0, %v2895
        %v2897 = vpop.f32.mrf.mxu0
        %v2898 = vpop.f32.mrf.mxu0
        %v2899 = vpop.f32.mrf.mxu0
        %2900 = vdwg.mxu0
        %v2902 = vsel %vm1069, %v2850, 0
        %v2905 = vsel %vm1069, %v2852, 0
        %2907 = vmatprep.subr.bf16.mxu0 0
        %2908 = vmatpush1.bf16.xpose.msra.mxu0 0
        %2909 = vmatprep.subr.bf16.mxu0 0
        %2910 = vmatpush1.bf16.xpose.msra.mxu0 0
        %2911 = vmatprep.subr.bf16.mxu0 0
        %2912 = vmatpush1.bf16.xpose.msra.mxu0 0
        %2913 = vmatprep.subr.bf16.mxu0 0
        %2914 = vmatpush1.bf16.xpose.msra.mxu0 0
        %2915 = vmatprep.subr.bf16.mxu0 0
        %2916 = vmatpush1.bf16.xpose.msra.mxu0 0
        %2917 = vmatprep.subr.bf16.mxu0 0
        %2918 = vmatpush1.bf16.xpose.msra.mxu0 0
        %2919 = vmatprep.subr.bf16.mxu0 0
        %2920 = vmatpush1.bf16.xpose.msra.mxu0 0
        %2921 = vmatprep.subr.bf16.mxu0 0
        %2922 = vmatpush1.bf16.xpose.msra.mxu0 %v2905
        %2923 = vmatprep.subr.bf16.mxu0 0
        %2924 = vmatpush2.bf16.xpose.msra.mxu0 0
        %2925 = vmatprep.subr.bf16.mxu0 0
        %2926 = vmatpush2.bf16.xpose.msra.mxu0 0
        %2927 = vmatprep.subr.bf16.mxu0 0
        %2928 = vmatpush2.bf16.xpose.msra.mxu0 0
        %2929 = vmatprep.subr.bf16.mxu0 0
        %2930 = vmatpush2.bf16.xpose.msra.mxu0 0
        %2931 = vmatprep.subr.bf16.mxu0 0
        %2932 = vmatpush2.bf16.xpose.msra.mxu0 0
        %2933 = vmatprep.subr.bf16.mxu0 0
        %2934 = vmatpush2.bf16.xpose.msra.mxu0 0
        %2935 = vmatprep.subr.bf16.mxu0 0
        %2936 = vmatpush2.bf16.xpose.msra.mxu0 0
        %2937 = vmatprep.subr.bf16.mxu0 0
        %2938 = vmatpush2.bf16.xpose.msra.mxu0 0
        %2939 = vmatprep.mubr.bf16.mxu0 0
        %2940 = vmatmul.mubr.bf16.gmra.mxu0 %v2902
        %v2941 = vpop.f32.mrf.mxu0
        %v2942 = vadd.f32 0.0, %v2941
        %v2943 = vpop.f32.mrf.mxu0
        %v2944 = vpop.f32.mrf.mxu0
        %v2945 = vpop.f32.mrf.mxu0
        %2946 = vdwg.mxu0
        %v2947 = vsel %vm1162, %v2896, -inf
        %2948 = vmax.xlane.f32.xlu0 %v2947
        %v2949 = vpop.xlane.xlu0 %2948
        %v2950 = vsel %vm1162, %v2942, -inf
        %2951 = vmax.xlane.f32.xlu0 %v2950
        %v2952 = vpop.xlane.xlu0 %2951
        %v2953 = vsub.f32 %v2896, %v2949
        %v2954 = vsub.f32 %v2942, %v2952
        %v2955 = vmul.f32 %v2953, 1.442695
        %v2956 = vpow.pop %v2955
        %v2957 = vmul.f32 %v2954, 1.442695
        %v2958 = vpow.pop %v2957
        %v2959 = vsel %vm1162, %v2956, 0.0
        %2960 = vadd.xlane.f32.xlu0 %v2959
        %v2961 = vpop.xlane.xlu0 %2960
        %v2962 = vsel %vm1162, %v2958, 0.0
        %2963 = vadd.xlane.f32.xlu0 %v2962
        %v2964 = vpop.xlane.xlu0 %2963
        %v2965 = vrcp.pop %v2961
        %v2966 = vrcp.pop %v2964
        %v2967 = vmul.f32 %v2956, %v2965
        %v2968 = vmul.f32 %v2958, %v2966
        %v2969 = vpack.c.bf16 %v2967, %v2967
        %v2970 = vpack.c.bf16 %v2968, %v2968
        %v2972 = vsel %vm1162, %v2969, 0
        %v2975 = vsel %vm1190, %v2853, 0
        %2977 = vmatprep.subr.bf16.mxu0 0
        %2978 = vmatpush1.bf16.msra.mxu0 0
        %2979 = vmatprep.subr.bf16.mxu0 0
        %2980 = vmatpush1.bf16.msra.mxu0 0
        %2981 = vmatprep.subr.bf16.mxu0 0
        %2982 = vmatpush1.bf16.msra.mxu0 0
        %2983 = vmatprep.subr.bf16.mxu0 0
        %2984 = vmatpush1.bf16.msra.mxu0 0
        %2985 = vmatprep.subr.bf16.mxu0 0
        %2986 = vmatpush1.bf16.msra.mxu0 0
        %2987 = vmatprep.subr.bf16.mxu0 0
        %2988 = vmatpush1.bf16.msra.mxu0 0
        %2989 = vmatprep.subr.bf16.mxu0 0
        %2990 = vmatpush1.bf16.msra.mxu0 0
        %2991 = vmatprep.subr.bf16.mxu0 0
        %2992 = vmatpush1.bf16.msra.mxu0 %v2975
        %2993 = vmatprep.subr.bf16.mxu0 0
        %2994 = vmatpush2.bf16.msra.mxu0 0
        %2995 = vmatprep.subr.bf16.mxu0 0
        %2996 = vmatpush2.bf16.msra.mxu0 0
        %2997 = vmatprep.subr.bf16.mxu0 0
        %2998 = vmatpush2.bf16.msra.mxu0 0
        %2999 = vmatprep.subr.bf16.mxu0 0
        %3000 = vmatpush2.bf16.msra.mxu0 0
        %3001 = vmatprep.subr.bf16.mxu0 0
        %3002 = vmatpush2.bf16.msra.mxu0 0
        %3003 = vmatprep.subr.bf16.mxu0 0
        %3004 = vmatpush2.bf16.msra.mxu0 0
        %3005 = vmatprep.subr.bf16.mxu0 0
        %3006 = vmatpush2.bf16.msra.mxu0 0
        %3007 = vmatprep.subr.bf16.mxu0 0
        %3008 = vmatpush2.bf16.msra.mxu0 0
        %3009 = vmatprep.mubr.bf16.mxu0 0
        %3010 = vmatmul.mubr.bf16.gmra.mxu0 %v2972
        %v3011 = vpop.f32.mrf.mxu0
        %v3012 = vadd.f32 0.0, %v3011
        %v3013 = vpop.f32.mrf.mxu0
        %v3014 = vpop.f32.mrf.mxu0
        %v3015 = vpop.f32.mrf.mxu0
        %3016 = vdwg.mxu0
        %v3018 = vsel %vm1162, %v2970, 0
        %v3021 = vsel %vm1190, %v2854, 0
        %3023 = vmatprep.subr.bf16.mxu0 0
        %3024 = vmatpush1.bf16.msra.mxu0 0
        %3025 = vmatprep.subr.bf16.mxu0 0
        %3026 = vmatpush1.bf16.msra.mxu0 0
        %3027 = vmatprep.subr.bf16.mxu0 0
        %3028 = vmatpush1.bf16.msra.mxu0 0
        %3029 = vmatprep.subr.bf16.mxu0 0
        %3030 = vmatpush1.bf16.msra.mxu0 0
        %3031 = vmatprep.subr.bf16.mxu0 0
        %3032 = vmatpush1.bf16.msra.mxu0 0
        %3033 = vmatprep.subr.bf16.mxu0 0
        %3034 = vmatpush1.bf16.msra.mxu0 0
        %3035 = vmatprep.subr.bf16.mxu0 0
        %3036 = vmatpush1.bf16.msra.mxu0 0
        %3037 = vmatprep.subr.bf16.mxu0 0
        %3038 = vmatpush1.bf16.msra.mxu0 %v3021
        %3039 = vmatprep.subr.bf16.mxu0 0
        %3040 = vmatpush2.bf16.msra.mxu0 0
        %3041 = vmatprep.subr.bf16.mxu0 0
        %3042 = vmatpush2.bf16.msra.mxu0 0
        %3043 = vmatprep.subr.bf16.mxu0 0
        %3044 = vmatpush2.bf16.msra.mxu0 0
        %3045 = vmatprep.subr.bf16.mxu0 0
        %3046 = vmatpush2.bf16.msra.mxu0 0
        %3047 = vmatprep.subr.bf16.mxu0 0
        %3048 = vmatpush2.bf16.msra.mxu0 0
        %3049 = vmatprep.subr.bf16.mxu0 0
        %3050 = vmatpush2.bf16.msra.mxu0 0
        %3051 = vmatprep.subr.bf16.mxu0 0
        %3052 = vmatpush2.bf16.msra.mxu0 0
        %3053 = vmatprep.subr.bf16.mxu0 0
        %3054 = vmatpush2.bf16.msra.mxu0 0
        %3055 = vmatprep.mubr.bf16.mxu0 0
        %3056 = vmatmul.mubr.bf16.gmra.mxu0 %v3018
        %v3057 = vpop.f32.mrf.mxu0
        %v3058 = vadd.f32 0.0, %v3057
        %v3059 = vpop.f32.mrf.mxu0
        %v3060 = vpop.f32.mrf.mxu0
        %v3061 = vpop.f32.mrf.mxu0
        %3062 = vdwg.mxu0
        %v3063 = vpack.c.bf16 %v3058, %v3012
        %s3064 = scalar_lea.vmem %s667, 48
        %v3065 = vld [vmem:[%s3064] sm:$0xf]
        %v3066 = vld [vmem:[%s3064 + $0x4] sm:$0xf]
        %v3067 = vld [vmem:[%s3064 + $0x8] sm:$0xf]
        %v3068 = vld [vmem:[%s3064 + $0xc] sm:$0xf]
        %v3073 = vunpack.c.l.b16 %v3065
        %v3074 = vunpack.c.l.b16 %v3066
        %v3075 = vunpack.c.l.b16 %v3067
        %v3076 = vunpack.c.l.b16 %v3068
        %v3077 = vpack.c.b16 %v3074, %v3073
        %v3078 = vpack.c.b16 %v3076, %v3075
        %v3082 = vsel %vm1069, %v3063, 0
        %3084 = vmatprep.subr.bf16.mxu0 0
        %3085 = vmatpush1.bf16.msra.mxu0 0
        %3086 = vmatprep.subr.bf16.mxu0 0
        %3087 = vmatpush1.bf16.msra.mxu0 0
        %3088 = vmatprep.subr.bf16.mxu0 0
        %3089 = vmatpush1.bf16.msra.mxu0 0
        %3090 = vmatprep.subr.bf16.mxu0 0
        %3091 = vmatpush1.bf16.msra.mxu0 0
        %3092 = vmatprep.subr.bf16.mxu0 0
        %3093 = vmatpush1.bf16.msra.mxu0 0
        %3094 = vmatprep.subr.bf16.mxu0 0
        %3095 = vmatpush1.bf16.msra.mxu0 0
        %3096 = vmatprep.subr.bf16.mxu0 0
        %3097 = vmatpush1.bf16.msra.mxu0 %v3078
        %3098 = vmatprep.subr.bf16.mxu0 0
        %3099 = vmatpush1.bf16.msra.mxu0 %v3077
        %3100 = vmatprep.subr.bf16.mxu0 0
        %3101 = vmatpush2.bf16.msra.mxu0 0
        %3102 = vmatprep.subr.bf16.mxu0 0
        %3103 = vmatpush2.bf16.msra.mxu0 0
        %3104 = vmatprep.subr.bf16.mxu0 0
        %3105 = vmatpush2.bf16.msra.mxu0 0
        %3106 = vmatprep.subr.bf16.mxu0 0
        %3107 = vmatpush2.bf16.msra.mxu0 0
        %3108 = vmatprep.subr.bf16.mxu0 0
        %3109 = vmatpush2.bf16.msra.mxu0 0
        %3110 = vmatprep.subr.bf16.mxu0 0
        %3111 = vmatpush2.bf16.msra.mxu0 0
        %3112 = vmatprep.subr.bf16.mxu0 0
        %3113 = vmatpush2.bf16.msra.mxu0 0
        %3114 = vmatprep.subr.bf16.mxu0 0
        %3115 = vmatpush2.bf16.msra.mxu0 0
        %3116 = vmatprep.mubr.bf16.mxu0 0
        %3117 = vmatmul.mubr.bf16.gmra.mxu0 %v3082
        %v3118 = vpop.f32.mrf.mxu0
        %v3119 = vadd.f32 0.0, %v3118
        %v3120 = vpop.f32.mrf.mxu0
        %v3121 = vpop.f32.mrf.mxu0
        %v3122 = vadd.f32 0.0, %v3121
        %v3123 = vpop.f32.mrf.mxu0
        %3124 = vdwg.mxu0
        %v3125 = vadd.f32 %v2529, %v3119
        %v3126 = vadd.f32 %v2530, %v3122
        %v3127 = vadd.f32 %v704, %v3125
        %v3128 = vadd.f32 %v705, %v3126
        %v3129 = vld [vmem:[%s670] sm:$0x1]
        %v3131 = vlaneseq
        %v3132 = vshrl.u32 %v3131, 7
        %v3133 = vsub.s32 0, %v3132
        %v3134 = vrot.slane %v3129, %v3133
        %v3136 = vadd.f32 %v3127, %v3134
        %v3137 = vadd.f32 %v3128, %v3134
        %v3138 = vld [vmem:[%s673] sm:$0x1]
        %v3139 = vld [vmem:[%s676] sm:$0x1]
        %3140 = vadd.xlane.f32.xlu0 %v3136
        %v3141 = vpop.xlane.xlu0 %3140
        %3142 = vadd.xlane.f32.xlu0 %v3137
        %v3143 = vpop.xlane.xlu0 %3142
        %v3144 = vmul.f32 %v3141, %v712
        %v3145 = vmul.f32 %v3143, %v712
        %v3146 = vsub.f32 %v3136, %v3144
        %v3147 = vsub.f32 %v3137, %v3145
        %v3148 = vmul.f32 %v3146, %v3146
        %v3149 = vmul.f32 %v3147, %v3147
        %3150 = vadd.xlane.f32.xlu0 %v3148
        %v3151 = vpop.xlane.xlu0 %3150
        %3152 = vadd.xlane.f32.xlu0 %v3149
        %v3153 = vpop.xlane.xlu0 %3152
        %v3154 = vmul.f32 %v3151, %v712
        %v3155 = vmul.f32 %v3153, %v712
        %v3156 = vadd.f32 %v3154, 1e-05
        %v3157 = vadd.f32 %v3155, 1e-05
        %v3158 = vrsqrt.pop %v3156
        %v3159 = vrsqrt.pop %v3157
        %v3160 = vmul.f32 %v3146, %v3158
        %v3161 = vmul.f32 %v3147, %v3159
        %v3163 = vlaneseq
        %v3164 = vshrl.u32 %v3163, 7
        %v3165 = vsub.s32 0, %v3164
        %v3166 = vrot.slane %v3138, %v3165
        %v3168 = vmul.f32 %v3160, %v3166
        %v3169 = vmul.f32 %v3161, %v3166
        %v3171 = vlaneseq
        %v3172 = vshrl.u32 %v3171, 7
        %v3173 = vsub.s32 0, %v3172
        %v3174 = vrot.slane %v3139, %v3173
        %v3176 = vadd.f32 %v3168, %v3174
        %v3177 = vadd.f32 %v3169, %v3174
        %v3178 = vpack.c.bf16 %v3177, %v3176
        %v3179 = vld [vmem:[%s681] sm:$0xff]
        %v3180 = vld [vmem:[%s681 + $0x8] sm:$0xff]
        %v3181 = vld [vmem:[%s681 + $0x10] sm:$0xff]
        %v3182 = vld [vmem:[%s681 + $0x18] sm:$0xff]
        %v3183 = vld [vmem:[%s681 + $0x20] sm:$0xff]
        %v3184 = vld [vmem:[%s681 + $0x28] sm:$0xff]
        %v3185 = vld [vmem:[%s681 + $0x30] sm:$0xff]
        %v3186 = vld [vmem:[%s681 + $0x38] sm:$0xff]
        %v3187 = vld [vmem:[%s681 + $0x40] sm:$0xff]
        %v3188 = vld [vmem:[%s681 + $0x48] sm:$0xff]
        %v3189 = vld [vmem:[%s681 + $0x50] sm:$0xff]
        %v3190 = vld [vmem:[%s681 + $0x58] sm:$0xff]
        %v3191 = vld [vmem:[%s681 + $0x60] sm:$0xff]
        %v3192 = vld [vmem:[%s681 + $0x68] sm:$0xff]
        %v3193 = vld [vmem:[%s681 + $0x70] sm:$0xff]
        %v3194 = vld [vmem:[%s681 + $0x78] sm:$0xff]
        %v3195 = vld [vmem:[%s685] sm:$0x3]
        %v3197 = vlaneseq
        %v3198 = vshrl.u32 %v3197, 7
        %v3199 = vsub.s32 0, %v3198
        %v3200 = vrot.slane %v3195, %v3199
        %v3201 = vlaneseq
        %v3202 = vshrl.u32 %v3201, 7
        %v3203 = vsub.s32 1, %v3202
        %v3204 = vrot.slane %v3195, %v3203
        %v3223 = vunpack.c.l.b16 %v3179
        %v3224 = vunpack.c.h.b16 %v3179
        %v3225 = vunpack.c.l.b16 %v3180
        %v3226 = vunpack.c.h.b16 %v3180
        %v3227 = vunpack.c.l.b16 %v3181
        %v3228 = vunpack.c.h.b16 %v3181
        %v3229 = vunpack.c.l.b16 %v3182
        %v3230 = vunpack.c.h.b16 %v3182
        %v3231 = vunpack.c.l.b16 %v3183
        %v3232 = vunpack.c.h.b16 %v3183
        %v3233 = vunpack.c.l.b16 %v3184
        %v3234 = vunpack.c.h.b16 %v3184
        %v3235 = vunpack.c.l.b16 %v3185
        %v3236 = vunpack.c.h.b16 %v3185
        %v3237 = vunpack.c.l.b16 %v3186
        %v3238 = vunpack.c.h.b16 %v3186
        %v3239 = vunpack.c.l.b16 %v3187
        %v3240 = vunpack.c.h.b16 %v3187
        %v3241 = vunpack.c.l.b16 %v3188
        %v3242 = vunpack.c.h.b16 %v3188
        %v3243 = vunpack.c.l.b16 %v3189
        %v3244 = vunpack.c.h.b16 %v3189
        %v3245 = vunpack.c.l.b16 %v3190
        %v3246 = vunpack.c.h.b16 %v3190
        %v3247 = vunpack.c.l.b16 %v3191
        %v3248 = vunpack.c.h.b16 %v3191
        %v3249 = vunpack.c.l.b16 %v3192
        %v3250 = vunpack.c.h.b16 %v3192
        %v3251 = vunpack.c.l.b16 %v3193
        %v3252 = vunpack.c.h.b16 %v3193
        %v3253 = vunpack.c.l.b16 %v3194
        %v3254 = vunpack.c.h.b16 %v3194
        %v3255 = vpack.c.b16 %v3225, %v3223
        %v3256 = vpack.c.b16 %v3226, %v3224
        %v3257 = vpack.c.b16 %v3229, %v3227
        %v3258 = vpack.c.b16 %v3230, %v3228
        %v3259 = vpack.c.b16 %v3233, %v3231
        %v3260 = vpack.c.b16 %v3234, %v3232
        %v3261 = vpack.c.b16 %v3237, %v3235
        %v3262 = vpack.c.b16 %v3238, %v3236
        %v3263 = vpack.c.b16 %v3241, %v3239
        %v3264 = vpack.c.b16 %v3242, %v3240
        %v3265 = vpack.c.b16 %v3245, %v3243
        %v3266 = vpack.c.b16 %v3246, %v3244
        %v3267 = vpack.c.b16 %v3249, %v3247
        %v3268 = vpack.c.b16 %v3250, %v3248
        %v3269 = vpack.c.b16 %v3253, %v3251
        %v3270 = vpack.c.b16 %v3254, %v3252
        %3287 = vmatprep.subr.bf16.mxu0 %v3270
        %3288 = vmatpush1.bf16.msra.mxu0 %v3269
        %3289 = vmatprep.subr.bf16.mxu0 %v3268
        %3290 = vmatpush1.bf16.msra.mxu0 %v3267
        %3291 = vmatprep.subr.bf16.mxu0 %v3266
        %3292 = vmatpush1.bf16.msra.mxu0 %v3265
        %3293 = vmatprep.subr.bf16.mxu0 %v3264
        %3294 = vmatpush1.bf16.msra.mxu0 %v3263
        %3295 = vmatprep.subr.bf16.mxu0 %v3262
        %3296 = vmatpush1.bf16.msra.mxu0 %v3261
        %3297 = vmatprep.subr.bf16.mxu0 %v3260
        %3298 = vmatpush1.bf16.msra.mxu0 %v3259
        %3299 = vmatprep.subr.bf16.mxu0 %v3258
        %3300 = vmatpush1.bf16.msra.mxu0 %v3257
        %3301 = vmatprep.subr.bf16.mxu0 %v3256
        %3302 = vmatpush1.bf16.msra.mxu0 %v3255
        %3303 = vmatprep.subr.bf16.mxu0 0
        %3304 = vmatpush2.bf16.msra.mxu0 0
        %3305 = vmatprep.subr.bf16.mxu0 0
        %3306 = vmatpush2.bf16.msra.mxu0 0
        %3307 = vmatprep.subr.bf16.mxu0 0
        %3308 = vmatpush2.bf16.msra.mxu0 0
        %3309 = vmatprep.subr.bf16.mxu0 0
        %3310 = vmatpush2.bf16.msra.mxu0 0
        %3311 = vmatprep.subr.bf16.mxu0 0
        %3312 = vmatpush2.bf16.msra.mxu0 0
        %3313 = vmatprep.subr.bf16.mxu0 0
        %3314 = vmatpush2.bf16.msra.mxu0 0
        %3315 = vmatprep.subr.bf16.mxu0 0
        %3316 = vmatpush2.bf16.msra.mxu0 0
        %3317 = vmatprep.subr.bf16.mxu0 0
        %3318 = vmatpush2.bf16.msra.mxu0 0
        %3319 = vmatprep.mubr.bf16.mxu0 0
        %3320 = vmatmul.mubr.bf16.gmra.mxu0 %v3178
        %v3321 = vpop.f32.mrf.mxu0
        %v3322 = vadd.f32 %v3200, %v3321
        %v3323 = vpop.f32.mrf.mxu0
        %v3324 = vadd.f32 %v3204, %v3323
        %v3325 = vpop.f32.mrf.mxu0
        %v3326 = vadd.f32 %v3200, %v3325
        %v3327 = vpop.f32.mrf.mxu0
        %v3328 = vadd.f32 %v3204, %v3327
        %3329 = vdwg.mxu0
        %v3330 = vmax.f32 %v3322, 0.0
        %v3331 = vmax.f32 %v3324, 0.0
        %v3332 = vmax.f32 %v3326, 0.0
        %v3333 = vmax.f32 %v3328, 0.0
        %v3334 = vpack.c.bf16 %v3332, %v3330
        %v3335 = vpack.c.bf16 %v3333, %v3331
        %v3336 = vld [vmem:[%s690] sm:$0xf]
        %v3337 = vld [vmem:[%s690 + $0x4] sm:$0xf]
        %v3338 = vld [vmem:[%s690 + $0x8] sm:$0xf]
        %v3339 = vld [vmem:[%s690 + $0xc] sm:$0xf]
        %v3340 = vld [vmem:[%s690 + $0x10] sm:$0xf]
        %v3341 = vld [vmem:[%s690 + $0x14] sm:$0xf]
        %v3342 = vld [vmem:[%s690 + $0x18] sm:$0xf]
        %v3343 = vld [vmem:[%s690 + $0x1c] sm:$0xf]
        %v3344 = vld [vmem:[%s690 + $0x20] sm:$0xf]
        %v3345 = vld [vmem:[%s690 + $0x24] sm:$0xf]
        %v3346 = vld [vmem:[%s690 + $0x28] sm:$0xf]
        %v3347 = vld [vmem:[%s690 + $0x2c] sm:$0xf]
        %v3348 = vld [vmem:[%s690 + $0x30] sm:$0xf]
        %v3349 = vld [vmem:[%s690 + $0x34] sm:$0xf]
        %v3350 = vld [vmem:[%s690 + $0x38] sm:$0xf]
        %v3351 = vld [vmem:[%s690 + $0x3c] sm:$0xf]
        %v3352 = vld [vmem:[%s690 + $0x40] sm:$0xf]
        %v3353 = vld [vmem:[%s690 + $0x44] sm:$0xf]
        %v3354 = vld [vmem:[%s690 + $0x48] sm:$0xf]
        %v3355 = vld [vmem:[%s690 + $0x4c] sm:$0xf]
        %v3356 = vld [vmem:[%s690 + $0x50] sm:$0xf]
        %v3357 = vld [vmem:[%s690 + $0x54] sm:$0xf]
        %v3358 = vld [vmem:[%s690 + $0x58] sm:$0xf]
        %v3359 = vld [vmem:[%s690 + $0x5c] sm:$0xf]
        %v3360 = vld [vmem:[%s690 + $0x60] sm:$0xf]
        %v3361 = vld [vmem:[%s690 + $0x64] sm:$0xf]
        %v3362 = vld [vmem:[%s690 + $0x68] sm:$0xf]
        %v3363 = vld [vmem:[%s690 + $0x6c] sm:$0xf]
        %v3364 = vld [vmem:[%s690 + $0x70] sm:$0xf]
        %v3365 = vld [vmem:[%s690 + $0x74] sm:$0xf]
        %v3366 = vld [vmem:[%s690 + $0x78] sm:$0xf]
        %v3367 = vld [vmem:[%s690 + $0x7c] sm:$0xf]
        %v3368 = vld [vmem:[%s693] sm:$0x1]
        %v3370 = vlaneseq
        %v3371 = vshrl.u32 %v3370, 7
        %v3372 = vsub.s32 0, %v3371
        %v3373 = vrot.slane %v3368, %v3372
        %v3407 = vunpack.c.l.b16 %v3336
        %v3408 = vunpack.c.l.b16 %v3337
        %v3409 = vunpack.c.l.b16 %v3338
        %v3410 = vunpack.c.l.b16 %v3339
        %v3411 = vunpack.c.l.b16 %v3340
        %v3412 = vunpack.c.l.b16 %v3341
        %v3413 = vunpack.c.l.b16 %v3342
        %v3414 = vunpack.c.l.b16 %v3343
        %v3415 = vunpack.c.l.b16 %v3344
        %v3416 = vunpack.c.l.b16 %v3345
        %v3417 = vunpack.c.l.b16 %v3346
        %v3418 = vunpack.c.l.b16 %v3347
        %v3419 = vunpack.c.l.b16 %v3348
        %v3420 = vunpack.c.l.b16 %v3349
        %v3421 = vunpack.c.l.b16 %v3350
        %v3422 = vunpack.c.l.b16 %v3351
        %v3423 = vunpack.c.l.b16 %v3352
        %v3424 = vunpack.c.l.b16 %v3353
        %v3425 = vunpack.c.l.b16 %v3354
        %v3426 = vunpack.c.l.b16 %v3355
        %v3427 = vunpack.c.l.b16 %v3356
        %v3428 = vunpack.c.l.b16 %v3357
        %v3429 = vunpack.c.l.b16 %v3358
        %v3430 = vunpack.c.l.b16 %v3359
        %v3431 = vunpack.c.l.b16 %v3360
        %v3432 = vunpack.c.l.b16 %v3361
        %v3433 = vunpack.c.l.b16 %v3362
        %v3434 = vunpack.c.l.b16 %v3363
        %v3435 = vunpack.c.l.b16 %v3364
        %v3436 = vunpack.c.l.b16 %v3365
        %v3437 = vunpack.c.l.b16 %v3366
        %v3438 = vunpack.c.l.b16 %v3367
        %v3439 = vpack.c.b16 %v3408, %v3407
        %v3440 = vpack.c.b16 %v3410, %v3409
        %v3441 = vpack.c.b16 %v3412, %v3411
        %v3442 = vpack.c.b16 %v3414, %v3413
        %v3443 = vpack.c.b16 %v3416, %v3415
        %v3444 = vpack.c.b16 %v3418, %v3417
        %v3445 = vpack.c.b16 %v3420, %v3419
        %v3446 = vpack.c.b16 %v3422, %v3421
        %v3447 = vpack.c.b16 %v3424, %v3423
        %v3448 = vpack.c.b16 %v3426, %v3425
        %v3449 = vpack.c.b16 %v3428, %v3427
        %v3450 = vpack.c.b16 %v3430, %v3429
        %v3451 = vpack.c.b16 %v3432, %v3431
        %v3452 = vpack.c.b16 %v3434, %v3433
        %v3453 = vpack.c.b16 %v3436, %v3435
        %v3454 = vpack.c.b16 %v3438, %v3437
        %3471 = vmatprep.subr.bf16.mxu0 0
        %3472 = vmatpush1.bf16.msra.mxu0 %v3446
        %3473 = vmatprep.subr.bf16.mxu0 0
        %3474 = vmatpush1.bf16.msra.mxu0 %v3445
        %3475 = vmatprep.subr.bf16.mxu0 0
        %3476 = vmatpush1.bf16.msra.mxu0 %v3444
        %3477 = vmatprep.subr.bf16.mxu0 0
        %3478 = vmatpush1.bf16.msra.mxu0 %v3443
        %3479 = vmatprep.subr.bf16.mxu0 0
        %3480 = vmatpush1.bf16.msra.mxu0 %v3442
        %3481 = vmatprep.subr.bf16.mxu0 0
        %3482 = vmatpush1.bf16.msra.mxu0 %v3441
        %3483 = vmatprep.subr.bf16.mxu0 0
        %3484 = vmatpush1.bf16.msra.mxu0 %v3440
        %3485 = vmatprep.subr.bf16.mxu0 0
        %3486 = vmatpush1.bf16.msra.mxu0 %v3439
        %3487 = vmatprep.subr.bf16.mxu0 0
        %3488 = vmatpush2.bf16.msra.mxu0 %v3454
        %3489 = vmatprep.subr.bf16.mxu0 0
        %3490 = vmatpush2.bf16.msra.mxu0 %v3453
        %3491 = vmatprep.subr.bf16.mxu0 0
        %3492 = vmatpush2.bf16.msra.mxu0 %v3452
        %3493 = vmatprep.subr.bf16.mxu0 0
        %3494 = vmatpush2.bf16.msra.mxu0 %v3451
        %3495 = vmatprep.subr.bf16.mxu0 0
        %3496 = vmatpush2.bf16.msra.mxu0 %v3450
        %3497 = vmatprep.subr.bf16.mxu0 0
        %3498 = vmatpush2.bf16.msra.mxu0 %v3449
        %3499 = vmatprep.subr.bf16.mxu0 0
        %3500 = vmatpush2.bf16.msra.mxu0 %v3448
        %3501 = vmatprep.subr.bf16.mxu0 0
        %3502 = vmatpush2.bf16.msra.mxu0 %v3447
        %3503 = vmatprep.mubr.bf16.mxu0 %v3335
        %3504 = vmatmul.mubr.bf16.gmra.mxu0 %v3334
        %v3505 = vpop.f32.mrf.mxu0
        %v3506 = vadd.f32 %v3373, %v3505
        %v3507 = vpop.f32.mrf.mxu0
        %v3508 = vpop.f32.mrf.mxu0
        %v3509 = vadd.f32 %v3373, %v3508
        %v3510 = vpop.f32.mrf.mxu0
        %3511 = vdwg.mxu0
        %v3512 = vadd.f32 %v3136, %v3506
        %v3513 = vadd.f32 %v3137, %v3509
        %3514 = vst [vmem:[#allocation2] sm:$0xff] %v3512
        %3515 = vst [vmem:[#allocation2 + $0x8] sm:$0xff] %v3513
        // Predicated region
        $region81: #{tpu_custom_call.1} parent=75 // pred_check
          %p3516 = pneg %p420
        $region82: #{tpu_custom_call.1} parent=75 // pred_check_branch
          %3518 = sbr.rel (%p3516) target = $region84
        $region83: #{tpu_custom_call.1} parent=75 // pred_region
          %s3519 = smul.u32 2, %s30
          %s3521 = ssub.s32 256, 256
          %3522 = vsyncadd [#allocation3], %s3521
          %s3523 = smul.addr %s3519, 128
          %s3524 = scalar_lea.hbm %s14, %s3523
          %s3525 = sshll.u32 [#allocation2], 4
          %s3526 = int_to_ptr.vmem [resolvable:$true] %s3525
          %3531 = dma.vmem_to_hbm [thread:$0]  %s3526, 256, %s3524, [#allocation3], 128, 128, 8
        $region84: #{tpu_custom_call.1} parent=75 // pred_fallthru
          _
        // Predicated region
        $region85: #{tpu_custom_call.1} parent=75 // pred_check
          %p3532 = pneg %p420
        $region86: #{tpu_custom_call.1} parent=75 // pred_check_branch
          %3534 = sbr.rel (%p3532) target = $region88
        $region87: #{tpu_custom_call.1} parent=75 // pred_region
          %3535 = dma.done [#allocation3], 256
        $region88: #{tpu_custom_call.1} parent=75 // pred_fallthru
          _
      $region76: #{tpu_custom_call.1} parent=5 // pred_fallthru
        _
      %p3536 = scmp.le.s32.totalorder 2, %s21
      // Predicated region
      $region89: #{tpu_custom_call.1} parent=5 // pred_check
        %p3537 = pneg %p3536
      $region90: #{tpu_custom_call.1} parent=5 // pred_check_branch
        %3539 = sbr.rel (%p3537) target = $region92
      $region91: #{tpu_custom_call.1} parent=5 // pred_region
        %s3540 = ssub.s32 %s21, 2
      $region92: #{tpu_custom_call.1} parent=5 // pred_fallthru
        _
    $region6: #{tpu_custom_call.1} parent=1 // loop_footer
      %s25 = sadd.s32 1, %s21
    $region7: #{tpu_custom_call.1} parent=1 // loop_footer_branch
      %20 = sbr.rel target = $region3
    $region8: #{tpu_custom_call.1} parent=1 // loop_exit
      _
    %3541 = vsyncpa [#allocation3], 1
    %s3542 = scalar_lea.sflag [#allocation3], 1
    %3543 = vsyncpa %s3542, 1

</llo_original>
